<compile_context>
chip_gen: v5e
topology: v5e:2x2
jax: 0.10.0
libtpu: 0.0.40
codegen_flags: <defaults>
</compile_context>

<pallas_src>
import functools

import numpy as np
import jax
import jax.numpy as jnp
from jax import lax
from jax.experimental import pallas as pl
from jax.experimental.pallas import tpu as pltpu

EPS = 1e-5  # torch.nn.GroupNorm default eps


# ----------------------------------------------------------------------------
# Host-side precomputed constants (hoisted out of the kernels)
# ----------------------------------------------------------------------------
@functools.lru_cache(maxsize=None)
def _group_onehots(c, ngroups):
    assert c % ngroups == 0, (c, ngroups)
    cg = c // ngroups
    ch = np.arange(c)
    ocg = (ch[:, None] // cg == np.arange(ngroups)[None, :]).astype(np.float32)
    return jnp.asarray(ocg), jnp.asarray(np.ascontiguousarray(ocg.T))


@functools.lru_cache(maxsize=None)
def _col_masks_ext(h, w, nb):
    """Left/right column-border masks over the extended (multi-sample) output
    row space.  Row q of sample b maps to pixel p = q - b*Pe - pad; halo rows
    get 0 (their conv output is discarded anyway)."""
    p_len = h * w
    pad = w + 1
    pe = p_len + 2 * pad
    r = nb * pe
    q = np.arange(r)
    rel = q % pe - pad
    valid = (rel >= 0) & (rel < p_len)
    col = np.mod(rel, w)
    left = (valid & (col != 0)).astype(np.float32)       # kw=0 taps (read col-1)
    right = (valid & (col != w - 1)).astype(np.float32)  # kw=2 taps (read col+1)
    return jnp.asarray(np.stack([left, right], axis=1))


@functools.lru_cache(maxsize=None)
def _subsample_matrix(h, w, stride):
    """(Ho*Wo, H*W) one-hot selection matrix: stride-2 conv == stride-1 conv
    followed by this exact row selection."""
    ho = (h - 1) // stride + 1
    wo = (w - 1) // stride + 1
    m = np.zeros((ho * wo, h * w), np.float32)
    for io in range(ho):
        for jo in range(wo):
            m[io * wo + jo, (io * stride) * w + jo * stride] = 1.0
    return jnp.asarray(m)


def _pick_nb(n, p_rows):
    """Samples per grid step: aim for matmul M = Nb*P >= 256, Nb | N."""
    want = max(1, -(-256 // max(1, p_rows)))
    nb = 1
    for d in range(1, n + 1):
        if n % d == 0 and d <= want:
            nb = d
    return nb


# ----------------------------------------------------------------------------
# In-kernel helpers
# ----------------------------------------------------------------------------
def _gn_rows(y, ocg, ogc, gw, gb, ngroups):
    """GroupNorm on a per-sample (P, C) f32 slab, affine folded into one
    scale/shift; sums and sums-of-squares pushed through the group one-hot
    matmul as a single stacked (2, C) operand."""
    pr, c = y.shape
    cg = c // ngroups
    cnt = float(pr * cg)
    s = jnp.sum(y, axis=0, keepdims=True)                          # (1, C)
    ss = jnp.sum(y * y, axis=0, keepdims=True)                     # (1, C)
    sums = jnp.concatenate([s, ss], axis=0)                        # (2, C)
    g = jnp.dot(sums, ocg, preferred_element_type=jnp.float32) / cnt   # (2, G)
    mean_g = g[0:1, :]
    var_g = g[1:2, :] - mean_g * mean_g                            # biased (torch)
    inv_g = lax.rsqrt(var_g + EPS)
    back = jnp.dot(jnp.concatenate([mean_g, inv_g], axis=0), ogc,
                   preferred_element_type=jnp.float32)             # (2, C)
    scale = back[1:2, :] * gw
    shift = gb - back[0:1, :] * scale
    return y * scale + shift


def _conv3x3_ext(st_ref, w_ref, cm_ref, r, pad, img_w):
    """Stride-1 3x3 conv (pad=1) over the zero-haloed staging buffer as nine
    shifted matmuls spanning all staged samples at once.  Left/right image
    borders are handled by the precomputed column masks; top/bottom borders
    land in the zero halos."""
    cout = w_ref.shape[-1]
    acc = jnp.zeros((r, cout), jnp.float32)
    for kw, mcol in ((0, 0), (1, None), (2, 1)):
        part = jnp.zeros((r, cout), jnp.float32)
        for kh in range(3):
            d = (kh - 1) * img_w + (kw - 1)
            xs = st_ref[pad + d: pad + d + r, :]                   # (r, Cin) bf16
            part = part + jnp.dot(xs, w_ref[kh * 3 + kw],
                                  preferred_element_type=jnp.float32)
        if mcol is None:
            acc = acc + part
        else:
            acc = acc + cm_ref[:, mcol:mcol + 1] * part
    return acc


# ----------------------------------------------------------------------------
# Pallas kernels
# ----------------------------------------------------------------------------
def _stem_kernel(x_ref, w_ref, ocg_ref, ogc_ref, gw_ref, gb_ref, o_ref, *,
                 Nb, P, ngroups, normalize):
    """Stem 1x1 conv (plain matmul over Nb*P rows) + per-sample GN + ReLU."""
    k = x_ref.shape[-1]
    xk = x_ref[...].reshape(Nb * P, k)
    y = jnp.dot(xk, w_ref[...], preferred_element_type=jnp.float32)
    ocg = ocg_ref[...]
    ogc = ogc_ref[...]
    gw = gw_ref[...]
    gb = gb_ref[...]
    for b in range(Nb):
        yb = y[b * P:(b + 1) * P, :]
        if normalize:
            yb = _gn_rows(yb, ocg, ogc, gw, gb, ngroups)
        o_ref[b] = jnp.maximum(yb, 0.0).astype(o_ref.dtype)


def _basic_block_kernel(*refs, Nb, H, W, Ho, Wo, ngroups, stride, has_ds,
                        normalize):
    """One full GroupNorm BasicBlock per grid step (Nb samples)."""
    it = iter(refs)
    x_ref = next(it)
    w1_ref = next(it)
    w2_ref = next(it)
    cm1_ref = next(it)
    cm2_ref = next(it)
    ocg_ref = next(it)
    ogc_ref = next(it)
    gw1_ref = next(it)
    gb1_ref = next(it)
    gw2_ref = next(it)
    gb2_ref = next(it)
    msub_ref = next(it) if stride != 1 else None
    if has_ds:
        wd_ref = next(it)
        gwd_ref = next(it)
        gbd_ref = next(it)
    o_ref = next(it)
    st1_ref = next(it)
    st2_ref = next(it)

    p_in = H * W
    p_out = Ho * Wo
    pad1 = W + 1
    pe1 = p_in + 2 * pad1
    r1 = Nb * pe1
    pad2 = Wo + 1
    pe2 = p_out + 2 * pad2
    r2 = Nb * pe2

    # Zero the staging buffers (establishes the zero halos).  Done every step
    # so it stays correct if the parallel grid axis is sharded across
    # TensorCores (v7x); the buffers are only a few KiB here.
    st1_ref[...] = jnp.zeros(st1_ref.shape, st1_ref.dtype)
    st2_ref[...] = jnp.zeros(st2_ref.shape, st2_ref.dtype)

    # --- stage the input activation (valid rows only; halos stay zero) ------
    for b in range(Nb):
        off = b * pe1 + 2 * pad1
        st1_ref[off: off + p_in, :] = x_ref[b]

    ocg = ocg_ref[...]
    ogc = ogc_ref[...]

    # --- conv1: nine shifted matmuls over the whole batch-tile --------------
    y1 = _conv3x3_ext(st1_ref, w1_ref, cm1_ref, r1, pad1, W)       # (r1, Cmid)

    # --- GN1 + ReLU per sample, restage for conv2 ---------------------------
    for b in range(Nb):
        yb = y1[b * pe1 + pad1: b * pe1 + pad1 + p_in, :]
        if stride != 1:
            # exact strided subsample via one-hot selection matmul
            yb = jnp.dot(msub_ref[...], yb, preferred_element_type=jnp.float32)
        if normalize:
            yb = _gn_rows(yb, ocg, ogc, gw1_ref[...], gb1_ref[...], ngroups)
        yb = jnp.maximum(yb, 0.0)
        off = b * pe2 + 2 * pad2
        st2_ref[off: off + p_out, :] = yb.astype(st2_ref.dtype)

    # --- conv2 ----------------------------------------------------------------
    y2 = _conv3x3_ext(st2_ref, w2_ref, cm2_ref, r2, pad2, Wo)      # (r2, Cmid)

    # --- GN2 + residual + ReLU -> output ---------------------------------------
    for b in range(Nb):
        yb = y2[b * pe2 + pad2: b * pe2 + pad2 + p_out, :]
        if normalize:
            yb = _gn_rows(yb, ocg, ogc, gw2_ref[...], gb2_ref[...], ngroups)
        if has_ds:
            xb = x_ref[b].astype(jnp.float32)                       # (p_in, Cin)
            if stride != 1:
                xb = jnp.dot(msub_ref[...], xb,
                             preferred_element_type=jnp.float32)    # (p_out, Cin)
            res = jnp.dot(xb.astype(jnp.bfloat16), wd_ref[...],
                          preferred_element_type=jnp.float32)       # (p_out, Cmid)
            if normalize:
                res = _gn_rows(res, ocg, ogc, gwd_ref[...], gbd_ref[...],
                               ngroups)
        else:
            res = x_ref[b].astype(jnp.float32)
        o_ref[b] = jnp.maximum(yb + res, 0.0).astype(o_ref.dtype)


# ----------------------------------------------------------------------------
# Pallas wrappers
# ----------------------------------------------------------------------------
def matmul_gn(x, w_mat, gn_w, gn_b, *, ngroups, normalize=True):
    """x: (N, P, K) bf16; w_mat: (K, Cout) bf16 -> (N, P, Cout) bf16."""
    N, P, K = x.shape
    Cout = w_mat.shape[-1]
    Nb = _pick_nb(N, P)
    ocg, ogc = _group_onehots(Cout, ngroups)
    kernel = functools.partial(_stem_kernel, Nb=Nb, P=P, ngroups=ngroups,
                               normalize=normalize)
    return pl.pallas_call(
        kernel,
        out_shape=jax.ShapeDtypeStruct((N, P, Cout), jnp.bfloat16),
        grid=(N // Nb,),
        in_specs=[
            pl.BlockSpec((Nb, P, K), lambda n: (n, 0, 0)),
            pl.BlockSpec((K, Cout), lambda n: (0, 0)),
            pl.BlockSpec(ocg.shape, lambda n: (0, 0)),
            pl.BlockSpec(ogc.shape, lambda n: (0, 0)),
            pl.BlockSpec((1, Cout), lambda n: (0, 0)),
            pl.BlockSpec((1, Cout), lambda n: (0, 0)),
        ],
        out_specs=pl.BlockSpec((Nb, P, Cout), lambda n: (n, 0, 0)),
        compiler_params=pltpu.CompilerParams(dimension_semantics=("parallel",)),
    )(x, w_mat, ocg, ogc, gn_w, gn_b)


def basic_block(x, p, *, H, W, stride, ngroups, normalize=True):
    """Fused GroupNorm BasicBlock.

    x: (N, H*W, Cin) bf16 -> ((N, Ho*Wo, planes) bf16, Ho, Wo).
    """
    N, P_in, Cin = x.shape
    assert P_in == H * W, (P_in, H, W)
    Cmid = p['conv1'].shape[-1]
    Ho = (H - 1) // stride + 1
    Wo = (W - 1) // stride + 1
    P_out = Ho * Wo
    has_ds = 'ds_conv' in p
    Nb = _pick_nb(N, P_out)

    pad1 = W + 1
    Pe1 = P_in + 2 * pad1
    Rs1 = Nb * Pe1 + 2 * pad1
    pad2 = Wo + 1
    Pe2 = P_out + 2 * pad2
    Rs2 = Nb * Pe2 + 2 * pad2

    cm1 = _col_masks_ext(H, W, Nb)
    cm2 = _col_masks_ext(Ho, Wo, Nb)
    ocg, ogc = _group_onehots(Cmid, ngroups)

    args = [x, p['conv1'], p['conv2'], cm1, cm2, ocg, ogc,
            p['gn1_w'], p['gn1_b'], p['gn2_w'], p['gn2_b']]
    in_specs = [
        pl.BlockSpec((Nb, P_in, Cin), lambda n: (n, 0, 0)),
        pl.BlockSpec(p['conv1'].shape, lambda n: (0, 0, 0)),
        pl.BlockSpec(p['conv2'].shape, lambda n: (0, 0, 0)),
        pl.BlockSpec(cm1.shape, lambda n: (0, 0)),
        pl.BlockSpec(cm2.shape, lambda n: (0, 0)),
        pl.BlockSpec(ocg.shape, lambda n: (0, 0)),
        pl.BlockSpec(ogc.shape, lambda n: (0, 0)),
        pl.BlockSpec((1, Cmid), lambda n: (0, 0)),
        pl.BlockSpec((1, Cmid), lambda n: (0, 0)),
        pl.BlockSpec((1, Cmid), lambda n: (0, 0)),
        pl.BlockSpec((1, Cmid), lambda n: (0, 0)),
    ]
    if stride != 1:
        msub = _subsample_matrix(H, W, stride)
        args.append(msub)
        in_specs.append(pl.BlockSpec(msub.shape, lambda n: (0, 0)))
    if has_ds:
        args += [p['ds_conv'], p['ds_gn_w'], p['ds_gn_b']]
        in_specs += [
            pl.BlockSpec(p['ds_conv'].shape, lambda n: (0, 0)),
            pl.BlockSpec((1, Cmid), lambda n: (0, 0)),
            pl.BlockSpec((1, Cmid), lambda n: (0, 0)),
        ]

    kernel = functools.partial(
        _basic_block_kernel, Nb=Nb, H=H, W=W, Ho=Ho, Wo=Wo, ngroups=ngroups,
        stride=stride, has_ds=has_ds, normalize=normalize)

    out = pl.pallas_call(
        kernel,
        out_shape=jax.ShapeDtypeStruct((N, P_out, Cmid), jnp.bfloat16),
        grid=(N // Nb,),
        in_specs=in_specs,
        out_specs=pl.BlockSpec((Nb, P_out, Cmid), lambda n: (n, 0, 0)),
        scratch_shapes=[pltpu.VMEM((Rs1, Cin), jnp.bfloat16),
                        pltpu.VMEM((Rs2, Cmid), jnp.bfloat16)],
        compiler_params=pltpu.CompilerParams(dimension_semantics=("parallel",)),
    )(*args)
    return out, Ho, Wo


# ----------------------------------------------------------------------------
# Plain-JAX glue (layout plumbing, parameter setup)
# ----------------------------------------------------------------------------
def space_to_depth_nchw(x):
    """Exact PyTorch SpaceToDepth semantics on NCHW input."""
    N, C, H, W = x.shape
    x = x.reshape(N, C, H // 4, 4, W // 4, 4)
    x = jnp.transpose(x, (0, 3, 5, 1, 2, 4))
    return x.reshape(N, C * 16, H // 4, W // 4)


def conv3x3_to_taps(w):
    """PyTorch conv weight (Cout, Cin, 3, 3) -> (9, Cin, Cout) bf16, tap=(kh,kw)."""
    cout, cin, _, _ = w.shape
    return jnp.transpose(w, (2, 3, 1, 0)).reshape(9, cin, cout).astype(jnp.bfloat16)


def conv1x1_to_mat(w):
    """PyTorch conv weight (Cout, Cin, 1, 1) -> (Cin, Cout) bf16."""
    cout, cin, _, _ = w.shape
    return jnp.transpose(w, (2, 3, 1, 0)).reshape(cin, cout).astype(jnp.bfloat16)


def init_resnet_params(key, in_channels, base_planes, ngroups, layers):
    """Deterministic synthetic parameters (shapes match the PyTorch module)."""
    keys = list(jax.random.split(key, 8 + 16 * sum(layers)))
    ki = iter(keys)

    def nrm(shape, scale=0.05):
        return jax.random.normal(next(ki), shape, jnp.float32) * scale

    def gn_affine(c):
        w = 1.0 + 0.1 * jax.random.normal(next(ki), (1, c), jnp.float32)
        b = 0.1 * jax.random.normal(next(ki), (1, c), jnp.float32)
        return w, b

    params = {}
    cin16 = in_channels * 16
    gw, gb = gn_affine(base_planes)
    params['stem'] = {'w': conv1x1_to_mat(nrm((base_planes, cin16, 1, 1))),
                      'gn_w': gw, 'gn_b': gb}

    inplanes = base_planes
    params['layers'] = []
    for i, nblocks in enumerate(layers):
        planes = base_planes * (2 ** i)
        stride0 = 1 if (i == 0 and len(layers) == 4) else 2
        layer = []
        for b in range(nblocks):
            s = stride0 if b == 0 else 1
            g1w, g1b = gn_affine(planes)
            g2w, g2b = gn_affine(planes)
            blk = {
                'conv1': conv3x3_to_taps(nrm((planes, inplanes, 3, 3))),
                'gn1_w': g1w, 'gn1_b': g1b,
                'conv2': conv3x3_to_taps(nrm((planes, planes, 3, 3))),
                'gn2_w': g2w, 'gn2_b': g2b,
            }
            if s != 1 or inplanes != planes:  # expansion == 1
                gdw, gdb = gn_affine(planes)
                blk['ds_conv'] = conv1x1_to_mat(nrm((planes, inplanes, 1, 1)))
                blk['ds_gn_w'] = gdw
                blk['ds_gn_b'] = gdb
            layer.append(blk)
            inplanes = planes
        params['layers'].append(layer)
    return params


def resnet_forward(params, x_nchw, *, ngroups, use_normalization=True):
    """Input NCHW f32 (N, C, H, W) -> output NCHW f32 (N, C_final, H/32, W/32)."""
    # --- stem: SpaceToDepth -> 1x1 conv -> GroupNorm -> ReLU
    x = space_to_depth_nchw(x_nchw)                            # (N, 16C, H/4, W/4)
    x = jnp.transpose(x, (0, 2, 3, 1)).astype(jnp.bfloat16)    # NHWC bf16
    N, H, W, K = x.shape
    x = matmul_gn(x.reshape(N, H * W, K), params['stem']['w'],
                  params['stem']['gn_w'], params['stem']['gn_b'],
                  ngroups=ngroups, normalize=use_normalization)  # (N, P, C) bf16

    # --- residual layers (strides are static, derived from the layer layout)
    nstages = len(params['layers'])
    for i, layer in enumerate(params['layers']):
        for b, blk in enumerate(layer):
            stride = (1 if (i == 0 and nstages == 4) else 2) if b == 0 else 1
            x, H, W = basic_block(x, blk, H=H, W=W, stride=stride,
                                  ngroups=ngroups, normalize=use_normalization)

    C = x.shape[-1]
    x = x.reshape(N, H, W, C)
    return jnp.transpose(x, (0, 3, 1, 2)).astype(jnp.float32)  # back to NCHW f32


# ----------------------------------------------------------------------------
# Plain-JAX f32 reference for a full BasicBlock (correctness check)
# ----------------------------------------------------------------------------
def _block_reference(x, p, stride, ngroups, normalize=True):
    """x: (N, H, W, Cin) f32; params in the kernel's tap/mat format."""
    def conv3(xx, w9, s):
        cin, cout = w9.shape[1], w9.shape[2]
        w = w9.astype(jnp.float32).reshape(3, 3, cin, cout)
        return lax.conv_general_dilated(
            xx, w, (s, s), ((1, 1), (1, 1)),
            dimension_numbers=('NHWC', 'HWIO', 'NHWC'))

    def gn(y, wt, bs):
        n, h, w, c = y.shape
        yg = y.reshape(n, h * w, ngroups, c // ngroups)
        mean = yg.mean(axis=(1, 3), keepdims=True)
        var = yg.var(axis=(1, 3), keepdims=True)
        yn = ((yg - mean) * lax.rsqrt(var + EPS)).reshape(n, h, w, c)
        return yn * wt.reshape(1, 1, 1, c) + bs.reshape(1, 1, 1, c)

    y = conv3(x, p['conv1'], stride)
    if normalize:
        y = gn(y, p['gn1_w'], p['gn1_b'])
    y = jnp.maximum(y, 0.0)
    y = conv3(y, p['conv2'], 1)
    if normalize:
        y = gn(y, p['gn2_w'], p['gn2_b'])
    if 'ds_conv' in p:
        xs = x[:, ::stride, ::stride, :]
        res = jnp.einsum('nhwc,cd->nhwd', xs, p['ds_conv'].astype(jnp.float32))
        if normalize:
            res = gn(res, p['ds_gn_w'], p['ds_gn_b'])
    else:
        res = x
    return jnp.maximum(y + res, 0.0)


if __name__ == "__main__":
    key = jax.random.PRNGKey(0)
    k_in, k_params, k_b1, k_b2, k_x = jax.random.split(key, 5)

    # --- targeted checks of the fused BasicBlock kernel vs lax.conv ---------
    def rand_block_params(bkey, cin, planes, with_ds):
        ks = jax.random.split(bkey, 9)
        p = {
            'conv1': (0.05 * jax.random.normal(ks[0], (9, cin, planes),
                                               jnp.float32)).astype(jnp.bfloat16),
            'gn1_w': 1.0 + 0.1 * jax.random.normal(ks[1], (1, planes), jnp.float32),
            'gn1_b': 0.1 * jax.random.normal(ks[2], (1, planes), jnp.float32),
            'conv2': (0.05 * jax.random.normal(ks[3], (9, planes, planes),
                                               jnp.float32)).astype(jnp.bfloat16),
            'gn2_w': 1.0 + 0.1 * jax.random.normal(ks[4], (1, planes), jnp.float32),
            'gn2_b': 0.1 * jax.random.normal(ks[5], (1, planes), jnp.float32),
        }
        if with_ds:
            p['ds_conv'] = (0.05 * jax.random.normal(ks[6], (cin, planes),
                                                     jnp.float32)).astype(jnp.bfloat16)
            p['ds_gn_w'] = 1.0 + 0.1 * jax.random.normal(ks[7], (1, planes), jnp.float32)
            p['ds_gn_b'] = 0.1 * jax.random.normal(ks[8], (1, planes), jnp.float32)
        return p

    ngroups = 4
    tn, th, tw, tcin = 2, 8, 8, 16
    xt = jax.random.normal(k_in, (tn, th, tw, tcin), jnp.float32).astype(jnp.bfloat16)

    # stride-1, no downsample (exercises the multi-sample staged conv + GN)
    p1 = rand_block_params(k_b1, tcin, tcin, with_ds=False)
    got1, ho1, wo1 = basic_block(xt.reshape(tn, th * tw, tcin), p1,
                                 H=th, W=tw, stride=1, ngroups=ngroups)
    ref1 = _block_reference(xt.astype(jnp.float32), p1, 1, ngroups)
    np.testing.assert_allclose(
        np.asarray(got1.astype(jnp.float32)).reshape(tn, ho1, wo1, -1),
        np.asarray(ref1), atol=5e-2, rtol=5e-2)

    # stride-2 with 1x1 downsample (exercises in-kernel subsampling + ds path)
    p2 = rand_block_params(k_b2, tcin, 2 * tcin, with_ds=True)
    got2, ho2, wo2 = basic_block(xt.reshape(tn, th * tw, tcin), p2,
                                 H=th, W=tw, stride=2, ngroups=ngroups)
    ref2 = _block_reference(xt.astype(jnp.float32), p2, 2, ngroups)
    np.testing.assert_allclose(
        np.asarray(got2.astype(jnp.float32)).reshape(tn, ho2, wo2, -1),
        np.asarray(ref2), atol=5e-2, rtol=5e-2)

    # --- full forward pass ----------------------------------------------------
    # H, W must be divisible by 32 (stem /4 + three stride-2 stages).
    N, Cin, H, W = 2, 4, 32, 32
    base_planes = 16
    layers = [1, 1, 1, 1]          # BasicBlock (expansion=1) per stage

    x = jax.random.normal(k_x, (N, Cin, H, W), jnp.float32)
    params = init_resnet_params(k_params, Cin, base_planes, ngroups, layers)

    fwd = jax.jit(functools.partial(resnet_forward, ngroups=ngroups,
                                    use_normalization=True))
    out = jax.block_until_ready(fwd(params, x))

    expected = (N, base_planes * 2 ** (len(layers) - 1), H // 32, W // 32)
    assert out.shape == expected, (out.shape, expected)
    assert bool(jnp.all(jnp.isfinite(out)))
    print("KERNEL_OK")
</pallas_src>

<mosaic_0001>
module attributes {stable_mosaic.version = 11 : i64} {
  func.func @_basic_block_kernel(%arg0: i32, %arg1: memref<2x64x16xbf16, #tpu.memory_space<vmem>>, %arg2: memref<9x16x16xbf16, #tpu.memory_space<vmem>>, %arg3: memref<9x16x16xbf16, #tpu.memory_space<vmem>>, %arg4: memref<164x2xf32, #tpu.memory_space<vmem>>, %arg5: memref<164x2xf32, #tpu.memory_space<vmem>>, %arg6: memref<16x4xf32, #tpu.memory_space<vmem>>, %arg7: memref<4x16xf32, #tpu.memory_space<vmem>>, %arg8: memref<1x16xf32, #tpu.memory_space<vmem>>, %arg9: memref<1x16xf32, #tpu.memory_space<vmem>>, %arg10: memref<1x16xf32, #tpu.memory_space<vmem>>, %arg11: memref<1x16xf32, #tpu.memory_space<vmem>>, %arg12: memref<2x64x16xbf16, #tpu.memory_space<vmem>>, %arg13: memref<182x16xbf16, #tpu.memory_space<vmem>>, %arg14: memref<182x16xbf16, #tpu.memory_space<vmem>>) attributes {dimension_semantics = [#tpu.dimension_semantics<parallel>], iteration_bounds = array<i64: 1>, scalar_prefetch = 0 : i64, scratch_operands = 2 : i64, tpu.core_type = #tpu.core_type<tc>, window_params = [{transform_indices = @transform_0, window_bounds = array<i64: 2, 64, 16>}, {pipeline_mode = #tpu.pipeline_mode<synchronous>, transform_indices = @transform_1, window_bounds = array<i64: 9, 16, 16>}, {pipeline_mode = #tpu.pipeline_mode<synchronous>, transform_indices = @transform_2, window_bounds = array<i64: 9, 16, 16>}, {pipeline_mode = #tpu.pipeline_mode<synchronous>, transform_indices = @transform_3, window_bounds = array<i64: 164, 2>}, {pipeline_mode = #tpu.pipeline_mode<synchronous>, transform_indices = @transform_4, window_bounds = array<i64: 164, 2>}, {pipeline_mode = #tpu.pipeline_mode<synchronous>, transform_indices = @transform_5, window_bounds = array<i64: 16, 4>}, {pipeline_mode = #tpu.pipeline_mode<synchronous>, transform_indices = @transform_6, window_bounds = array<i64: 4, 16>}, {pipeline_mode = #tpu.pipeline_mode<synchronous>, transform_indices = @transform_7, window_bounds = array<i64: 1, 16>}, {pipeline_mode = #tpu.pipeline_mode<synchronous>, transform_indices = @transform_8, window_bounds = array<i64: 1, 16>}, {pipeline_mode = #tpu.pipeline_mode<synchronous>, transform_indices = @transform_9, window_bounds = array<i64: 1, 16>}, {pipeline_mode = #tpu.pipeline_mode<synchronous>, transform_indices = @transform_10, window_bounds = array<i64: 1, 16>}, {transform_indices = @transform_11, window_bounds = array<i64: 2, 64, 16>}]} {
    %cst = arith.constant 0.000000e+00 : bf16
    %0 = vector.broadcast %cst : bf16 to vector<182x16xbf16>
    %c0 = arith.constant 0 : index
    %c0_0 = arith.constant 0 : index
    %1 = vector.load %arg13[%c0, %c0_0] : memref<182x16xbf16, #tpu.memory_space<vmem>>, vector<182x16xbf16>
    tpu.vector_store %arg13[%c0, %c0_0], %0 {strides = array<i32>} : memref<182x16xbf16, #tpu.memory_space<vmem>>, vector<182x16xbf16>,
    %cst_1 = arith.constant 0.000000e+00 : bf16
    %2 = vector.broadcast %cst_1 : bf16 to vector<182x16xbf16>
    %c0_2 = arith.constant 0 : index
    %c0_3 = arith.constant 0 : index
    %3 = vector.load %arg14[%c0_2, %c0_3] : memref<182x16xbf16, #tpu.memory_space<vmem>>, vector<182x16xbf16>
    tpu.vector_store %arg14[%c0_2, %c0_3], %2 {strides = array<i32>} : memref<182x16xbf16, #tpu.memory_space<vmem>>, vector<182x16xbf16>,
    %c0_4 = arith.constant 0 : index
    %c0_5 = arith.constant 0 : index
    %c0_6 = arith.constant 0 : index
    %4 = vector.load %arg1[%c0_4, %c0_5, %c0_6] : memref<2x64x16xbf16, #tpu.memory_space<vmem>>, vector<1x64x16xbf16>
    %5 = vector.shape_cast %4 : vector<1x64x16xbf16> to vector<64x16xbf16>
    %c18 = arith.constant 18 : index
    %c0_7 = arith.constant 0 : index
    %6 = vector.load %arg13[%c18, %c0_7] : memref<182x16xbf16, #tpu.memory_space<vmem>>, vector<64x16xbf16>
    tpu.vector_store %arg13[%c18, %c0_7], %5 {strides = array<i32>} : memref<182x16xbf16, #tpu.memory_space<vmem>>, vector<64x16xbf16>,
    %c1 = arith.constant 1 : index
    %c0_8 = arith.constant 0 : index
    %c0_9 = arith.constant 0 : index
    %7 = vector.load %arg1[%c1, %c0_8, %c0_9] : memref<2x64x16xbf16, #tpu.memory_space<vmem>>, vector<1x64x16xbf16>
    %8 = vector.shape_cast %7 : vector<1x64x16xbf16> to vector<64x16xbf16>
    %c100 = arith.constant 100 : index
    %c0_10 = arith.constant 0 : index
    %9 = vector.load %arg13[%c100, %c0_10] : memref<182x16xbf16, #tpu.memory_space<vmem>>, vector<64x16xbf16>
    tpu.vector_store %arg13[%c100, %c0_10], %8 {strides = array<i32>} : memref<182x16xbf16, #tpu.memory_space<vmem>>, vector<64x16xbf16>,
    %c0_11 = arith.constant 0 : index
    %c0_12 = arith.constant 0 : index
    %10 = vector.load %arg6[%c0_11, %c0_12] : memref<16x4xf32, #tpu.memory_space<vmem>>, vector<16x4xf32>
    %c0_13 = arith.constant 0 : index
    %c0_14 = arith.constant 0 : index
    %11 = vector.load %arg7[%c0_13, %c0_14] : memref<4x16xf32, #tpu.memory_space<vmem>>, vector<4x16xf32>
    %cst_15 = arith.constant 0.000000e+00 : f32
    %12 = vector.broadcast %cst_15 : f32 to vector<164x16xf32>
    %cst_16 = arith.constant 0.000000e+00 : f32
    %13 = vector.broadcast %cst_16 : f32 to vector<164x16xf32>
    %c0_17 = arith.constant 0 : index
    %c0_18 = arith.constant 0 : index
    %14 = vector.load %arg13[%c0_17, %c0_18] : memref<182x16xbf16, #tpu.memory_space<vmem>>, vector<164x16xbf16>
    %c0_19 = arith.constant 0 : index
    %c0_20 = arith.constant 0 : index
    %c0_21 = arith.constant 0 : index
    %15 = vector.load %arg2[%c0_19, %c0_20, %c0_21] : memref<9x16x16xbf16, #tpu.memory_space<vmem>>, vector<1x16x16xbf16>
    %16 = vector.shape_cast %15 : vector<1x16x16xbf16> to vector<16x16xbf16>
    %cst_22 = arith.constant dense<0.000000e+00> : vector<164x16xf32>
    %17 = tpu.matmul %14, %16, %cst_22 {dimension_numbers = #tpu.dot_dimension_numbers<[1], [0], [0], [1], [0, 0, 1, 1], [], []>} : vector<164x16xbf16>, vector<16x16xbf16>, vector<164x16xf32> -> vector<164x16xf32>
    %18 = arith.addf %13, %17 : vector<164x16xf32>
    %c8 = arith.constant 8 : index
    %c0_23 = arith.constant 0 : index
    %19 = vector.load %arg13[%c8, %c0_23] : memref<182x16xbf16, #tpu.memory_space<vmem>>, vector<164x16xbf16>
    %c3 = arith.constant 3 : index
    %c0_24 = arith.constant 0 : index
    %c0_25 = arith.constant 0 : index
    %20 = vector.load %arg2[%c3, %c0_24, %c0_25] : memref<9x16x16xbf16, #tpu.memory_space<vmem>>, vector<1x16x16xbf16>
    %21 = vector.shape_cast %20 : vector<1x16x16xbf16> to vector<16x16xbf16>
    %cst_26 = arith.constant dense<0.000000e+00> : vector<164x16xf32>
    %22 = tpu.matmul %19, %21, %cst_26 {dimension_numbers = #tpu.dot_dimension_numbers<[1], [0], [0], [1], [0, 0, 1, 1], [], []>} : vector<164x16xbf16>, vector<16x16xbf16>, vector<164x16xf32> -> vector<164x16xf32>
    %23 = arith.addf %18, %22 : vector<164x16xf32>
    %c16 = arith.constant 16 : index
    %c0_27 = arith.constant 0 : index
    %24 = vector.load %arg13[%c16, %c0_27] : memref<182x16xbf16, #tpu.memory_space<vmem>>, vector<164x16xbf16>
    %c6 = arith.constant 6 : index
    %c0_28 = arith.constant 0 : index
    %c0_29 = arith.constant 0 : index
    %25 = vector.load %arg2[%c6, %c0_28, %c0_29] : memref<9x16x16xbf16, #tpu.memory_space<vmem>>, vector<1x16x16xbf16>
    %26 = vector.shape_cast %25 : vector<1x16x16xbf16> to vector<16x16xbf16>
    %cst_30 = arith.constant dense<0.000000e+00> : vector<164x16xf32>
    %27 = tpu.matmul %24, %26, %cst_30 {dimension_numbers = #tpu.dot_dimension_numbers<[1], [0], [0], [1], [0, 0, 1, 1], [], []>} : vector<164x16xbf16>, vector<16x16xbf16>, vector<164x16xf32> -> vector<164x16xf32>
    %28 = arith.addf %23, %27 : vector<164x16xf32>
    %c0_31 = arith.constant 0 : index
    %c0_32 = arith.constant 0 : index
    %29 = vector.load %arg4[%c0_31, %c0_32] : memref<164x2xf32, #tpu.memory_space<vmem>>, vector<164x1xf32>
    %30 = vector.broadcast %29 : vector<164x1xf32> to vector<164x16xf32>
    %31 = arith.mulf %30, %28 : vector<164x16xf32>
    %32 = arith.addf %12, %31 : vector<164x16xf32>
    %cst_33 = arith.constant 0.000000e+00 : f32
    %33 = vector.broadcast %cst_33 : f32 to vector<164x16xf32>
    %c1_34 = arith.constant 1 : index
    %c0_35 = arith.constant 0 : index
    %34 = vector.load %arg13[%c1_34, %c0_35] : memref<182x16xbf16, #tpu.memory_space<vmem>>, vector<164x16xbf16>
    %c1_36 = arith.constant 1 : index
    %c0_37 = arith.constant 0 : index
    %c0_38 = arith.constant 0 : index
    %35 = vector.load %arg2[%c1_36, %c0_37, %c0_38] : memref<9x16x16xbf16, #tpu.memory_space<vmem>>, vector<1x16x16xbf16>
    %36 = vector.shape_cast %35 : vector<1x16x16xbf16> to vector<16x16xbf16>
    %cst_39 = arith.constant dense<0.000000e+00> : vector<164x16xf32>
    %37 = tpu.matmul %34, %36, %cst_39 {dimension_numbers = #tpu.dot_dimension_numbers<[1], [0], [0], [1], [0, 0, 1, 1], [], []>} : vector<164x16xbf16>, vector<16x16xbf16>, vector<164x16xf32> -> vector<164x16xf32>
    %38 = arith.addf %33, %37 : vector<164x16xf32>
    %c9 = arith.constant 9 : index
    %c0_40 = arith.constant 0 : index
    %39 = vector.load %arg13[%c9, %c0_40] : memref<182x16xbf16, #tpu.memory_space<vmem>>, vector<164x16xbf16>
    %c4 = arith.constant 4 : index
    %c0_41 = arith.constant 0 : index
    %c0_42 = arith.constant 0 : index
    %40 = vector.load %arg2[%c4, %c0_41, %c0_42] : memref<9x16x16xbf16, #tpu.memory_space<vmem>>, vector<1x16x16xbf16>
    %41 = vector.shape_cast %40 : vector<1x16x16xbf16> to vector<16x16xbf16>
    %cst_43 = arith.constant dense<0.000000e+00> : vector<164x16xf32>
    %42 = tpu.matmul %39, %41, %cst_43 {dimension_numbers = #tpu.dot_dimension_numbers<[1], [0], [0], [1], [0, 0, 1, 1], [], []>} : vector<164x16xbf16>, vector<16x16xbf16>, vector<164x16xf32> -> vector<164x16xf32>
    %43 = arith.addf %38, %42 : vector<164x16xf32>
    %c17 = arith.constant 17 : index
    %c0_44 = arith.constant 0 : index
    %44 = vector.load %arg13[%c17, %c0_44] : memref<182x16xbf16, #tpu.memory_space<vmem>>, vector<164x16xbf16>
    %c7 = arith.constant 7 : index
    %c0_45 = arith.constant 0 : index
    %c0_46 = arith.constant 0 : index
    %45 = vector.load %arg2[%c7, %c0_45, %c0_46] : memref<9x16x16xbf16, #tpu.memory_space<vmem>>, vector<1x16x16xbf16>
    %46 = vector.shape_cast %45 : vector<1x16x16xbf16> to vector<16x16xbf16>
    %cst_47 = arith.constant dense<0.000000e+00> : vector<164x16xf32>
    %47 = tpu.matmul %44, %46, %cst_47 {dimension_numbers = #tpu.dot_dimension_numbers<[1], [0], [0], [1], [0, 0, 1, 1], [], []>} : vector<164x16xbf16>, vector<16x16xbf16>, vector<164x16xf32> -> vector<164x16xf32>
    %48 = arith.addf %43, %47 : vector<164x16xf32>
    %49 = arith.addf %32, %48 : vector<164x16xf32>
    %cst_48 = arith.constant 0.000000e+00 : f32
    %50 = vector.broadcast %cst_48 : f32 to vector<164x16xf32>
    %c2 = arith.constant 2 : index
    %c0_49 = arith.constant 0 : index
    %51 = vector.load %arg13[%c2, %c0_49] : memref<182x16xbf16, #tpu.memory_space<vmem>>, vector<164x16xbf16>
    %c2_50 = arith.constant 2 : index
    %c0_51 = arith.constant 0 : index
    %c0_52 = arith.constant 0 : index
    %52 = vector.load %arg2[%c2_50, %c0_51, %c0_52] : memref<9x16x16xbf16, #tpu.memory_space<vmem>>, vector<1x16x16xbf16>
    %53 = vector.shape_cast %52 : vector<1x16x16xbf16> to vector<16x16xbf16>
    %cst_53 = arith.constant dense<0.000000e+00> : vector<164x16xf32>
    %54 = tpu.matmul %51, %53, %cst_53 {dimension_numbers = #tpu.dot_dimension_numbers<[1], [0], [0], [1], [0, 0, 1, 1], [], []>} : vector<164x16xbf16>, vector<16x16xbf16>, vector<164x16xf32> -> vector<164x16xf32>
    %55 = arith.addf %50, %54 : vector<164x16xf32>
    %c10 = arith.constant 10 : index
    %c0_54 = arith.constant 0 : index
    %56 = vector.load %arg13[%c10, %c0_54] : memref<182x16xbf16, #tpu.memory_space<vmem>>, vector<164x16xbf16>
    %c5 = arith.constant 5 : index
    %c0_55 = arith.constant 0 : index
    %c0_56 = arith.constant 0 : index
    %57 = vector.load %arg2[%c5, %c0_55, %c0_56] : memref<9x16x16xbf16, #tpu.memory_space<vmem>>, vector<1x16x16xbf16>
    %58 = vector.shape_cast %57 : vector<1x16x16xbf16> to vector<16x16xbf16>
    %cst_57 = arith.constant dense<0.000000e+00> : vector<164x16xf32>
    %59 = tpu.matmul %56, %58, %cst_57 {dimension_numbers = #tpu.dot_dimension_numbers<[1], [0], [0], [1], [0, 0, 1, 1], [], []>} : vector<164x16xbf16>, vector<16x16xbf16>, vector<164x16xf32> -> vector<164x16xf32>
    %60 = arith.addf %55, %59 : vector<164x16xf32>
    %c18_58 = arith.constant 18 : index
    %c0_59 = arith.constant 0 : index
    %61 = vector.load %arg13[%c18_58, %c0_59] : memref<182x16xbf16, #tpu.memory_space<vmem>>, vector<164x16xbf16>
    %c8_60 = arith.constant 8 : index
    %c0_61 = arith.constant 0 : index
    %c0_62 = arith.constant 0 : index
    %62 = vector.load %arg2[%c8_60, %c0_61, %c0_62] : memref<9x16x16xbf16, #tpu.memory_space<vmem>>, vector<1x16x16xbf16>
    %63 = vector.shape_cast %62 : vector<1x16x16xbf16> to vector<16x16xbf16>
    %cst_63 = arith.constant dense<0.000000e+00> : vector<164x16xf32>
    %64 = tpu.matmul %61, %63, %cst_63 {dimension_numbers = #tpu.dot_dimension_numbers<[1], [0], [0], [1], [0, 0, 1, 1], [], []>} : vector<164x16xbf16>, vector<16x16xbf16>, vector<164x16xf32> -> vector<164x16xf32>
    %65 = arith.addf %60, %64 : vector<164x16xf32>
    %c0_64 = arith.constant 0 : index
    %c1_65 = arith.constant 1 : index
    %66 = vector.load %arg4[%c0_64, %c1_65] : memref<164x2xf32, #tpu.memory_space<vmem>>, vector<164x1xf32>
    %67 = vector.broadcast %66 : vector<164x1xf32> to vector<164x16xf32>
    %68 = arith.mulf %67, %65 : vector<164x16xf32>
    %69 = arith.addf %49, %68 : vector<164x16xf32>
    %70 = vector.extract_strided_slice %69 {offsets = [9, 0], sizes = [64, 16], strides = [1, 1]} : vector<164x16xf32> to vector<64x16xf32>
    %c0_66 = arith.constant 0 : index
    %c0_67 = arith.constant 0 : index
    %71 = vector.load %arg8[%c0_66, %c0_67] : memref<1x16xf32, #tpu.memory_space<vmem>>, vector<1x16xf32>
    %c0_68 = arith.constant 0 : index
    %c0_69 = arith.constant 0 : index
    %72 = vector.load %arg9[%c0_68, %c0_69] : memref<1x16xf32, #tpu.memory_space<vmem>>, vector<1x16xf32>
    %cst_70 = arith.constant dense<0.000000e+00> : vector<16xf32>
    %73 = vector.multi_reduction <add>, %70, %cst_70 [0] : vector<64x16xf32> to vector<16xf32>
    %74 = vector.shape_cast %73 : vector<16xf32> to vector<1x16xf32>
    %75 = arith.mulf %70, %70 : vector<64x16xf32>
    %cst_71 = arith.constant dense<0.000000e+00> : vector<16xf32>
    %76 = vector.multi_reduction <add>, %75, %cst_71 [0] : vector<64x16xf32> to vector<16xf32>
    %77 = vector.shape_cast %76 : vector<16xf32> to vector<1x16xf32>
    %78 = tpu.concatenate %74, %77 in 0 : vector<1x16xf32>, vector<1x16xf32> -> vector<2x16xf32>
    %cst_72 = arith.constant dense<0.000000e+00> : vector<2x4xf32>
    %79 = tpu.matmul %78, %10, %cst_72 {dimension_numbers = #tpu.dot_dimension_numbers<[1], [0], [0], [1], [0, 0, 1, 1], [], []>} : vector<2x16xf32>, vector<16x4xf32>, vector<2x4xf32> -> vector<2x4xf32>
    %cst_73 = arith.constant 2.560000e+02 : f32
    %80 = vector.broadcast %cst_73 : f32 to vector<2x4xf32>
    %81 = arith.divf %79, %80 : vector<2x4xf32>
    %82 = vector.extract_strided_slice %81 {offsets = [0, 0], sizes = [1, 4], strides = [1, 1]} : vector<2x4xf32> to vector<1x4xf32>
    %83 = vector.extract_strided_slice %81 {offsets = [1, 0], sizes = [1, 4], strides = [1, 1]} : vector<2x4xf32> to vector<1x4xf32>
    %84 = arith.mulf %82, %82 : vector<1x4xf32>
    %85 = arith.subf %83, %84 : vector<1x4xf32>
    %cst_74 = arith.constant 9.99999974E-6 : f32
    %86 = vector.broadcast %cst_74 : f32 to vector<1x4xf32>
    %87 = arith.addf %85, %86 : vector<1x4xf32>
    %88 = math.rsqrt %87 : vector<1x4xf32>
    %89 = tpu.concatenate %82, %88 in 0 : vector<1x4xf32>, vector<1x4xf32> -> vector<2x4xf32>
    %cst_75 = arith.constant dense<0.000000e+00> : vector<2x16xf32>
    %90 = tpu.matmul %89, %11, %cst_75 {dimension_numbers = #tpu.dot_dimension_numbers<[1], [0], [0], [1], [0, 0, 1, 1], [], []>} : vector<2x4xf32>, vector<4x16xf32>, vector<2x16xf32> -> vector<2x16xf32>
    %91 = vector.extract_strided_slice %90 {offsets = [1, 0], sizes = [1, 16], strides = [1, 1]} : vector<2x16xf32> to vector<1x16xf32>
    %92 = arith.mulf %91, %71 : vector<1x16xf32>
    %93 = vector.extract_strided_slice %90 {offsets = [0, 0], sizes = [1, 16], strides = [1, 1]} : vector<2x16xf32> to vector<1x16xf32>
    %94 = arith.mulf %93, %92 : vector<1x16xf32>
    %95 = arith.subf %72, %94 : vector<1x16xf32>
    %96 = vector.broadcast %92 : vector<1x16xf32> to vector<64x16xf32>
    %97 = arith.mulf %70, %96 : vector<64x16xf32>
    %98 = vector.broadcast %95 : vector<1x16xf32> to vector<64x16xf32>
    %99 = arith.addf %97, %98 : vector<64x16xf32>
    %cst_76 = arith.constant 0.000000e+00 : f32
    %100 = vector.broadcast %cst_76 : f32 to vector<64x16xf32>
    %101 = arith.maximumf %99, %100 : vector<64x16xf32>
    %102 = arith.truncf %101 : vector<64x16xf32> to vector<64x16xbf16>
    %c18_77 = arith.constant 18 : index
    %c0_78 = arith.constant 0 : index
    %103 = vector.load %arg14[%c18_77, %c0_78] : memref<182x16xbf16, #tpu.memory_space<vmem>>, vector<64x16xbf16>
    tpu.vector_store %arg14[%c18_77, %c0_78], %102 {strides = array<i32>} : memref<182x16xbf16, #tpu.memory_space<vmem>>, vector<64x16xbf16>,
    %104 = vector.extract_strided_slice %69 {offsets = [91, 0], sizes = [64, 16], strides = [1, 1]} : vector<164x16xf32> to vector<64x16xf32>
    %c0_79 = arith.constant 0 : index
    %c0_80 = arith.constant 0 : index
    %105 = vector.load %arg8[%c0_79, %c0_80] : memref<1x16xf32, #tpu.memory_space<vmem>>, vector<1x16xf32>
    %c0_81 = arith.constant 0 : index
    %c0_82 = arith.constant 0 : index
    %106 = vector.load %arg9[%c0_81, %c0_82] : memref<1x16xf32, #tpu.memory_space<vmem>>, vector<1x16xf32>
    %cst_83 = arith.constant dense<0.000000e+00> : vector<16xf32>
    %107 = vector.multi_reduction <add>, %104, %cst_83 [0] : vector<64x16xf32> to vector<16xf32>
    %108 = vector.shape_cast %107 : vector<16xf32> to vector<1x16xf32>
    %109 = arith.mulf %104, %104 : vector<64x16xf32>
    %cst_84 = arith.constant dense<0.000000e+00> : vector<16xf32>
    %110 = vector.multi_reduction <add>, %109, %cst_84 [0] : vector<64x16xf32> to vector<16xf32>
    %111 = vector.shape_cast %110 : vector<16xf32> to vector<1x16xf32>
    %112 = tpu.concatenate %108, %111 in 0 : vector<1x16xf32>, vector<1x16xf32> -> vector<2x16xf32>
    %cst_85 = arith.constant dense<0.000000e+00> : vector<2x4xf32>
    %113 = tpu.matmul %112, %10, %cst_85 {dimension_numbers = #tpu.dot_dimension_numbers<[1], [0], [0], [1], [0, 0, 1, 1], [], []>} : vector<2x16xf32>, vector<16x4xf32>, vector<2x4xf32> -> vector<2x4xf32>
    %cst_86 = arith.constant 2.560000e+02 : f32
    %114 = vector.broadcast %cst_86 : f32 to vector<2x4xf32>
    %115 = arith.divf %113, %114 : vector<2x4xf32>
    %116 = vector.extract_strided_slice %115 {offsets = [0, 0], sizes = [1, 4], strides = [1, 1]} : vector<2x4xf32> to vector<1x4xf32>
    %117 = vector.extract_strided_slice %115 {offsets = [1, 0], sizes = [1, 4], strides = [1, 1]} : vector<2x4xf32> to vector<1x4xf32>
    %118 = arith.mulf %116, %116 : vector<1x4xf32>
    %119 = arith.subf %117, %118 : vector<1x4xf32>
    %cst_87 = arith.constant 9.99999974E-6 : f32
    %120 = vector.broadcast %cst_87 : f32 to vector<1x4xf32>
    %121 = arith.addf %119, %120 : vector<1x4xf32>
    %122 = math.rsqrt %121 : vector<1x4xf32>
    %123 = tpu.concatenate %116, %122 in 0 : vector<1x4xf32>, vector<1x4xf32> -> vector<2x4xf32>
    %cst_88 = arith.constant dense<0.000000e+00> : vector<2x16xf32>
    %124 = tpu.matmul %123, %11, %cst_88 {dimension_numbers = #tpu.dot_dimension_numbers<[1], [0], [0], [1], [0, 0, 1, 1], [], []>} : vector<2x4xf32>, vector<4x16xf32>, vector<2x16xf32> -> vector<2x16xf32>
    %125 = vector.extract_strided_slice %124 {offsets = [1, 0], sizes = [1, 16], strides = [1, 1]} : vector<2x16xf32> to vector<1x16xf32>
    %126 = arith.mulf %125, %105 : vector<1x16xf32>
    %127 = vector.extract_strided_slice %124 {offsets = [0, 0], sizes = [1, 16], strides = [1, 1]} : vector<2x16xf32> to vector<1x16xf32>
    %128 = arith.mulf %127, %126 : vector<1x16xf32>
    %129 = arith.subf %106, %128 : vector<1x16xf32>
    %130 = vector.broadcast %126 : vector<1x16xf32> to vector<64x16xf32>
    %131 = arith.mulf %104, %130 : vector<64x16xf32>
    %132 = vector.broadcast %129 : vector<1x16xf32> to vector<64x16xf32>
    %133 = arith.addf %131, %132 : vector<64x16xf32>
    %cst_89 = arith.constant 0.000000e+00 : f32
    %134 = vector.broadcast %cst_89 : f32 to vector<64x16xf32>
    %135 = arith.maximumf %133, %134 : vector<64x16xf32>
    %136 = arith.truncf %135 : vector<64x16xf32> to vector<64x16xbf16>
    %c100_90 = arith.constant 100 : index
    %c0_91 = arith.constant 0 : index
    %137 = vector.load %arg14[%c100_90, %c0_91] : memref<182x16xbf16, #tpu.memory_space<vmem>>, vector<64x16xbf16>
    tpu.vector_store %arg14[%c100_90, %c0_91], %136 {strides = array<i32>} : memref<182x16xbf16, #tpu.memory_space<vmem>>, vector<64x16xbf16>,
    %cst_92 = arith.constant 0.000000e+00 : f32
    %138 = vector.broadcast %cst_92 : f32 to vector<164x16xf32>
    %cst_93 = arith.constant 0.000000e+00 : f32
    %139 = vector.broadcast %cst_93 : f32 to vector<164x16xf32>
    %c0_94 = arith.constant 0 : index
    %c0_95 = arith.constant 0 : index
    %140 = vector.load %arg14[%c0_94, %c0_95] : memref<182x16xbf16, #tpu.memory_space<vmem>>, vector<164x16xbf16>
    %c0_96 = arith.constant 0 : index
    %c0_97 = arith.constant 0 : index
    %c0_98 = arith.constant 0 : index
    %141 = vector.load %arg3[%c0_96, %c0_97, %c0_98] : memref<9x16x16xbf16, #tpu.memory_space<vmem>>, vector<1x16x16xbf16>
    %142 = vector.shape_cast %141 : vector<1x16x16xbf16> to vector<16x16xbf16>
    %cst_99 = arith.constant dense<0.000000e+00> : vector<164x16xf32>
    %143 = tpu.matmul %140, %142, %cst_99 {dimension_numbers = #tpu.dot_dimension_numbers<[1], [0], [0], [1], [0, 0, 1, 1], [], []>} : vector<164x16xbf16>, vector<16x16xbf16>, vector<164x16xf32> -> vector<164x16xf32>
    %144 = arith.addf %139, %143 : vector<164x16xf32>
    %c8_100 = arith.constant 8 : index
    %c0_101 = arith.constant 0 : index
    %145 = vector.load %arg14[%c8_100, %c0_101] : memref<182x16xbf16, #tpu.memory_space<vmem>>, vector<164x16xbf16>
    %c3_102 = arith.constant 3 : index
    %c0_103 = arith.constant 0 : index
    %c0_104 = arith.constant 0 : index
    %146 = vector.load %arg3[%c3_102, %c0_103, %c0_104] : memref<9x16x16xbf16, #tpu.memory_space<vmem>>, vector<1x16x16xbf16>
    %147 = vector.shape_cast %146 : vector<1x16x16xbf16> to vector<16x16xbf16>
    %cst_105 = arith.constant dense<0.000000e+00> : vector<164x16xf32>
    %148 = tpu.matmul %145, %147, %cst_105 {dimension_numbers = #tpu.dot_dimension_numbers<[1], [0], [0], [1], [0, 0, 1, 1], [], []>} : vector<164x16xbf16>, vector<16x16xbf16>, vector<164x16xf32> -> vector<164x16xf32>
    %149 = arith.addf %144, %148 : vector<164x16xf32>
    %c16_106 = arith.constant 16 : index
    %c0_107 = arith.constant 0 : index
    %150 = vector.load %arg14[%c16_106, %c0_107] : memref<182x16xbf16, #tpu.memory_space<vmem>>, vector<164x16xbf16>
    %c6_108 = arith.constant 6 : index
    %c0_109 = arith.constant 0 : index
    %c0_110 = arith.constant 0 : index
    %151 = vector.load %arg3[%c6_108, %c0_109, %c0_110] : memref<9x16x16xbf16, #tpu.memory_space<vmem>>, vector<1x16x16xbf16>
    %152 = vector.shape_cast %151 : vector<1x16x16xbf16> to vector<16x16xbf16>
    %cst_111 = arith.constant dense<0.000000e+00> : vector<164x16xf32>
    %153 = tpu.matmul %150, %152, %cst_111 {dimension_numbers = #tpu.dot_dimension_numbers<[1], [0], [0], [1], [0, 0, 1, 1], [], []>} : vector<164x16xbf16>, vector<16x16xbf16>, vector<164x16xf32> -> vector<164x16xf32>
    %154 = arith.addf %149, %153 : vector<164x16xf32>
    %c0_112 = arith.constant 0 : index
    %c0_113 = arith.constant 0 : index
    %155 = vector.load %arg5[%c0_112, %c0_113] : memref<164x2xf32, #tpu.memory_space<vmem>>, vector<164x1xf32>
    %156 = vector.broadcast %155 : vector<164x1xf32> to vector<164x16xf32>
    %157 = arith.mulf %156, %154 : vector<164x16xf32>
    %158 = arith.addf %138, %157 : vector<164x16xf32>
    %cst_114 = arith.constant 0.000000e+00 : f32
    %159 = vector.broadcast %cst_114 : f32 to vector<164x16xf32>
    %c1_115 = arith.constant 1 : index
    %c0_116 = arith.constant 0 : index
    %160 = vector.load %arg14[%c1_115, %c0_116] : memref<182x16xbf16, #tpu.memory_space<vmem>>, vector<164x16xbf16>
    %c1_117 = arith.constant 1 : index
    %c0_118 = arith.constant 0 : index
    %c0_119 = arith.constant 0 : index
    %161 = vector.load %arg3[%c1_117, %c0_118, %c0_119] : memref<9x16x16xbf16, #tpu.memory_space<vmem>>, vector<1x16x16xbf16>
    %162 = vector.shape_cast %161 : vector<1x16x16xbf16> to vector<16x16xbf16>
    %cst_120 = arith.constant dense<0.000000e+00> : vector<164x16xf32>
    %163 = tpu.matmul %160, %162, %cst_120 {dimension_numbers = #tpu.dot_dimension_numbers<[1], [0], [0], [1], [0, 0, 1, 1], [], []>} : vector<164x16xbf16>, vector<16x16xbf16>, vector<164x16xf32> -> vector<164x16xf32>
    %164 = arith.addf %159, %163 : vector<164x16xf32>
    %c9_121 = arith.constant 9 : index
    %c0_122 = arith.constant 0 : index
    %165 = vector.load %arg14[%c9_121, %c0_122] : memref<182x16xbf16, #tpu.memory_space<vmem>>, vector<164x16xbf16>
    %c4_123 = arith.constant 4 : index
    %c0_124 = arith.constant 0 : index
    %c0_125 = arith.constant 0 : index
    %166 = vector.load %arg3[%c4_123, %c0_124, %c0_125] : memref<9x16x16xbf16, #tpu.memory_space<vmem>>, vector<1x16x16xbf16>
    %167 = vector.shape_cast %166 : vector<1x16x16xbf16> to vector<16x16xbf16>
    %cst_126 = arith.constant dense<0.000000e+00> : vector<164x16xf32>
    %168 = tpu.matmul %165, %167, %cst_126 {dimension_numbers = #tpu.dot_dimension_numbers<[1], [0], [0], [1], [0, 0, 1, 1], [], []>} : vector<164x16xbf16>, vector<16x16xbf16>, vector<164x16xf32> -> vector<164x16xf32>
    %169 = arith.addf %164, %168 : vector<164x16xf32>
    %c17_127 = arith.constant 17 : index
    %c0_128 = arith.constant 0 : index
    %170 = vector.load %arg14[%c17_127, %c0_128] : memref<182x16xbf16, #tpu.memory_space<vmem>>, vector<164x16xbf16>
    %c7_129 = arith.constant 7 : index
    %c0_130 = arith.constant 0 : index
    %c0_131 = arith.constant 0 : index
    %171 = vector.load %arg3[%c7_129, %c0_130, %c0_131] : memref<9x16x16xbf16, #tpu.memory_space<vmem>>, vector<1x16x16xbf16>
    %172 = vector.shape_cast %171 : vector<1x16x16xbf16> to vector<16x16xbf16>
    %cst_132 = arith.constant dense<0.000000e+00> : vector<164x16xf32>
    %173 = tpu.matmul %170, %172, %cst_132 {dimension_numbers = #tpu.dot_dimension_numbers<[1], [0], [0], [1], [0, 0, 1, 1], [], []>} : vector<164x16xbf16>, vector<16x16xbf16>, vector<164x16xf32> -> vector<164x16xf32>
    %174 = arith.addf %169, %173 : vector<164x16xf32>
    %175 = arith.addf %158, %174 : vector<164x16xf32>
    %cst_133 = arith.constant 0.000000e+00 : f32
    %176 = vector.broadcast %cst_133 : f32 to vector<164x16xf32>
    %c2_134 = arith.constant 2 : index
    %c0_135 = arith.constant 0 : index
    %177 = vector.load %arg14[%c2_134, %c0_135] : memref<182x16xbf16, #tpu.memory_space<vmem>>, vector<164x16xbf16>
    %c2_136 = arith.constant 2 : index
    %c0_137 = arith.constant 0 : index
    %c0_138 = arith.constant 0 : index
    %178 = vector.load %arg3[%c2_136, %c0_137, %c0_138] : memref<9x16x16xbf16, #tpu.memory_space<vmem>>, vector<1x16x16xbf16>
    %179 = vector.shape_cast %178 : vector<1x16x16xbf16> to vector<16x16xbf16>
    %cst_139 = arith.constant dense<0.000000e+00> : vector<164x16xf32>
    %180 = tpu.matmul %177, %179, %cst_139 {dimension_numbers = #tpu.dot_dimension_numbers<[1], [0], [0], [1], [0, 0, 1, 1], [], []>} : vector<164x16xbf16>, vector<16x16xbf16>, vector<164x16xf32> -> vector<164x16xf32>
    %181 = arith.addf %176, %180 : vector<164x16xf32>
    %c10_140 = arith.constant 10 : index
    %c0_141 = arith.constant 0 : index
    %182 = vector.load %arg14[%c10_140, %c0_141] : memref<182x16xbf16, #tpu.memory_space<vmem>>, vector<164x16xbf16>
    %c5_142 = arith.constant 5 : index
    %c0_143 = arith.constant 0 : index
    %c0_144 = arith.constant 0 : index
    %183 = vector.load %arg3[%c5_142, %c0_143, %c0_144] : memref<9x16x16xbf16, #tpu.memory_space<vmem>>, vector<1x16x16xbf16>
    %184 = vector.shape_cast %183 : vector<1x16x16xbf16> to vector<16x16xbf16>
    %cst_145 = arith.constant dense<0.000000e+00> : vector<164x16xf32>
    %185 = tpu.matmul %182, %184, %cst_145 {dimension_numbers = #tpu.dot_dimension_numbers<[1], [0], [0], [1], [0, 0, 1, 1], [], []>} : vector<164x16xbf16>, vector<16x16xbf16>, vector<164x16xf32> -> vector<164x16xf32>
    %186 = arith.addf %181, %185 : vector<164x16xf32>
    %c18_146 = arith.constant 18 : index
    %c0_147 = arith.constant 0 : index
    %187 = vector.load %arg14[%c18_146, %c0_147] : memref<182x16xbf16, #tpu.memory_space<vmem>>, vector<164x16xbf16>
    %c8_148 = arith.constant 8 : index
    %c0_149 = arith.constant 0 : index
    %c0_150 = arith.constant 0 : index
    %188 = vector.load %arg3[%c8_148, %c0_149, %c0_150] : memref<9x16x16xbf16, #tpu.memory_space<vmem>>, vector<1x16x16xbf16>
    %189 = vector.shape_cast %188 : vector<1x16x16xbf16> to vector<16x16xbf16>
    %cst_151 = arith.constant dense<0.000000e+00> : vector<164x16xf32>
    %190 = tpu.matmul %187, %189, %cst_151 {dimension_numbers = #tpu.dot_dimension_numbers<[1], [0], [0], [1], [0, 0, 1, 1], [], []>} : vector<164x16xbf16>, vector<16x16xbf16>, vector<164x16xf32> -> vector<164x16xf32>
    %191 = arith.addf %186, %190 : vector<164x16xf32>
    %c0_152 = arith.constant 0 : index
    %c1_153 = arith.constant 1 : index
    %192 = vector.load %arg5[%c0_152, %c1_153] : memref<164x2xf32, #tpu.memory_space<vmem>>, vector<164x1xf32>
    %193 = vector.broadcast %192 : vector<164x1xf32> to vector<164x16xf32>
    %194 = arith.mulf %193, %191 : vector<164x16xf32>
    %195 = arith.addf %175, %194 : vector<164x16xf32>
    %196 = vector.extract_strided_slice %195 {offsets = [9, 0], sizes = [64, 16], strides = [1, 1]} : vector<164x16xf32> to vector<64x16xf32>
    %c0_154 = arith.constant 0 : index
    %c0_155 = arith.constant 0 : index
    %197 = vector.load %arg10[%c0_154, %c0_155] : memref<1x16xf32, #tpu.memory_space<vmem>>, vector<1x16xf32>
    %c0_156 = arith.constant 0 : index
    %c0_157 = arith.constant 0 : index
    %198 = vector.load %arg11[%c0_156, %c0_157] : memref<1x16xf32, #tpu.memory_space<vmem>>, vector<1x16xf32>
    %cst_158 = arith.constant dense<0.000000e+00> : vector<16xf32>
    %199 = vector.multi_reduction <add>, %196, %cst_158 [0] : vector<64x16xf32> to vector<16xf32>
    %200 = vector.shape_cast %199 : vector<16xf32> to vector<1x16xf32>
    %201 = arith.mulf %196, %196 : vector<64x16xf32>
    %cst_159 = arith.constant dense<0.000000e+00> : vector<16xf32>
    %202 = vector.multi_reduction <add>, %201, %cst_159 [0] : vector<64x16xf32> to vector<16xf32>
    %203 = vector.shape_cast %202 : vector<16xf32> to vector<1x16xf32>
    %204 = tpu.concatenate %200, %203 in 0 : vector<1x16xf32>, vector<1x16xf32> -> vector<2x16xf32>
    %cst_160 = arith.constant dense<0.000000e+00> : vector<2x4xf32>
    %205 = tpu.matmul %204, %10, %cst_160 {dimension_numbers = #tpu.dot_dimension_numbers<[1], [0], [0], [1], [0, 0, 1, 1], [], []>} : vector<2x16xf32>, vector<16x4xf32>, vector<2x4xf32> -> vector<2x4xf32>
    %cst_161 = arith.constant 2.560000e+02 : f32
    %206 = vector.broadcast %cst_161 : f32 to vector<2x4xf32>
    %207 = arith.divf %205, %206 : vector<2x4xf32>
    %208 = vector.extract_strided_slice %207 {offsets = [0, 0], sizes = [1, 4], strides = [1, 1]} : vector<2x4xf32> to vector<1x4xf32>
    %209 = vector.extract_strided_slice %207 {offsets = [1, 0], sizes = [1, 4], strides = [1, 1]} : vector<2x4xf32> to vector<1x4xf32>
    %210 = arith.mulf %208, %208 : vector<1x4xf32>
    %211 = arith.subf %209, %210 : vector<1x4xf32>
    %cst_162 = arith.constant 9.99999974E-6 : f32
    %212 = vector.broadcast %cst_162 : f32 to vector<1x4xf32>
    %213 = arith.addf %211, %212 : vector<1x4xf32>
    %214 = math.rsqrt %213 : vector<1x4xf32>
    %215 = tpu.concatenate %208, %214 in 0 : vector<1x4xf32>, vector<1x4xf32> -> vector<2x4xf32>
    %cst_163 = arith.constant dense<0.000000e+00> : vector<2x16xf32>
    %216 = tpu.matmul %215, %11, %cst_163 {dimension_numbers = #tpu.dot_dimension_numbers<[1], [0], [0], [1], [0, 0, 1, 1], [], []>} : vector<2x4xf32>, vector<4x16xf32>, vector<2x16xf32> -> vector<2x16xf32>
    %217 = vector.extract_strided_slice %216 {offsets = [1, 0], sizes = [1, 16], strides = [1, 1]} : vector<2x16xf32> to vector<1x16xf32>
    %218 = arith.mulf %217, %197 : vector<1x16xf32>
    %219 = vector.extract_strided_slice %216 {offsets = [0, 0], sizes = [1, 16], strides = [1, 1]} : vector<2x16xf32> to vector<1x16xf32>
    %220 = arith.mulf %219, %218 : vector<1x16xf32>
    %221 = arith.subf %198, %220 : vector<1x16xf32>
    %222 = vector.broadcast %218 : vector<1x16xf32> to vector<64x16xf32>
    %223 = arith.mulf %196, %222 : vector<64x16xf32>
    %224 = vector.broadcast %221 : vector<1x16xf32> to vector<64x16xf32>
    %225 = arith.addf %223, %224 : vector<64x16xf32>
    %c0_164 = arith.constant 0 : index
    %c0_165 = arith.constant 0 : index
    %c0_166 = arith.constant 0 : index
    %226 = vector.load %arg1[%c0_164, %c0_165, %c0_166] : memref<2x64x16xbf16, #tpu.memory_space<vmem>>, vector<1x64x16xbf16>
    %227 = vector.shape_cast %226 : vector<1x64x16xbf16> to vector<64x16xbf16>
    %228 = arith.extf %227 : vector<64x16xbf16> to vector<64x16xf32>
    %229 = arith.addf %225, %228 : vector<64x16xf32>
    %cst_167 = arith.constant 0.000000e+00 : f32
    %230 = vector.broadcast %cst_167 : f32 to vector<64x16xf32>
    %231 = arith.maximumf %229, %230 : vector<64x16xf32>
    %232 = arith.truncf %231 : vector<64x16xf32> to vector<64x16xbf16>
    %c0_168 = arith.constant 0 : index
    %c0_169 = arith.constant 0 : index
    %c0_170 = arith.constant 0 : index
    %233 = vector.load %arg12[%c0_168, %c0_169, %c0_170] : memref<2x64x16xbf16, #tpu.memory_space<vmem>>, vector<1x64x16xbf16>
    %234 = vector.shape_cast %233 : vector<1x64x16xbf16> to vector<64x16xbf16>
    %235 = vector.shape_cast %232 : vector<64x16xbf16> to vector<1x64x16xbf16>
    tpu.vector_store %arg12[%c0_168, %c0_169, %c0_170], %235 {strides = array<i32>} : memref<2x64x16xbf16, #tpu.memory_space<vmem>>, vector<1x64x16xbf16>,
    %236 = vector.extract_strided_slice %195 {offsets = [91, 0], sizes = [64, 16], strides = [1, 1]} : vector<164x16xf32> to vector<64x16xf32>
    %c0_171 = arith.constant 0 : index
    %c0_172 = arith.constant 0 : index
    %237 = vector.load %arg10[%c0_171, %c0_172] : memref<1x16xf32, #tpu.memory_space<vmem>>, vector<1x16xf32>
    %c0_173 = arith.constant 0 : index
    %c0_174 = arith.constant 0 : index
    %238 = vector.load %arg11[%c0_173, %c0_174] : memref<1x16xf32, #tpu.memory_space<vmem>>, vector<1x16xf32>
    %cst_175 = arith.constant dense<0.000000e+00> : vector<16xf32>
    %239 = vector.multi_reduction <add>, %236, %cst_175 [0] : vector<64x16xf32> to vector<16xf32>
    %240 = vector.shape_cast %239 : vector<16xf32> to vector<1x16xf32>
    %241 = arith.mulf %236, %236 : vector<64x16xf32>
    %cst_176 = arith.constant dense<0.000000e+00> : vector<16xf32>
    %242 = vector.multi_reduction <add>, %241, %cst_176 [0] : vector<64x16xf32> to vector<16xf32>
    %243 = vector.shape_cast %242 : vector<16xf32> to vector<1x16xf32>
    %244 = tpu.concatenate %240, %243 in 0 : vector<1x16xf32>, vector<1x16xf32> -> vector<2x16xf32>
    %cst_177 = arith.constant dense<0.000000e+00> : vector<2x4xf32>
    %245 = tpu.matmul %244, %10, %cst_177 {dimension_numbers = #tpu.dot_dimension_numbers<[1], [0], [0], [1], [0, 0, 1, 1], [], []>} : vector<2x16xf32>, vector<16x4xf32>, vector<2x4xf32> -> vector<2x4xf32>
    %cst_178 = arith.constant 2.560000e+02 : f32
    %246 = vector.broadcast %cst_178 : f32 to vector<2x4xf32>
    %247 = arith.divf %245, %246 : vector<2x4xf32>
    %248 = vector.extract_strided_slice %247 {offsets = [0, 0], sizes = [1, 4], strides = [1, 1]} : vector<2x4xf32> to vector<1x4xf32>
    %249 = vector.extract_strided_slice %247 {offsets = [1, 0], sizes = [1, 4], strides = [1, 1]} : vector<2x4xf32> to vector<1x4xf32>
    %250 = arith.mulf %248, %248 : vector<1x4xf32>
    %251 = arith.subf %249, %250 : vector<1x4xf32>
    %cst_179 = arith.constant 9.99999974E-6 : f32
    %252 = vector.broadcast %cst_179 : f32 to vector<1x4xf32>
    %253 = arith.addf %251, %252 : vector<1x4xf32>
    %254 = math.rsqrt %253 : vector<1x4xf32>
    %255 = tpu.concatenate %248, %254 in 0 : vector<1x4xf32>, vector<1x4xf32> -> vector<2x4xf32>
    %cst_180 = arith.constant dense<0.000000e+00> : vector<2x16xf32>
    %256 = tpu.matmul %255, %11, %cst_180 {dimension_numbers = #tpu.dot_dimension_numbers<[1], [0], [0], [1], [0, 0, 1, 1], [], []>} : vector<2x4xf32>, vector<4x16xf32>, vector<2x16xf32> -> vector<2x16xf32>
    %257 = vector.extract_strided_slice %256 {offsets = [1, 0], sizes = [1, 16], strides = [1, 1]} : vector<2x16xf32> to vector<1x16xf32>
    %258 = arith.mulf %257, %237 : vector<1x16xf32>
    %259 = vector.extract_strided_slice %256 {offsets = [0, 0], sizes = [1, 16], strides = [1, 1]} : vector<2x16xf32> to vector<1x16xf32>
    %260 = arith.mulf %259, %258 : vector<1x16xf32>
    %261 = arith.subf %238, %260 : vector<1x16xf32>
    %262 = vector.broadcast %258 : vector<1x16xf32> to vector<64x16xf32>
    %263 = arith.mulf %236, %262 : vector<64x16xf32>
    %264 = vector.broadcast %261 : vector<1x16xf32> to vector<64x16xf32>
    %265 = arith.addf %263, %264 : vector<64x16xf32>
    %c1_181 = arith.constant 1 : index
    %c0_182 = arith.constant 0 : index
    %c0_183 = arith.constant 0 : index
    %266 = vector.load %arg1[%c1_181, %c0_182, %c0_183] : memref<2x64x16xbf16, #tpu.memory_space<vmem>>, vector<1x64x16xbf16>
    %267 = vector.shape_cast %266 : vector<1x64x16xbf16> to vector<64x16xbf16>
    %268 = arith.extf %267 : vector<64x16xbf16> to vector<64x16xf32>
    %269 = arith.addf %265, %268 : vector<64x16xf32>
    %cst_184 = arith.constant 0.000000e+00 : f32
    %270 = vector.broadcast %cst_184 : f32 to vector<64x16xf32>
    %271 = arith.maximumf %269, %270 : vector<64x16xf32>
    %272 = arith.truncf %271 : vector<64x16xf32> to vector<64x16xbf16>
    %c1_185 = arith.constant 1 : index
    %c0_186 = arith.constant 0 : index
    %c0_187 = arith.constant 0 : index
    %273 = vector.load %arg12[%c1_185, %c0_186, %c0_187] : memref<2x64x16xbf16, #tpu.memory_space<vmem>>, vector<1x64x16xbf16>
    %274 = vector.shape_cast %273 : vector<1x64x16xbf16> to vector<64x16xbf16>
    %275 = vector.shape_cast %272 : vector<64x16xbf16> to vector<1x64x16xbf16>
    tpu.vector_store %arg12[%c1_185, %c0_186, %c0_187], %275 {strides = array<i32>} : memref<2x64x16xbf16, #tpu.memory_space<vmem>>, vector<1x64x16xbf16>,
    return
  }
  func.func @transform_0(%arg0: i32) -> (i32, i32, i32) {
    %c0_i32 = arith.constant 0 : i32
    %c0_i32_0 = arith.constant 0 : i32
    %c0_i32_1 = arith.constant 0 : i32
    return %arg0, %c0_i32, %c0_i32_0 : i32, i32, i32
  }
  func.func @transform_1(%arg0: i32) -> (i32, i32, i32) {
    %c0_i32 = arith.constant 0 : i32
    %c0_i32_0 = arith.constant 0 : i32
    %c0_i32_1 = arith.constant 0 : i32
    %c0_i32_2 = arith.constant 0 : i32
    return %c0_i32, %c0_i32_0, %c0_i32_1 : i32, i32, i32
  }
  func.func @transform_2(%arg0: i32) -> (i32, i32, i32) {
    %c0_i32 = arith.constant 0 : i32
    %c0_i32_0 = arith.constant 0 : i32
    %c0_i32_1 = arith.constant 0 : i32
    %c0_i32_2 = arith.constant 0 : i32
    return %c0_i32, %c0_i32_0, %c0_i32_1 : i32, i32, i32
  }
  func.func @transform_3(%arg0: i32) -> (i32, i32) {
    %c0_i32 = arith.constant 0 : i32
    %c0_i32_0 = arith.constant 0 : i32
    %c0_i32_1 = arith.constant 0 : i32
    return %c0_i32, %c0_i32_0 : i32, i32
  }
  func.func @transform_4(%arg0: i32) -> (i32, i32) {
    %c0_i32 = arith.constant 0 : i32
    %c0_i32_0 = arith.constant 0 : i32
    %c0_i32_1 = arith.constant 0 : i32
    return %c0_i32, %c0_i32_0 : i32, i32
  }
  func.func @transform_5(%arg0: i32) -> (i32, i32) {
    %c0_i32 = arith.constant 0 : i32
    %c0_i32_0 = arith.constant 0 : i32
    %c0_i32_1 = arith.constant 0 : i32
    return %c0_i32, %c0_i32_0 : i32, i32
  }
  func.func @transform_6(%arg0: i32) -> (i32, i32) {
    %c0_i32 = arith.constant 0 : i32
    %c0_i32_0 = arith.constant 0 : i32
    %c0_i32_1 = arith.constant 0 : i32
    return %c0_i32, %c0_i32_0 : i32, i32
  }
  func.func @transform_7(%arg0: i32) -> (i32, i32) {
    %c0_i32 = arith.constant 0 : i32
    %c0_i32_0 = arith.constant 0 : i32
    %c0_i32_1 = arith.constant 0 : i32
    return %c0_i32, %c0_i32_0 : i32, i32
  }
  func.func @transform_8(%arg0: i32) -> (i32, i32) {
    %c0_i32 = arith.constant 0 : i32
    %c0_i32_0 = arith.constant 0 : i32
    %c0_i32_1 = arith.constant 0 : i32
    return %c0_i32, %c0_i32_0 : i32, i32
  }
  func.func @transform_9(%arg0: i32) -> (i32, i32) {
    %c0_i32 = arith.constant 0 : i32
    %c0_i32_0 = arith.constant 0 : i32
    %c0_i32_1 = arith.constant 0 : i32
    return %c0_i32, %c0_i32_0 : i32, i32
  }
  func.func @transform_10(%arg0: i32) -> (i32, i32) {
    %c0_i32 = arith.constant 0 : i32
    %c0_i32_0 = arith.constant 0 : i32
    %c0_i32_1 = arith.constant 0 : i32
    return %c0_i32, %c0_i32_0 : i32, i32
  }
  func.func @transform_11(%arg0: i32) -> (i32, i32, i32) {
    %c0_i32 = arith.constant 0 : i32
    %c0_i32_0 = arith.constant 0 : i32
    %c0_i32_1 = arith.constant 0 : i32
    return %arg0, %c0_i32, %c0_i32_0 : i32, i32, i32
  }
}

</mosaic_0001>

<llo_original>
// kernel: tpu_custom_call.1
$region0: #{tpu_custom_call.1}
  #allocation0 [shape = 'u32[]', space=smem, size = 0x4, offset = 0x4, fixed_abs, tag = 'smem constant byte address 0x4 - core index']
  #allocation1 [shape = 'u32[72,128]{1,0:T(1,128)}', space=vmem, size = 0x9000, scoped, tag = 'internal scratch']
  #allocation2 [shape = 'bf16[182,16]{1,0:T(8,128)(2,1)}', space=vmem, size = 0xb800, scoped, tag = 'scratch operand']
  #allocation3 [shape = 'bf16[182,16]{1,0:T(8,128)(2,1)}', space=vmem, size = 0xb800, scoped, tag = 'scratch operand']
  %s0 = inlined_call_operand.vmem [shape: bf16[2,64,16], index: 0, kind: input, shape index: {}]
  %s1 = inlined_call_operand.vmem [shape: bf16[9,16,16], index: 1, kind: input, shape index: {}]
  %s2 = inlined_call_operand.vmem [shape: bf16[9,16,16], index: 2, kind: input, shape index: {}]
  %s3 = inlined_call_operand.vmem [shape: f32[164,2], index: 3, kind: input, shape index: {}]
  %s4 = inlined_call_operand.vmem [shape: f32[164,2], index: 4, kind: input, shape index: {}]
  %s5 = inlined_call_operand.vmem [shape: f32[16,4], index: 5, kind: input, shape index: {}]
  %s6 = inlined_call_operand.vmem [shape: f32[4,16], index: 6, kind: input, shape index: {}]
  %s7 = inlined_call_operand.vmem [shape: f32[1,16], index: 7, kind: input, shape index: {}]
  %s8 = inlined_call_operand.vmem [shape: f32[1,16], index: 8, kind: input, shape index: {}]
  %s9 = inlined_call_operand.vmem [shape: f32[1,16], index: 9, kind: input, shape index: {}]
  %s10 = inlined_call_operand.vmem [shape: f32[1,16], index: 10, kind: input, shape index: {}]
  %s11 = inlined_call_operand.vmem [shape: bf16[2,64,16], index: 11, kind: output, shape index: {}]
  %s12 = sld [smem:[#allocation0]]
  $region54: #{tpu_custom_call.1} parent=0
    _
  %s14 = ssub.s32 1, %s12
  %s15 = scalar_select 0, %s14, %s12
  // Predicated region
  $region2: #{tpu_custom_call.1} parent=0 // pred_check
    _
  $region3: #{tpu_custom_call.1} parent=0 // pred_check_branch
    %17 = sbr.rel (0) target = $region5
  $region4: #{tpu_custom_call.1} parent=0 // pred_region
    _
  $region5: #{tpu_custom_call.1} parent=0 // pred_fallthru
    _
  // Predicated region
  $region6: #{tpu_custom_call.1} parent=0 // pred_check
    _
  $region7: #{tpu_custom_call.1} parent=0 // pred_check_branch
    %19 = sbr.rel (0) target = $region9
  $region8: #{tpu_custom_call.1} parent=0 // pred_region
    _
  $region9: #{tpu_custom_call.1} parent=0 // pred_fallthru
    _
  // Predicated region
  $region10: #{tpu_custom_call.1} parent=0 // pred_check
    _
  $region11: #{tpu_custom_call.1} parent=0 // pred_check_branch
    %21 = sbr.rel (0) target = $region13
  $region12: #{tpu_custom_call.1} parent=0 // pred_region
    _
  $region13: #{tpu_custom_call.1} parent=0 // pred_fallthru
    _
  // Predicated region
  $region14: #{tpu_custom_call.1} parent=0 // pred_check
    _
  $region15: #{tpu_custom_call.1} parent=0 // pred_check_branch
    %23 = sbr.rel (0) target = $region17
  $region16: #{tpu_custom_call.1} parent=0 // pred_region
    _
  $region17: #{tpu_custom_call.1} parent=0 // pred_fallthru
    _
  // Predicated region
  $region18: #{tpu_custom_call.1} parent=0 // pred_check
    _
  $region19: #{tpu_custom_call.1} parent=0 // pred_check_branch
    %25 = sbr.rel (0) target = $region21
  $region20: #{tpu_custom_call.1} parent=0 // pred_region
    _
  $region21: #{tpu_custom_call.1} parent=0 // pred_fallthru
    _
  // Predicated region
  $region22: #{tpu_custom_call.1} parent=0 // pred_check
    _
  $region23: #{tpu_custom_call.1} parent=0 // pred_check_branch
    %27 = sbr.rel (0) target = $region25
  $region24: #{tpu_custom_call.1} parent=0 // pred_region
    _
  $region25: #{tpu_custom_call.1} parent=0 // pred_fallthru
    _
  // Predicated region
  $region26: #{tpu_custom_call.1} parent=0 // pred_check
    _
  $region27: #{tpu_custom_call.1} parent=0 // pred_check_branch
    %29 = sbr.rel (0) target = $region29
  $region28: #{tpu_custom_call.1} parent=0 // pred_region
    _
  $region29: #{tpu_custom_call.1} parent=0 // pred_fallthru
    _
  // Predicated region
  $region30: #{tpu_custom_call.1} parent=0 // pred_check
    _
  $region31: #{tpu_custom_call.1} parent=0 // pred_check_branch
    %31 = sbr.rel (0) target = $region33
  $region32: #{tpu_custom_call.1} parent=0 // pred_region
    _
  $region33: #{tpu_custom_call.1} parent=0 // pred_fallthru
    _
  // Predicated region
  $region34: #{tpu_custom_call.1} parent=0 // pred_check
    _
  $region35: #{tpu_custom_call.1} parent=0 // pred_check_branch
    %33 = sbr.rel (0) target = $region37
  $region36: #{tpu_custom_call.1} parent=0 // pred_region
    _
  $region37: #{tpu_custom_call.1} parent=0 // pred_fallthru
    _
  // Predicated region
  $region38: #{tpu_custom_call.1} parent=0 // pred_check
    _
  $region39: #{tpu_custom_call.1} parent=0 // pred_check_branch
    %35 = sbr.rel (0) target = $region41
  $region40: #{tpu_custom_call.1} parent=0 // pred_region
    _
  $region41: #{tpu_custom_call.1} parent=0 // pred_fallthru
    _
  // Predicated region
  $region42: #{tpu_custom_call.1} parent=0 // pred_check
    _
  $region43: #{tpu_custom_call.1} parent=0 // pred_check_branch
    %37 = sbr.rel (0) target = $region45
  $region44: #{tpu_custom_call.1} parent=0 // pred_region
    _
  $region45: #{tpu_custom_call.1} parent=0 // pred_fallthru
    _
  %vm39 = vcmask 125952
  %40 = vst.msk [vmem:[#allocation2] sm:$0xf] %vm39, 0
  %41 = vst.msk [vmem:[#allocation2 + $0x4] sm:$0xf] %vm39, 0
  %42 = vst.msk [vmem:[#allocation2 + $0x8] sm:$0xf] %vm39, 0
  %43 = vst.msk [vmem:[#allocation2 + $0xc] sm:$0xf] %vm39, 0
  %44 = vst.msk [vmem:[#allocation2 + $0x10] sm:$0xf] %vm39, 0
  %45 = vst.msk [vmem:[#allocation2 + $0x14] sm:$0xf] %vm39, 0
  %46 = vst.msk [vmem:[#allocation2 + $0x18] sm:$0xf] %vm39, 0
  %47 = vst.msk [vmem:[#allocation2 + $0x1c] sm:$0xf] %vm39, 0
  %48 = vst.msk [vmem:[#allocation2 + $0x20] sm:$0xf] %vm39, 0
  %49 = vst.msk [vmem:[#allocation2 + $0x24] sm:$0xf] %vm39, 0
  %50 = vst.msk [vmem:[#allocation2 + $0x28] sm:$0xf] %vm39, 0
  %51 = vst.msk [vmem:[#allocation2 + $0x2c] sm:$0xf] %vm39, 0
  %52 = vst.msk [vmem:[#allocation2 + $0x30] sm:$0xf] %vm39, 0
  %53 = vst.msk [vmem:[#allocation2 + $0x34] sm:$0xf] %vm39, 0
  %54 = vst.msk [vmem:[#allocation2 + $0x38] sm:$0xf] %vm39, 0
  %55 = vst.msk [vmem:[#allocation2 + $0x3c] sm:$0xf] %vm39, 0
  %56 = vst.msk [vmem:[#allocation2 + $0x40] sm:$0xf] %vm39, 0
  %57 = vst.msk [vmem:[#allocation2 + $0x44] sm:$0xf] %vm39, 0
  %58 = vst.msk [vmem:[#allocation2 + $0x48] sm:$0xf] %vm39, 0
  %59 = vst.msk [vmem:[#allocation2 + $0x4c] sm:$0xf] %vm39, 0
  %60 = vst.msk [vmem:[#allocation2 + $0x50] sm:$0xf] %vm39, 0
  %61 = vst.msk [vmem:[#allocation2 + $0x54] sm:$0xf] %vm39, 0
  %vm62 = vcmask 124928
  %63 = vst.msk [vmem:[#allocation2 + $0x58] sm:$0x7] %vm62, 0
  %64 = vst.msk [vmem:[#allocation3] sm:$0xf] %vm39, 0
  %65 = vst.msk [vmem:[#allocation3 + $0x4] sm:$0xf] %vm39, 0
  %66 = vst.msk [vmem:[#allocation3 + $0x8] sm:$0xf] %vm39, 0
  %67 = vst.msk [vmem:[#allocation3 + $0xc] sm:$0xf] %vm39, 0
  %68 = vst.msk [vmem:[#allocation3 + $0x10] sm:$0xf] %vm39, 0
  %69 = vst.msk [vmem:[#allocation3 + $0x14] sm:$0xf] %vm39, 0
  %70 = vst.msk [vmem:[#allocation3 + $0x18] sm:$0xf] %vm39, 0
  %71 = vst.msk [vmem:[#allocation3 + $0x1c] sm:$0xf] %vm39, 0
  %72 = vst.msk [vmem:[#allocation3 + $0x20] sm:$0xf] %vm39, 0
  %73 = vst.msk [vmem:[#allocation3 + $0x24] sm:$0xf] %vm39, 0
  %74 = vst.msk [vmem:[#allocation3 + $0x28] sm:$0xf] %vm39, 0
  %75 = vst.msk [vmem:[#allocation3 + $0x2c] sm:$0xf] %vm39, 0
  %76 = vst.msk [vmem:[#allocation3 + $0x30] sm:$0xf] %vm39, 0
  %77 = vst.msk [vmem:[#allocation3 + $0x34] sm:$0xf] %vm39, 0
  %78 = vst.msk [vmem:[#allocation3 + $0x38] sm:$0xf] %vm39, 0
  %79 = vst.msk [vmem:[#allocation3 + $0x3c] sm:$0xf] %vm39, 0
  %80 = vst.msk [vmem:[#allocation3 + $0x40] sm:$0xf] %vm39, 0
  %81 = vst.msk [vmem:[#allocation3 + $0x44] sm:$0xf] %vm39, 0
  %82 = vst.msk [vmem:[#allocation3 + $0x48] sm:$0xf] %vm39, 0
  %83 = vst.msk [vmem:[#allocation3 + $0x4c] sm:$0xf] %vm39, 0
  %84 = vst.msk [vmem:[#allocation3 + $0x50] sm:$0xf] %vm39, 0
  %85 = vst.msk [vmem:[#allocation3 + $0x54] sm:$0xf] %vm39, 0
  %86 = vst.msk [vmem:[#allocation3 + $0x58] sm:$0x7] %vm62, 0
  %v87 = vld [vmem:[%s0] sm:$0xf]
  %v88 = vld [vmem:[%s0 + $0x4] sm:$0xf]
  %v89 = vld [vmem:[%s0 + $0x8] sm:$0xf]
  %v90 = vld [vmem:[%s0 + $0xc] sm:$0xf]
  %v91 = vld [vmem:[%s0 + $0x10] sm:$0xf]
  %v92 = vld [vmem:[%s0 + $0x14] sm:$0xf]
  %v93 = vld [vmem:[%s0 + $0x18] sm:$0xf]
  %v94 = vld [vmem:[%s0 + $0x1c] sm:$0xf]
  %vm103 = vcmask 1040384
  %vm104 = vcmask 1044484
  %vm105 = vmor %vm103, %vm104
  %v106 = vrot.slane %v87, 7
  %v107 = vrot.slane %v106, 4
  %v108 = vrot.slane %v88, 7
  %v109 = vsel %vm105, %v107, %v108
  %v110 = vrot.slane %v108, 4
  %v111 = vrot.slane %v89, 7
  %v112 = vsel %vm105, %v110, %v111
  %v113 = vrot.slane %v111, 4
  %v114 = vrot.slane %v90, 7
  %v115 = vsel %vm105, %v113, %v114
  %v116 = vrot.slane %v114, 4
  %v117 = vrot.slane %v91, 7
  %v118 = vsel %vm105, %v116, %v117
  %v119 = vrot.slane %v117, 4
  %v120 = vrot.slane %v92, 7
  %v121 = vsel %vm105, %v119, %v120
  %v122 = vrot.slane %v120, 4
  %v123 = vrot.slane %v93, 7
  %v124 = vsel %vm105, %v122, %v123
  %v125 = vrot.slane %v123, 4
  %v126 = vrot.slane %v94, 7
  %v127 = vsel %vm105, %v125, %v126
  %v128 = vrot.slane %v126, 4
  %vm138 = vcmask 125953
  %139 = vst.msk [vmem:[#allocation2 + $0x8] sm:$0xe] %vm138, %v106
  %140 = vst.msk [vmem:[#allocation2 + $0xc] sm:$0xf] %vm39, %v109
  %141 = vst.msk [vmem:[#allocation2 + $0x10] sm:$0xf] %vm39, %v112
  %142 = vst.msk [vmem:[#allocation2 + $0x14] sm:$0xf] %vm39, %v115
  %143 = vst.msk [vmem:[#allocation2 + $0x18] sm:$0xf] %vm39, %v118
  %144 = vst.msk [vmem:[#allocation2 + $0x1c] sm:$0xf] %vm39, %v121
  %145 = vst.msk [vmem:[#allocation2 + $0x20] sm:$0xf] %vm39, %v124
  %146 = vst.msk [vmem:[#allocation2 + $0x24] sm:$0xf] %vm39, %v127
  %vm147 = vcmask 122880
  %148 = vst.msk [vmem:[#allocation2 + $0x28] sm:$0x1] %vm147, %v128
  %s149 = scalar_lea.vmem %s0, 32
  %v150 = vld [vmem:[%s149] sm:$0xf]
  %v151 = vld [vmem:[%s149 + $0x4] sm:$0xf]
  %v152 = vld [vmem:[%s149 + $0x8] sm:$0xf]
  %v153 = vld [vmem:[%s149 + $0xc] sm:$0xf]
  %v154 = vld [vmem:[%s149 + $0x10] sm:$0xf]
  %v155 = vld [vmem:[%s149 + $0x14] sm:$0xf]
  %v156 = vld [vmem:[%s149 + $0x18] sm:$0xf]
  %v157 = vld [vmem:[%s149 + $0x1c] sm:$0xf]
  %vm166 = vcmask 1041408
  %vm167 = vcmask 1045508
  %vm168 = vmor %vm166, %vm167
  %v169 = vrot.slane %v150, 6
  %v170 = vrot.slane %v169, 4
  %v171 = vrot.slane %v151, 6
  %v172 = vsel %vm168, %v170, %v171
  %v173 = vrot.slane %v171, 4
  %v174 = vrot.slane %v152, 6
  %v175 = vsel %vm168, %v173, %v174
  %v176 = vrot.slane %v174, 4
  %v177 = vrot.slane %v153, 6
  %v178 = vsel %vm168, %v176, %v177
  %v179 = vrot.slane %v177, 4
  %v180 = vrot.slane %v154, 6
  %v181 = vsel %vm168, %v179, %v180
  %v182 = vrot.slane %v180, 4
  %v183 = vrot.slane %v155, 6
  %v184 = vsel %vm168, %v182, %v183
  %v185 = vrot.slane %v183, 4
  %v186 = vrot.slane %v156, 6
  %v187 = vsel %vm168, %v185, %v186
  %v188 = vrot.slane %v186, 4
  %v189 = vrot.slane %v157, 6
  %v190 = vsel %vm168, %v188, %v189
  %v191 = vrot.slane %v189, 4
  %vm201 = vcmask 125954
  %202 = vst.msk [vmem:[#allocation2 + $0x30] sm:$0xc] %vm201, %v169
  %203 = vst.msk [vmem:[#allocation2 + $0x34] sm:$0xf] %vm39, %v172
  %204 = vst.msk [vmem:[#allocation2 + $0x38] sm:$0xf] %vm39, %v175
  %205 = vst.msk [vmem:[#allocation2 + $0x3c] sm:$0xf] %vm39, %v178
  %206 = vst.msk [vmem:[#allocation2 + $0x40] sm:$0xf] %vm39, %v181
  %207 = vst.msk [vmem:[#allocation2 + $0x44] sm:$0xf] %vm39, %v184
  %208 = vst.msk [vmem:[#allocation2 + $0x48] sm:$0xf] %vm39, %v187
  %209 = vst.msk [vmem:[#allocation2 + $0x4c] sm:$0xf] %vm39, %v190
  %vm210 = vcmask 123904
  %211 = vst.msk [vmem:[#allocation2 + $0x50] sm:$0x3] %vm210, %v191
  %v212 = vld [vmem:[%s5] sm:$0xff]
  %v213 = vld [vmem:[%s5 + $0x8] sm:$0xff]
  %v214 = vld [vmem:[%s6] sm:$0xf]
  %v215 = vld [vmem:[#allocation2] sm:$0xf]
  %v216 = vld [vmem:[#allocation2 + $0x4] sm:$0xf]
  %v217 = vld [vmem:[#allocation2 + $0x8] sm:$0xf]
  %v218 = vld [vmem:[#allocation2 + $0xc] sm:$0xf]
  %v219 = vld [vmem:[#allocation2 + $0x10] sm:$0xf]
  %v220 = vld [vmem:[#allocation2 + $0x14] sm:$0xf]
  %v221 = vld [vmem:[#allocation2 + $0x18] sm:$0xf]
  %v222 = vld [vmem:[#allocation2 + $0x1c] sm:$0xf]
  %v223 = vld [vmem:[#allocation2 + $0x20] sm:$0xf]
  %v224 = vld [vmem:[#allocation2 + $0x24] sm:$0xf]
  %v225 = vld [vmem:[#allocation2 + $0x28] sm:$0xf]
  %v226 = vld [vmem:[#allocation2 + $0x2c] sm:$0xf]
  %v227 = vld [vmem:[#allocation2 + $0x30] sm:$0xf]
  %v228 = vld [vmem:[#allocation2 + $0x34] sm:$0xf]
  %v229 = vld [vmem:[#allocation2 + $0x38] sm:$0xf]
  %v230 = vld [vmem:[#allocation2 + $0x3c] sm:$0xf]
  %v231 = vld [vmem:[#allocation2 + $0x40] sm:$0xf]
  %v232 = vld [vmem:[#allocation2 + $0x44] sm:$0xf]
  %v233 = vld [vmem:[#allocation2 + $0x48] sm:$0xf]
  %v234 = vld [vmem:[#allocation2 + $0x4c] sm:$0xf]
  %v235 = vld [vmem:[#allocation2 + $0x50] sm:$0x3]
  %v236 = vld [vmem:[%s1] sm:$0xf]
  %v237 = vld [vmem:[%s1 + $0x4] sm:$0xf]
  %v238 = vld [vmem:[#allocation2 + $0x50] sm:$0xf]
  %v239 = vld [vmem:[#allocation2 + $0x54] sm:$0x3]
  %s240 = scalar_lea.vmem %s1, 24
  %v241 = vld [vmem:[%s240] sm:$0xf]
  %v242 = vld [vmem:[%s240 + $0x4] sm:$0xf]
  %v264 = vunpack.c.l.b16 %v216
  %v265 = vunpack.c.l.b16 %v217
  %v266 = vunpack.c.l.b16 %v218
  %v267 = vunpack.c.l.b16 %v219
  %v268 = vunpack.c.l.b16 %v220
  %v269 = vunpack.c.l.b16 %v221
  %v270 = vunpack.c.l.b16 %v222
  %v271 = vunpack.c.l.b16 %v223
  %v272 = vunpack.c.l.b16 %v224
  %v273 = vunpack.c.l.b16 %v225
  %v274 = vunpack.c.l.b16 %v226
  %v275 = vunpack.c.l.b16 %v227
  %v276 = vunpack.c.l.b16 %v228
  %v277 = vunpack.c.l.b16 %v229
  %v278 = vunpack.c.l.b16 %v230
  %v279 = vunpack.c.l.b16 %v231
  %v280 = vunpack.c.l.b16 %v232
  %v281 = vunpack.c.l.b16 %v233
  %v282 = vunpack.c.l.b16 %v234
  %v283 = vunpack.c.l.b16 %v238
  %v284 = vunpack.c.l.b16 %v239
  %v285 = vpack.c.b16 %v265, %v264
  %v286 = vpack.c.b16 %v267, %v266
  %v287 = vpack.c.b16 %v269, %v268
  %v288 = vpack.c.b16 %v271, %v270
  %v289 = vpack.c.b16 %v273, %v272
  %v290 = vpack.c.b16 %v275, %v274
  %v291 = vpack.c.b16 %v277, %v276
  %v292 = vpack.c.b16 %v279, %v278
  %v293 = vpack.c.b16 %v281, %v280
  %v294 = vpack.c.b16 %v283, %v282
  %v295 = vpack.c.b16 %v284, %v284
  %v298 = vunpack.c.l.b16 %v241
  %v299 = vunpack.c.l.b16 %v242
  %v300 = vpack.c.b16 %v299, %v298
  %vm302 = vcmask 130048
  %v304 = vsel %vm302, %v285, 0
  %v307 = vsel %vm302, %v286, 0
  %v310 = vsel %vm302, %v287, 0
  %v313 = vsel %vm302, %v288, 0
  %v316 = vsel %vm302, %v289, 0
  %v319 = vsel %vm302, %v290, 0
  %v322 = vsel %vm302, %v291, 0
  %v325 = vsel %vm302, %v292, 0
  %v328 = vsel %vm302, %v293, 0
  %v331 = vsel %vm302, %v294, 0
  %v334 = vsel %vm302, %v295, 0
  %336 = vmatpush.bf16.msra.mxu0 0
  %337 = vmatpush.bf16.msra.mxu0 0
  %338 = vmatpush.bf16.msra.mxu0 0
  %339 = vmatpush.bf16.msra.mxu0 0
  %340 = vmatpush.bf16.msra.mxu0 0
  %341 = vmatpush.bf16.msra.mxu0 0
  %342 = vmatpush.bf16.msra.mxu0 0
  %343 = vmatpush.bf16.msra.mxu0 %v300
  %344 = vmatmul.bf16.gmra.mxu0 %v304
  %v345 = vpop.f32.mrf.mxu0
  %v346 = vpop.f32.mrf.mxu0
  %v347 = vadd.f32 0.0, %v346
  %348 = vmatmul.bf16.gmra.mxu0 %v307
  %v349 = vpop.f32.mrf.mxu0
  %v350 = vadd.f32 0.0, %v349
  %v351 = vpop.f32.mrf.mxu0
  %v352 = vadd.f32 0.0, %v351
  %353 = vmatmul.bf16.gmra.mxu0 %v310
  %v354 = vpop.f32.mrf.mxu0
  %v355 = vadd.f32 0.0, %v354
  %v356 = vpop.f32.mrf.mxu0
  %v357 = vadd.f32 0.0, %v356
  %358 = vmatmul.bf16.gmra.mxu0 %v313
  %v359 = vpop.f32.mrf.mxu0
  %v360 = vadd.f32 0.0, %v359
  %v361 = vpop.f32.mrf.mxu0
  %v362 = vadd.f32 0.0, %v361
  %363 = vmatmul.bf16.gmra.mxu0 %v316
  %v364 = vpop.f32.mrf.mxu0
  %v365 = vadd.f32 0.0, %v364
  %v366 = vpop.f32.mrf.mxu0
  %v367 = vadd.f32 0.0, %v366
  %368 = vmatmul.bf16.gmra.mxu0 %v319
  %v369 = vpop.f32.mrf.mxu0
  %v370 = vpop.f32.mrf.mxu0
  %v371 = vadd.f32 0.0, %v370
  %372 = vmatmul.bf16.gmra.mxu0 %v322
  %v373 = vpop.f32.mrf.mxu0
  %v374 = vadd.f32 0.0, %v373
  %v375 = vpop.f32.mrf.mxu0
  %v376 = vadd.f32 0.0, %v375
  %377 = vmatmul.bf16.gmra.mxu0 %v325
  %v378 = vpop.f32.mrf.mxu0
  %v379 = vadd.f32 0.0, %v378
  %v380 = vpop.f32.mrf.mxu0
  %v381 = vadd.f32 0.0, %v380
  %382 = vmatmul.bf16.gmra.mxu0 %v328
  %v383 = vpop.f32.mrf.mxu0
  %v384 = vadd.f32 0.0, %v383
  %v385 = vpop.f32.mrf.mxu0
  %v386 = vadd.f32 0.0, %v385
  %387 = vmatmul.bf16.gmra.mxu0 %v331
  %v388 = vpop.f32.mrf.mxu0
  %v389 = vadd.f32 0.0, %v388
  %v390 = vpop.f32.mrf.mxu0
  %v391 = vadd.f32 0.0, %v390
  %392 = vmatmul.bf16.gmra.mxu0 %v334
  %v393 = vpop.f32.mrf.mxu0
  %v394 = vpop.f32.mrf.mxu0
  %395 = vdwg.mxu0
  %v398 = vunpack.c.l.b16 %v215
  %v399 = vunpack.c.l.b16 %v235
  %v400 = vpack.c.b16 %v264, %v398
  %v401 = vpack.c.b16 %v266, %v265
  %v402 = vpack.c.b16 %v268, %v267
  %v403 = vpack.c.b16 %v270, %v269
  %v404 = vpack.c.b16 %v272, %v271
  %v405 = vpack.c.b16 %v274, %v273
  %v406 = vpack.c.b16 %v276, %v275
  %v407 = vpack.c.b16 %v278, %v277
  %v408 = vpack.c.b16 %v280, %v279
  %v409 = vpack.c.b16 %v282, %v281
  %v410 = vpack.c.b16 %v399, %v399
  %v413 = vunpack.c.l.b16 %v236
  %v414 = vunpack.c.l.b16 %v237
  %v415 = vpack.c.b16 %v414, %v413
  %v418 = vsel %vm302, %v400, 0
  %v421 = vsel %vm302, %v401, 0
  %v424 = vsel %vm302, %v402, 0
  %v427 = vsel %vm302, %v403, 0
  %v430 = vsel %vm302, %v404, 0
  %v433 = vsel %vm302, %v405, 0
  %v436 = vsel %vm302, %v406, 0
  %v439 = vsel %vm302, %v407, 0
  %v442 = vsel %vm302, %v408, 0
  %v445 = vsel %vm302, %v409, 0
  %v448 = vsel %vm302, %v410, 0
  %450 = vmatpush.bf16.msra.mxu0 0
  %451 = vmatpush.bf16.msra.mxu0 0
  %452 = vmatpush.bf16.msra.mxu0 0
  %453 = vmatpush.bf16.msra.mxu0 0
  %454 = vmatpush.bf16.msra.mxu0 0
  %455 = vmatpush.bf16.msra.mxu0 0
  %456 = vmatpush.bf16.msra.mxu0 0
  %457 = vmatpush.bf16.msra.mxu0 %v415
  %458 = vmatmul.bf16.gmra.mxu0 %v418
  %v459 = vpop.f32.mrf.mxu0
  %v460 = vpop.f32.mrf.mxu0
  %v461 = vadd.f32 %v347, %v460
  %462 = vmatmul.bf16.gmra.mxu0 %v421
  %v463 = vpop.f32.mrf.mxu0
  %v464 = vadd.f32 %v350, %v463
  %v465 = vpop.f32.mrf.mxu0
  %v466 = vadd.f32 %v352, %v465
  %467 = vmatmul.bf16.gmra.mxu0 %v424
  %v468 = vpop.f32.mrf.mxu0
  %v469 = vadd.f32 %v355, %v468
  %v470 = vpop.f32.mrf.mxu0
  %v471 = vadd.f32 %v357, %v470
  %472 = vmatmul.bf16.gmra.mxu0 %v427
  %v473 = vpop.f32.mrf.mxu0
  %v474 = vadd.f32 %v360, %v473
  %v475 = vpop.f32.mrf.mxu0
  %v476 = vadd.f32 %v362, %v475
  %477 = vmatmul.bf16.gmra.mxu0 %v430
  %v478 = vpop.f32.mrf.mxu0
  %v479 = vadd.f32 %v365, %v478
  %v480 = vpop.f32.mrf.mxu0
  %v481 = vadd.f32 %v367, %v480
  %482 = vmatmul.bf16.gmra.mxu0 %v433
  %v483 = vpop.f32.mrf.mxu0
  %v484 = vpop.f32.mrf.mxu0
  %v485 = vadd.f32 %v371, %v484
  %486 = vmatmul.bf16.gmra.mxu0 %v436
  %v487 = vpop.f32.mrf.mxu0
  %v488 = vadd.f32 %v374, %v487
  %v489 = vpop.f32.mrf.mxu0
  %v490 = vadd.f32 %v376, %v489
  %491 = vmatmul.bf16.gmra.mxu0 %v439
  %v492 = vpop.f32.mrf.mxu0
  %v493 = vadd.f32 %v379, %v492
  %v494 = vpop.f32.mrf.mxu0
  %v495 = vadd.f32 %v381, %v494
  %496 = vmatmul.bf16.gmra.mxu0 %v442
  %v497 = vpop.f32.mrf.mxu0
  %v498 = vadd.f32 %v384, %v497
  %v499 = vpop.f32.mrf.mxu0
  %v500 = vadd.f32 %v386, %v499
  %501 = vmatmul.bf16.gmra.mxu0 %v445
  %v502 = vpop.f32.mrf.mxu0
  %v503 = vadd.f32 %v389, %v502
  %v504 = vpop.f32.mrf.mxu0
  %v505 = vadd.f32 %v391, %v504
  %506 = vmatmul.bf16.gmra.mxu0 %v448
  %v507 = vpop.f32.mrf.mxu0
  %v508 = vpop.f32.mrf.mxu0
  %509 = vdwg.mxu0
  %v510 = vld [vmem:[#allocation2 + $0x8] sm:$0xf]
  %v511 = vld [vmem:[#allocation2 + $0xc] sm:$0xf]
  %v512 = vld [vmem:[#allocation2 + $0x10] sm:$0xf]
  %v513 = vld [vmem:[#allocation2 + $0x14] sm:$0xf]
  %v514 = vld [vmem:[#allocation2 + $0x18] sm:$0xf]
  %v515 = vld [vmem:[#allocation2 + $0x1c] sm:$0xf]
  %v516 = vld [vmem:[#allocation2 + $0x20] sm:$0xf]
  %v517 = vld [vmem:[#allocation2 + $0x24] sm:$0xf]
  %v518 = vld [vmem:[#allocation2 + $0x28] sm:$0xf]
  %v519 = vld [vmem:[#allocation2 + $0x2c] sm:$0xf]
  %v520 = vld [vmem:[#allocation2 + $0x30] sm:$0xf]
  %v521 = vld [vmem:[#allocation2 + $0x34] sm:$0xf]
  %v522 = vld [vmem:[#allocation2 + $0x38] sm:$0xf]
  %v523 = vld [vmem:[#allocation2 + $0x3c] sm:$0xf]
  %v524 = vld [vmem:[#allocation2 + $0x40] sm:$0xf]
  %v525 = vld [vmem:[#allocation2 + $0x44] sm:$0xf]
  %v526 = vld [vmem:[#allocation2 + $0x48] sm:$0xf]
  %v527 = vld [vmem:[#allocation2 + $0x4c] sm:$0xf]
  %v528 = vld [vmem:[#allocation2 + $0x50] sm:$0xf]
  %v529 = vld [vmem:[#allocation2 + $0x54] sm:$0xf]
  %v530 = vld [vmem:[#allocation2 + $0x58] sm:$0x3]
  %s531 = scalar_lea.vmem %s1, 48
  %v532 = vld [vmem:[%s531] sm:$0xf]
  %v533 = vld [vmem:[%s531 + $0x4] sm:$0xf]
  %v555 = vunpack.c.l.b16 %v510
  %v556 = vunpack.c.l.b16 %v511
  %v557 = vunpack.c.l.b16 %v512
  %v558 = vunpack.c.l.b16 %v513
  %v559 = vunpack.c.l.b16 %v514
  %v560 = vunpack.c.l.b16 %v515
  %v561 = vunpack.c.l.b16 %v516
  %v562 = vunpack.c.l.b16 %v517
  %v563 = vunpack.c.l.b16 %v518
  %v564 = vunpack.c.l.b16 %v519
  %v565 = vunpack.c.l.b16 %v520
  %v566 = vunpack.c.l.b16 %v521
  %v567 = vunpack.c.l.b16 %v522
  %v568 = vunpack.c.l.b16 %v523
  %v569 = vunpack.c.l.b16 %v524
  %v570 = vunpack.c.l.b16 %v525
  %v571 = vunpack.c.l.b16 %v526
  %v572 = vunpack.c.l.b16 %v527
  %v573 = vunpack.c.l.b16 %v528
  %v574 = vunpack.c.l.b16 %v529
  %v575 = vunpack.c.l.b16 %v530
  %v576 = vpack.c.b16 %v556, %v555
  %v577 = vpack.c.b16 %v558, %v557
  %v578 = vpack.c.b16 %v560, %v559
  %v579 = vpack.c.b16 %v562, %v561
  %v580 = vpack.c.b16 %v564, %v563
  %v581 = vpack.c.b16 %v566, %v565
  %v582 = vpack.c.b16 %v568, %v567
  %v583 = vpack.c.b16 %v570, %v569
  %v584 = vpack.c.b16 %v572, %v571
  %v585 = vpack.c.b16 %v574, %v573
  %v586 = vpack.c.b16 %v575, %v575
  %v589 = vunpack.c.l.b16 %v532
  %v590 = vunpack.c.l.b16 %v533
  %v591 = vpack.c.b16 %v590, %v589
  %v594 = vsel %vm302, %v576, 0
  %v597 = vsel %vm302, %v577, 0
  %v600 = vsel %vm302, %v578, 0
  %v603 = vsel %vm302, %v579, 0
  %v606 = vsel %vm302, %v580, 0
  %v609 = vsel %vm302, %v581, 0
  %v612 = vsel %vm302, %v582, 0
  %v615 = vsel %vm302, %v583, 0
  %v618 = vsel %vm302, %v584, 0
  %v621 = vsel %vm302, %v585, 0
  %v624 = vsel %vm302, %v586, 0
  %626 = vmatpush.bf16.msra.mxu0 0
  %627 = vmatpush.bf16.msra.mxu0 0
  %628 = vmatpush.bf16.msra.mxu0 0
  %629 = vmatpush.bf16.msra.mxu0 0
  %630 = vmatpush.bf16.msra.mxu0 0
  %631 = vmatpush.bf16.msra.mxu0 0
  %632 = vmatpush.bf16.msra.mxu0 0
  %633 = vmatpush.bf16.msra.mxu0 %v591
  %634 = vmatmul.bf16.gmra.mxu0 %v594
  %v635 = vpop.f32.mrf.mxu0
  %v636 = vpop.f32.mrf.mxu0
  %v637 = vadd.f32 0.0, %v636
  %638 = vmatmul.bf16.gmra.mxu0 %v597
  %v639 = vpop.f32.mrf.mxu0
  %v640 = vadd.f32 0.0, %v639
  %v641 = vpop.f32.mrf.mxu0
  %v642 = vadd.f32 0.0, %v641
  %643 = vmatmul.bf16.gmra.mxu0 %v600
  %v644 = vpop.f32.mrf.mxu0
  %v645 = vadd.f32 0.0, %v644
  %v646 = vpop.f32.mrf.mxu0
  %v647 = vadd.f32 0.0, %v646
  %648 = vmatmul.bf16.gmra.mxu0 %v603
  %v649 = vpop.f32.mrf.mxu0
  %v650 = vadd.f32 0.0, %v649
  %v651 = vpop.f32.mrf.mxu0
  %v652 = vadd.f32 0.0, %v651
  %653 = vmatmul.bf16.gmra.mxu0 %v606
  %v654 = vpop.f32.mrf.mxu0
  %v655 = vadd.f32 0.0, %v654
  %v656 = vpop.f32.mrf.mxu0
  %v657 = vadd.f32 0.0, %v656
  %658 = vmatmul.bf16.gmra.mxu0 %v609
  %v659 = vpop.f32.mrf.mxu0
  %v660 = vpop.f32.mrf.mxu0
  %v661 = vadd.f32 0.0, %v660
  %662 = vmatmul.bf16.gmra.mxu0 %v612
  %v663 = vpop.f32.mrf.mxu0
  %v664 = vadd.f32 0.0, %v663
  %v665 = vpop.f32.mrf.mxu0
  %v666 = vadd.f32 0.0, %v665
  %667 = vmatmul.bf16.gmra.mxu0 %v615
  %v668 = vpop.f32.mrf.mxu0
  %v669 = vadd.f32 0.0, %v668
  %v670 = vpop.f32.mrf.mxu0
  %v671 = vadd.f32 0.0, %v670
  %672 = vmatmul.bf16.gmra.mxu0 %v618
  %v673 = vpop.f32.mrf.mxu0
  %v674 = vadd.f32 0.0, %v673
  %v675 = vpop.f32.mrf.mxu0
  %v676 = vadd.f32 0.0, %v675
  %677 = vmatmul.bf16.gmra.mxu0 %v621
  %v678 = vpop.f32.mrf.mxu0
  %v679 = vadd.f32 0.0, %v678
  %v680 = vpop.f32.mrf.mxu0
  %v681 = vadd.f32 0.0, %v680
  %682 = vmatmul.bf16.gmra.mxu0 %v624
  %v683 = vpop.f32.mrf.mxu0
  %v684 = vpop.f32.mrf.mxu0
  %685 = vdwg.mxu0
  %v686 = vadd.f32 %v461, %v637
  %v687 = vadd.f32 %v464, %v640
  %v688 = vadd.f32 %v466, %v642
  %v689 = vadd.f32 %v469, %v645
  %v690 = vadd.f32 %v471, %v647
  %v691 = vadd.f32 %v474, %v650
  %v692 = vadd.f32 %v476, %v652
  %v693 = vadd.f32 %v479, %v655
  %v694 = vadd.f32 %v481, %v657
  %v695 = vadd.f32 %v485, %v661
  %v696 = vadd.f32 %v488, %v664
  %v697 = vadd.f32 %v490, %v666
  %v698 = vadd.f32 %v493, %v669
  %v699 = vadd.f32 %v495, %v671
  %v700 = vadd.f32 %v498, %v674
  %v701 = vadd.f32 %v500, %v676
  %v702 = vadd.f32 %v503, %v679
  %v703 = vadd.f32 %v505, %v681
  %v704 = vld [vmem:[%s3 + $0x8] sm:$0xff]
  %v705 = vld [vmem:[%s3 + $0x10] sm:$0xff]
  %v706 = vld [vmem:[%s3 + $0x18] sm:$0xff]
  %v707 = vld [vmem:[%s3 + $0x20] sm:$0xff]
  %v708 = vld [vmem:[%s3 + $0x28] sm:$0xff]
  %v709 = vld [vmem:[%s3 + $0x30] sm:$0xff]
  %v710 = vld [vmem:[%s3 + $0x38] sm:$0xff]
  %v711 = vld [vmem:[%s3 + $0x40] sm:$0xff]
  %v712 = vld [vmem:[%s3 + $0x48] sm:$0xff]
  %v713 = vld [vmem:[%s3 + $0x58] sm:$0xff]
  %v714 = vld [vmem:[%s3 + $0x60] sm:$0xff]
  %v715 = vld [vmem:[%s3 + $0x68] sm:$0xff]
  %v716 = vld [vmem:[%s3 + $0x70] sm:$0xff]
  %v717 = vld [vmem:[%s3 + $0x78] sm:$0xff]
  %v718 = vld [vmem:[%s3 + $0x80] sm:$0xff]
  %v719 = vld [vmem:[%s3 + $0x88] sm:$0xff]
  %v720 = vld [vmem:[%s3 + $0x90] sm:$0xff]
  %v721 = vld [vmem:[%s3 + $0x98] sm:$0xff]
  %723 = vset.pattern.permute.xlu0 0
  %724 = vperm.xlu0 %723, %v704
  %v725 = vpop.permute.xlu0 %724
  %728 = vset.pattern.permute.xlu0 0
  %729 = vperm.xlu0 %728, %v705
  %v730 = vpop.permute.xlu0 %729
  %733 = vset.pattern.permute.xlu0 0
  %734 = vperm.xlu0 %733, %v706
  %v735 = vpop.permute.xlu0 %734
  %738 = vset.pattern.permute.xlu0 0
  %739 = vperm.xlu0 %738, %v707
  %v740 = vpop.permute.xlu0 %739
  %743 = vset.pattern.permute.xlu0 0
  %744 = vperm.xlu0 %743, %v708
  %v745 = vpop.permute.xlu0 %744
  %748 = vset.pattern.permute.xlu0 0
  %749 = vperm.xlu0 %748, %v709
  %v750 = vpop.permute.xlu0 %749
  %753 = vset.pattern.permute.xlu0 0
  %754 = vperm.xlu0 %753, %v710
  %v755 = vpop.permute.xlu0 %754
  %758 = vset.pattern.permute.xlu0 0
  %759 = vperm.xlu0 %758, %v711
  %v760 = vpop.permute.xlu0 %759
  %763 = vset.pattern.permute.xlu0 0
  %764 = vperm.xlu0 %763, %v712
  %v765 = vpop.permute.xlu0 %764
  %768 = vset.pattern.permute.xlu0 0
  %769 = vperm.xlu0 %768, %v713
  %v770 = vpop.permute.xlu0 %769
  %773 = vset.pattern.permute.xlu0 0
  %774 = vperm.xlu0 %773, %v714
  %v775 = vpop.permute.xlu0 %774
  %778 = vset.pattern.permute.xlu0 0
  %779 = vperm.xlu0 %778, %v715
  %v780 = vpop.permute.xlu0 %779
  %783 = vset.pattern.permute.xlu0 0
  %784 = vperm.xlu0 %783, %v716
  %v785 = vpop.permute.xlu0 %784
  %788 = vset.pattern.permute.xlu0 0
  %789 = vperm.xlu0 %788, %v717
  %v790 = vpop.permute.xlu0 %789
  %793 = vset.pattern.permute.xlu0 0
  %794 = vperm.xlu0 %793, %v718
  %v795 = vpop.permute.xlu0 %794
  %798 = vset.pattern.permute.xlu0 0
  %799 = vperm.xlu0 %798, %v719
  %v800 = vpop.permute.xlu0 %799
  %803 = vset.pattern.permute.xlu0 0
  %804 = vperm.xlu0 %803, %v720
  %v805 = vpop.permute.xlu0 %804
  %808 = vset.pattern.permute.xlu0 0
  %809 = vperm.xlu0 %808, %v721
  %v810 = vpop.permute.xlu0 %809
  %v812 = vmul.f32 %v725, %v686
  %v813 = vmul.f32 %v730, %v687
  %v814 = vmul.f32 %v735, %v688
  %v815 = vmul.f32 %v740, %v689
  %v816 = vmul.f32 %v745, %v690
  %v817 = vmul.f32 %v750, %v691
  %v818 = vmul.f32 %v755, %v692
  %v819 = vmul.f32 %v760, %v693
  %v820 = vmul.f32 %v765, %v694
  %v821 = vmul.f32 %v770, %v695
  %v822 = vmul.f32 %v775, %v696
  %v823 = vmul.f32 %v780, %v697
  %v824 = vmul.f32 %v785, %v698
  %v825 = vmul.f32 %v790, %v699
  %v826 = vmul.f32 %v795, %v700
  %v827 = vmul.f32 %v800, %v701
  %v828 = vmul.f32 %v805, %v702
  %v829 = vmul.f32 %v810, %v703
  %v830 = vadd.f32 %v812, 0.0
  %v831 = vadd.f32 %v813, 0.0
  %v832 = vadd.f32 %v814, 0.0
  %v833 = vadd.f32 %v815, 0.0
  %v834 = vadd.f32 %v816, 0.0
  %v835 = vadd.f32 %v817, 0.0
  %v836 = vadd.f32 %v818, 0.0
  %v837 = vadd.f32 %v819, 0.0
  %v838 = vadd.f32 %v820, 0.0
  %v839 = vadd.f32 %v821, 0.0
  %v840 = vadd.f32 %v822, 0.0
  %v841 = vadd.f32 %v823, 0.0
  %v842 = vadd.f32 %v824, 0.0
  %v843 = vadd.f32 %v825, 0.0
  %v844 = vadd.f32 %v826, 0.0
  %v845 = vadd.f32 %v827, 0.0
  %v846 = vadd.f32 %v828, 0.0
  %v847 = vadd.f32 %v829, 0.0
  %v848 = vld [vmem:[#allocation2 + $0x50] sm:$0x7]
  %s849 = scalar_lea.vmem %s1, 8
  %v850 = vld [vmem:[%s849] sm:$0xf]
  %v851 = vld [vmem:[%s849 + $0x4] sm:$0xf]
  %v852 = vld [vmem:[#allocation2 + $0x54] sm:$0x7]
  %s853 = scalar_lea.vmem %s1, 32
  %v854 = vld [vmem:[%s853] sm:$0xf]
  %v855 = vld [vmem:[%s853 + $0x4] sm:$0xf]
  %v857 = vunpack.c.l.b16 %v852
  %v858 = vpack.c.b16 %v857, %v857
  %vm859 = vsmask.f32 7424
  %v860 = vshrl.u32 %v285, 16
  %v862 = vshll.u32 %v285, 16
  %v864 = vrot.slane %v862, 1
  %v865 = vor.u32 %v860, %v864
  %v866 = vshll.u32 %v286, 16
  %v868 = vrot.slane %v866, 1
  %v869 = vsel %vm859, %v865, %v868
  %v870 = vshrl.u32 %v286, 16
  %v872 = vor.u32 %v870, %v868
  %v873 = vshll.u32 %v287, 16
  %v875 = vrot.slane %v873, 1
  %v876 = vsel %vm859, %v872, %v875
  %v877 = vshrl.u32 %v287, 16
  %v879 = vor.u32 %v877, %v875
  %v880 = vshll.u32 %v288, 16
  %v882 = vrot.slane %v880, 1
  %v883 = vsel %vm859, %v879, %v882
  %v884 = vshrl.u32 %v288, 16
  %v886 = vor.u32 %v884, %v882
  %v887 = vshll.u32 %v289, 16
  %v889 = vrot.slane %v887, 1
  %v890 = vsel %vm859, %v886, %v889
  %v891 = vshrl.u32 %v289, 16
  %v893 = vor.u32 %v891, %v889
  %v894 = vshll.u32 %v290, 16
  %v896 = vrot.slane %v894, 1
  %v897 = vsel %vm859, %v893, %v896
  %v898 = vshrl.u32 %v290, 16
  %v900 = vor.u32 %v898, %v896
  %v901 = vshll.u32 %v291, 16
  %v903 = vrot.slane %v901, 1
  %v904 = vsel %vm859, %v900, %v903
  %v905 = vshrl.u32 %v291, 16
  %v907 = vor.u32 %v905, %v903
  %v908 = vshll.u32 %v292, 16
  %v910 = vrot.slane %v908, 1
  %v911 = vsel %vm859, %v907, %v910
  %v912 = vshrl.u32 %v292, 16
  %v914 = vor.u32 %v912, %v910
  %v915 = vshll.u32 %v293, 16
  %v917 = vrot.slane %v915, 1
  %v918 = vsel %vm859, %v914, %v917
  %v919 = vshrl.u32 %v293, 16
  %v921 = vor.u32 %v919, %v917
  %v922 = vshll.u32 %v294, 16
  %v924 = vrot.slane %v922, 1
  %v925 = vsel %vm859, %v921, %v924
  %v926 = vshrl.u32 %v294, 16
  %v928 = vor.u32 %v926, %v924
  %v930 = vshll.u32 %v858, 16
  %v932 = vrot.slane %v930, 1
  %v933 = vsel %vm859, %v928, %v932
  %v934 = vshrl.u32 %v858, 16
  %v936 = vor.u32 %v934, %v932
  %v939 = vunpack.c.l.b16 %v854
  %v940 = vunpack.c.l.b16 %v855
  %v941 = vpack.c.b16 %v940, %v939
  %v944 = vsel %vm302, %v869, 0
  %v947 = vsel %vm302, %v876, 0
  %v950 = vsel %vm302, %v883, 0
  %v953 = vsel %vm302, %v890, 0
  %v956 = vsel %vm302, %v897, 0
  %v959 = vsel %vm302, %v904, 0
  %v962 = vsel %vm302, %v911, 0
  %v965 = vsel %vm302, %v918, 0
  %v968 = vsel %vm302, %v925, 0
  %v971 = vsel %vm302, %v933, 0
  %v974 = vsel %vm302, %v936, 0
  %976 = vmatpush.bf16.msra.mxu0 0
  %977 = vmatpush.bf16.msra.mxu0 0
  %978 = vmatpush.bf16.msra.mxu0 0
  %979 = vmatpush.bf16.msra.mxu0 0
  %980 = vmatpush.bf16.msra.mxu0 0
  %981 = vmatpush.bf16.msra.mxu0 0
  %982 = vmatpush.bf16.msra.mxu0 0
  %983 = vmatpush.bf16.msra.mxu0 %v941
  %984 = vmatmul.bf16.gmra.mxu0 %v944
  %v985 = vpop.f32.mrf.mxu0
  %v986 = vpop.f32.mrf.mxu0
  %v987 = vadd.f32 0.0, %v986
  %988 = vmatmul.bf16.gmra.mxu0 %v947
  %v989 = vpop.f32.mrf.mxu0
  %v990 = vadd.f32 0.0, %v989
  %v991 = vpop.f32.mrf.mxu0
  %v992 = vadd.f32 0.0, %v991
  %993 = vmatmul.bf16.gmra.mxu0 %v950
  %v994 = vpop.f32.mrf.mxu0
  %v995 = vadd.f32 0.0, %v994
  %v996 = vpop.f32.mrf.mxu0
  %v997 = vadd.f32 0.0, %v996
  %998 = vmatmul.bf16.gmra.mxu0 %v953
  %v999 = vpop.f32.mrf.mxu0
  %v1000 = vadd.f32 0.0, %v999
  %v1001 = vpop.f32.mrf.mxu0
  %v1002 = vadd.f32 0.0, %v1001
  %1003 = vmatmul.bf16.gmra.mxu0 %v956
  %v1004 = vpop.f32.mrf.mxu0
  %v1005 = vadd.f32 0.0, %v1004
  %v1006 = vpop.f32.mrf.mxu0
  %v1007 = vadd.f32 0.0, %v1006
  %1008 = vmatmul.bf16.gmra.mxu0 %v959
  %v1009 = vpop.f32.mrf.mxu0
  %v1010 = vpop.f32.mrf.mxu0
  %v1011 = vadd.f32 0.0, %v1010
  %1012 = vmatmul.bf16.gmra.mxu0 %v962
  %v1013 = vpop.f32.mrf.mxu0
  %v1014 = vadd.f32 0.0, %v1013
  %v1015 = vpop.f32.mrf.mxu0
  %v1016 = vadd.f32 0.0, %v1015
  %1017 = vmatmul.bf16.gmra.mxu0 %v965
  %v1018 = vpop.f32.mrf.mxu0
  %v1019 = vadd.f32 0.0, %v1018
  %v1020 = vpop.f32.mrf.mxu0
  %v1021 = vadd.f32 0.0, %v1020
  %1022 = vmatmul.bf16.gmra.mxu0 %v968
  %v1023 = vpop.f32.mrf.mxu0
  %v1024 = vadd.f32 0.0, %v1023
  %v1025 = vpop.f32.mrf.mxu0
  %v1026 = vadd.f32 0.0, %v1025
  %1027 = vmatmul.bf16.gmra.mxu0 %v971
  %v1028 = vpop.f32.mrf.mxu0
  %v1029 = vadd.f32 0.0, %v1028
  %v1030 = vpop.f32.mrf.mxu0
  %v1031 = vadd.f32 0.0, %v1030
  %1032 = vmatmul.bf16.gmra.mxu0 %v974
  %v1033 = vpop.f32.mrf.mxu0
  %v1034 = vpop.f32.mrf.mxu0
  %1035 = vdwg.mxu0
  %v1037 = vunpack.c.l.b16 %v848
  %v1038 = vpack.c.b16 %v1037, %v1037
  %v1039 = vshrl.u32 %v400, 16
  %v1041 = vshll.u32 %v400, 16
  %v1043 = vrot.slane %v1041, 1
  %v1044 = vor.u32 %v1039, %v1043
  %v1045 = vshll.u32 %v401, 16
  %v1047 = vrot.slane %v1045, 1
  %v1048 = vsel %vm859, %v1044, %v1047
  %v1049 = vshrl.u32 %v401, 16
  %v1051 = vor.u32 %v1049, %v1047
  %v1052 = vshll.u32 %v402, 16
  %v1054 = vrot.slane %v1052, 1
  %v1055 = vsel %vm859, %v1051, %v1054
  %v1056 = vshrl.u32 %v402, 16
  %v1058 = vor.u32 %v1056, %v1054
  %v1059 = vshll.u32 %v403, 16
  %v1061 = vrot.slane %v1059, 1
  %v1062 = vsel %vm859, %v1058, %v1061
  %v1063 = vshrl.u32 %v403, 16
  %v1065 = vor.u32 %v1063, %v1061
  %v1066 = vshll.u32 %v404, 16
  %v1068 = vrot.slane %v1066, 1
  %v1069 = vsel %vm859, %v1065, %v1068
  %v1070 = vshrl.u32 %v404, 16
  %v1072 = vor.u32 %v1070, %v1068
  %v1073 = vshll.u32 %v405, 16
  %v1075 = vrot.slane %v1073, 1
  %v1076 = vsel %vm859, %v1072, %v1075
  %v1077 = vshrl.u32 %v405, 16
  %v1079 = vor.u32 %v1077, %v1075
  %v1080 = vshll.u32 %v406, 16
  %v1082 = vrot.slane %v1080, 1
  %v1083 = vsel %vm859, %v1079, %v1082
  %v1084 = vshrl.u32 %v406, 16
  %v1086 = vor.u32 %v1084, %v1082
  %v1087 = vshll.u32 %v407, 16
  %v1089 = vrot.slane %v1087, 1
  %v1090 = vsel %vm859, %v1086, %v1089
  %v1091 = vshrl.u32 %v407, 16
  %v1093 = vor.u32 %v1091, %v1089
  %v1094 = vshll.u32 %v408, 16
  %v1096 = vrot.slane %v1094, 1
  %v1097 = vsel %vm859, %v1093, %v1096
  %v1098 = vshrl.u32 %v408, 16
  %v1100 = vor.u32 %v1098, %v1096
  %v1101 = vshll.u32 %v409, 16
  %v1103 = vrot.slane %v1101, 1
  %v1104 = vsel %vm859, %v1100, %v1103
  %v1105 = vshrl.u32 %v409, 16
  %v1107 = vor.u32 %v1105, %v1103
  %v1109 = vshll.u32 %v1038, 16
  %v1111 = vrot.slane %v1109, 1
  %v1112 = vsel %vm859, %v1107, %v1111
  %v1113 = vshrl.u32 %v1038, 16
  %v1115 = vor.u32 %v1113, %v1111
  %v1118 = vunpack.c.l.b16 %v850
  %v1119 = vunpack.c.l.b16 %v851
  %v1120 = vpack.c.b16 %v1119, %v1118
  %v1123 = vsel %vm302, %v1048, 0
  %v1126 = vsel %vm302, %v1055, 0
  %v1129 = vsel %vm302, %v1062, 0
  %v1132 = vsel %vm302, %v1069, 0
  %v1135 = vsel %vm302, %v1076, 0
  %v1138 = vsel %vm302, %v1083, 0
  %v1141 = vsel %vm302, %v1090, 0
  %v1144 = vsel %vm302, %v1097, 0
  %v1147 = vsel %vm302, %v1104, 0
  %v1150 = vsel %vm302, %v1112, 0
  %v1153 = vsel %vm302, %v1115, 0
  %1155 = vmatpush.bf16.msra.mxu0 0
  %1156 = vmatpush.bf16.msra.mxu0 0
  %1157 = vmatpush.bf16.msra.mxu0 0
  %1158 = vmatpush.bf16.msra.mxu0 0
  %1159 = vmatpush.bf16.msra.mxu0 0
  %1160 = vmatpush.bf16.msra.mxu0 0
  %1161 = vmatpush.bf16.msra.mxu0 0
  %1162 = vmatpush.bf16.msra.mxu0 %v1120
  %1163 = vmatmul.bf16.gmra.mxu0 %v1123
  %v1164 = vpop.f32.mrf.mxu0
  %v1165 = vpop.f32.mrf.mxu0
  %v1166 = vadd.f32 %v987, %v1165
  %1167 = vmatmul.bf16.gmra.mxu0 %v1126
  %v1168 = vpop.f32.mrf.mxu0
  %v1169 = vadd.f32 %v990, %v1168
  %v1170 = vpop.f32.mrf.mxu0
  %v1171 = vadd.f32 %v992, %v1170
  %1172 = vmatmul.bf16.gmra.mxu0 %v1129
  %v1173 = vpop.f32.mrf.mxu0
  %v1174 = vadd.f32 %v995, %v1173
  %v1175 = vpop.f32.mrf.mxu0
  %v1176 = vadd.f32 %v997, %v1175
  %1177 = vmatmul.bf16.gmra.mxu0 %v1132
  %v1178 = vpop.f32.mrf.mxu0
  %v1179 = vadd.f32 %v1000, %v1178
  %v1180 = vpop.f32.mrf.mxu0
  %v1181 = vadd.f32 %v1002, %v1180
  %1182 = vmatmul.bf16.gmra.mxu0 %v1135
  %v1183 = vpop.f32.mrf.mxu0
  %v1184 = vadd.f32 %v1005, %v1183
  %v1185 = vpop.f32.mrf.mxu0
  %v1186 = vadd.f32 %v1007, %v1185
  %1187 = vmatmul.bf16.gmra.mxu0 %v1138
  %v1188 = vpop.f32.mrf.mxu0
  %v1189 = vpop.f32.mrf.mxu0
  %v1190 = vadd.f32 %v1011, %v1189
  %1191 = vmatmul.bf16.gmra.mxu0 %v1141
  %v1192 = vpop.f32.mrf.mxu0
  %v1193 = vadd.f32 %v1014, %v1192
  %v1194 = vpop.f32.mrf.mxu0
  %v1195 = vadd.f32 %v1016, %v1194
  %1196 = vmatmul.bf16.gmra.mxu0 %v1144
  %v1197 = vpop.f32.mrf.mxu0
  %v1198 = vadd.f32 %v1019, %v1197
  %v1199 = vpop.f32.mrf.mxu0
  %v1200 = vadd.f32 %v1021, %v1199
  %1201 = vmatmul.bf16.gmra.mxu0 %v1147
  %v1202 = vpop.f32.mrf.mxu0
  %v1203 = vadd.f32 %v1024, %v1202
  %v1204 = vpop.f32.mrf.mxu0
  %v1205 = vadd.f32 %v1026, %v1204
  %1206 = vmatmul.bf16.gmra.mxu0 %v1150
  %v1207 = vpop.f32.mrf.mxu0
  %v1208 = vadd.f32 %v1029, %v1207
  %v1209 = vpop.f32.mrf.mxu0
  %v1210 = vadd.f32 %v1031, %v1209
  %1211 = vmatmul.bf16.gmra.mxu0 %v1153
  %v1212 = vpop.f32.mrf.mxu0
  %v1213 = vpop.f32.mrf.mxu0
  %1214 = vdwg.mxu0
  %v1215 = vld [vmem:[#allocation2 + $0x58] sm:$0x7]
  %s1216 = scalar_lea.vmem %s1, 56
  %v1217 = vld [vmem:[%s1216] sm:$0xf]
  %v1218 = vld [vmem:[%s1216 + $0x4] sm:$0xf]
  %v1220 = vunpack.c.l.b16 %v1215
  %v1221 = vpack.c.b16 %v1220, %v1220
  %v1222 = vshrl.u32 %v576, 16
  %v1224 = vshll.u32 %v576, 16
  %v1226 = vrot.slane %v1224, 1
  %v1227 = vor.u32 %v1222, %v1226
  %v1228 = vshll.u32 %v577, 16
  %v1230 = vrot.slane %v1228, 1
  %v1231 = vsel %vm859, %v1227, %v1230
  %v1232 = vshrl.u32 %v577, 16
  %v1234 = vor.u32 %v1232, %v1230
  %v1235 = vshll.u32 %v578, 16
  %v1237 = vrot.slane %v1235, 1
  %v1238 = vsel %vm859, %v1234, %v1237
  %v1239 = vshrl.u32 %v578, 16
  %v1241 = vor.u32 %v1239, %v1237
  %v1242 = vshll.u32 %v579, 16
  %v1244 = vrot.slane %v1242, 1
  %v1245 = vsel %vm859, %v1241, %v1244
  %v1246 = vshrl.u32 %v579, 16
  %v1248 = vor.u32 %v1246, %v1244
  %v1249 = vshll.u32 %v580, 16
  %v1251 = vrot.slane %v1249, 1
  %v1252 = vsel %vm859, %v1248, %v1251
  %v1253 = vshrl.u32 %v580, 16
  %v1255 = vor.u32 %v1253, %v1251
  %v1256 = vshll.u32 %v581, 16
  %v1258 = vrot.slane %v1256, 1
  %v1259 = vsel %vm859, %v1255, %v1258
  %v1260 = vshrl.u32 %v581, 16
  %v1262 = vor.u32 %v1260, %v1258
  %v1263 = vshll.u32 %v582, 16
  %v1265 = vrot.slane %v1263, 1
  %v1266 = vsel %vm859, %v1262, %v1265
  %v1267 = vshrl.u32 %v582, 16
  %v1269 = vor.u32 %v1267, %v1265
  %v1270 = vshll.u32 %v583, 16
  %v1272 = vrot.slane %v1270, 1
  %v1273 = vsel %vm859, %v1269, %v1272
  %v1274 = vshrl.u32 %v583, 16
  %v1276 = vor.u32 %v1274, %v1272
  %v1277 = vshll.u32 %v584, 16
  %v1279 = vrot.slane %v1277, 1
  %v1280 = vsel %vm859, %v1276, %v1279
  %v1281 = vshrl.u32 %v584, 16
  %v1283 = vor.u32 %v1281, %v1279
  %v1284 = vshll.u32 %v585, 16
  %v1286 = vrot.slane %v1284, 1
  %v1287 = vsel %vm859, %v1283, %v1286
  %v1288 = vshrl.u32 %v585, 16
  %v1290 = vor.u32 %v1288, %v1286
  %v1292 = vshll.u32 %v1221, 16
  %v1294 = vrot.slane %v1292, 1
  %v1295 = vsel %vm859, %v1290, %v1294
  %v1296 = vshrl.u32 %v1221, 16
  %v1298 = vor.u32 %v1296, %v1294
  %v1301 = vunpack.c.l.b16 %v1217
  %v1302 = vunpack.c.l.b16 %v1218
  %v1303 = vpack.c.b16 %v1302, %v1301
  %v1306 = vsel %vm302, %v1231, 0
  %v1309 = vsel %vm302, %v1238, 0
  %v1312 = vsel %vm302, %v1245, 0
  %v1315 = vsel %vm302, %v1252, 0
  %v1318 = vsel %vm302, %v1259, 0
  %v1321 = vsel %vm302, %v1266, 0
  %v1324 = vsel %vm302, %v1273, 0
  %v1327 = vsel %vm302, %v1280, 0
  %v1330 = vsel %vm302, %v1287, 0
  %v1333 = vsel %vm302, %v1295, 0
  %v1336 = vsel %vm302, %v1298, 0
  %1338 = vmatpush.bf16.msra.mxu0 0
  %1339 = vmatpush.bf16.msra.mxu0 0
  %1340 = vmatpush.bf16.msra.mxu0 0
  %1341 = vmatpush.bf16.msra.mxu0 0
  %1342 = vmatpush.bf16.msra.mxu0 0
  %1343 = vmatpush.bf16.msra.mxu0 0
  %1344 = vmatpush.bf16.msra.mxu0 0
  %1345 = vmatpush.bf16.msra.mxu0 %v1303
  %1346 = vmatmul.bf16.gmra.mxu0 %v1306
  %v1347 = vpop.f32.mrf.mxu0
  %v1348 = vpop.f32.mrf.mxu0
  %v1349 = vadd.f32 0.0, %v1348
  %1350 = vmatmul.bf16.gmra.mxu0 %v1309
  %v1351 = vpop.f32.mrf.mxu0
  %v1352 = vadd.f32 0.0, %v1351
  %v1353 = vpop.f32.mrf.mxu0
  %v1354 = vadd.f32 0.0, %v1353
  %1355 = vmatmul.bf16.gmra.mxu0 %v1312
  %v1356 = vpop.f32.mrf.mxu0
  %v1357 = vadd.f32 0.0, %v1356
  %v1358 = vpop.f32.mrf.mxu0
  %v1359 = vadd.f32 0.0, %v1358
  %1360 = vmatmul.bf16.gmra.mxu0 %v1315
  %v1361 = vpop.f32.mrf.mxu0
  %v1362 = vadd.f32 0.0, %v1361
  %v1363 = vpop.f32.mrf.mxu0
  %v1364 = vadd.f32 0.0, %v1363
  %1365 = vmatmul.bf16.gmra.mxu0 %v1318
  %v1366 = vpop.f32.mrf.mxu0
  %v1367 = vadd.f32 0.0, %v1366
  %v1368 = vpop.f32.mrf.mxu0
  %v1369 = vadd.f32 0.0, %v1368
  %1370 = vmatmul.bf16.gmra.mxu0 %v1321
  %v1371 = vpop.f32.mrf.mxu0
  %v1372 = vpop.f32.mrf.mxu0
  %v1373 = vadd.f32 0.0, %v1372
  %1374 = vmatmul.bf16.gmra.mxu0 %v1324
  %v1375 = vpop.f32.mrf.mxu0
  %v1376 = vadd.f32 0.0, %v1375
  %v1377 = vpop.f32.mrf.mxu0
  %v1378 = vadd.f32 0.0, %v1377
  %1379 = vmatmul.bf16.gmra.mxu0 %v1327
  %v1380 = vpop.f32.mrf.mxu0
  %v1381 = vadd.f32 0.0, %v1380
  %v1382 = vpop.f32.mrf.mxu0
  %v1383 = vadd.f32 0.0, %v1382
  %1384 = vmatmul.bf16.gmra.mxu0 %v1330
  %v1385 = vpop.f32.mrf.mxu0
  %v1386 = vadd.f32 0.0, %v1385
  %v1387 = vpop.f32.mrf.mxu0
  %v1388 = vadd.f32 0.0, %v1387
  %1389 = vmatmul.bf16.gmra.mxu0 %v1333
  %v1390 = vpop.f32.mrf.mxu0
  %v1391 = vadd.f32 0.0, %v1390
  %v1392 = vpop.f32.mrf.mxu0
  %v1393 = vadd.f32 0.0, %v1392
  %1394 = vmatmul.bf16.gmra.mxu0 %v1336
  %v1395 = vpop.f32.mrf.mxu0
  %v1396 = vpop.f32.mrf.mxu0
  %1397 = vdwg.mxu0
  %v1398 = vadd.f32 %v1166, %v1349
  %v1399 = vadd.f32 %v1169, %v1352
  %v1400 = vadd.f32 %v1171, %v1354
  %v1401 = vadd.f32 %v1174, %v1357
  %v1402 = vadd.f32 %v1176, %v1359
  %v1403 = vadd.f32 %v1179, %v1362
  %v1404 = vadd.f32 %v1181, %v1364
  %v1405 = vadd.f32 %v1184, %v1367
  %v1406 = vadd.f32 %v1186, %v1369
  %v1407 = vadd.f32 %v1190, %v1373
  %v1408 = vadd.f32 %v1193, %v1376
  %v1409 = vadd.f32 %v1195, %v1378
  %v1410 = vadd.f32 %v1198, %v1381
  %v1411 = vadd.f32 %v1200, %v1383
  %v1412 = vadd.f32 %v1203, %v1386
  %v1413 = vadd.f32 %v1205, %v1388
  %v1414 = vadd.f32 %v1208, %v1391
  %v1415 = vadd.f32 %v1210, %v1393
  %v1416 = vadd.f32 %v830, %v1398
  %v1417 = vadd.f32 %v831, %v1399
  %v1418 = vadd.f32 %v832, %v1400
  %v1419 = vadd.f32 %v833, %v1401
  %v1420 = vadd.f32 %v834, %v1402
  %v1421 = vadd.f32 %v835, %v1403
  %v1422 = vadd.f32 %v836, %v1404
  %v1423 = vadd.f32 %v837, %v1405
  %v1424 = vadd.f32 %v838, %v1406
  %v1425 = vadd.f32 %v839, %v1407
  %v1426 = vadd.f32 %v840, %v1408
  %v1427 = vadd.f32 %v841, %v1409
  %v1428 = vadd.f32 %v842, %v1410
  %v1429 = vadd.f32 %v843, %v1411
  %v1430 = vadd.f32 %v844, %v1412
  %v1431 = vadd.f32 %v845, %v1413
  %v1432 = vadd.f32 %v846, %v1414
  %v1433 = vadd.f32 %v847, %v1415
  %v1434 = vld [vmem:[#allocation2] sm:$0xe]
  %s1435 = scalar_lea.vmem %s1, 16
  %v1436 = vld [vmem:[%s1435] sm:$0xf]
  %v1437 = vld [vmem:[%s1435 + $0x4] sm:$0xf]
  %v1438 = vld [vmem:[#allocation2 + $0x4] sm:$0xe]
  %s1439 = scalar_lea.vmem %s1, 40
  %v1440 = vld [vmem:[%s1439] sm:$0xf]
  %v1441 = vld [vmem:[%s1439 + $0x4] sm:$0xf]
  %v1443 = vunpack.c.l.b16 %v1438
  %v1444 = vpack.c.b16 %v265, %v1443
  %vm1445 = vcmask 1046528
  %v1446 = vrot.slane %v1444, 1
  %v1447 = vrot.slane %v286, 1
  %v1448 = vsel %vm1445, %v1446, %v1447
  %v1449 = vrot.slane %v287, 1
  %v1450 = vsel %vm1445, %v1447, %v1449
  %v1451 = vrot.slane %v288, 1
  %v1452 = vsel %vm1445, %v1449, %v1451
  %v1453 = vrot.slane %v289, 1
  %v1454 = vsel %vm1445, %v1451, %v1453
  %v1455 = vrot.slane %v290, 1
  %v1456 = vsel %vm1445, %v1453, %v1455
  %v1457 = vrot.slane %v291, 1
  %v1458 = vsel %vm1445, %v1455, %v1457
  %v1459 = vrot.slane %v292, 1
  %v1460 = vsel %vm1445, %v1457, %v1459
  %v1461 = vrot.slane %v293, 1
  %v1462 = vsel %vm1445, %v1459, %v1461
  %v1463 = vrot.slane %v294, 1
  %v1464 = vsel %vm1445, %v1461, %v1463
  %v1465 = vrot.slane %v858, 1
  %v1466 = vsel %vm1445, %v1463, %v1465
  %v1469 = vunpack.c.l.b16 %v1440
  %v1470 = vunpack.c.l.b16 %v1441
  %v1471 = vpack.c.b16 %v1470, %v1469
  %v1474 = vsel %vm302, %v1448, 0
  %v1477 = vsel %vm302, %v1450, 0
  %v1480 = vsel %vm302, %v1452, 0
  %v1483 = vsel %vm302, %v1454, 0
  %v1486 = vsel %vm302, %v1456, 0
  %v1489 = vsel %vm302, %v1458, 0
  %v1492 = vsel %vm302, %v1460, 0
  %v1495 = vsel %vm302, %v1462, 0
  %v1498 = vsel %vm302, %v1464, 0
  %v1501 = vsel %vm302, %v1466, 0
  %v1504 = vsel %vm302, %v1465, 0
  %1506 = vmatpush.bf16.msra.mxu0 0
  %1507 = vmatpush.bf16.msra.mxu0 0
  %1508 = vmatpush.bf16.msra.mxu0 0
  %1509 = vmatpush.bf16.msra.mxu0 0
  %1510 = vmatpush.bf16.msra.mxu0 0
  %1511 = vmatpush.bf16.msra.mxu0 0
  %1512 = vmatpush.bf16.msra.mxu0 0
  %1513 = vmatpush.bf16.msra.mxu0 %v1471
  %1514 = vmatmul.bf16.gmra.mxu0 %v1474
  %v1515 = vpop.f32.mrf.mxu0
  %v1516 = vpop.f32.mrf.mxu0
  %v1517 = vadd.f32 0.0, %v1516
  %1518 = vmatmul.bf16.gmra.mxu0 %v1477
  %v1519 = vpop.f32.mrf.mxu0
  %v1520 = vadd.f32 0.0, %v1519
  %v1521 = vpop.f32.mrf.mxu0
  %v1522 = vadd.f32 0.0, %v1521
  %1523 = vmatmul.bf16.gmra.mxu0 %v1480
  %v1524 = vpop.f32.mrf.mxu0
  %v1525 = vadd.f32 0.0, %v1524
  %v1526 = vpop.f32.mrf.mxu0
  %v1527 = vadd.f32 0.0, %v1526
  %1528 = vmatmul.bf16.gmra.mxu0 %v1483
  %v1529 = vpop.f32.mrf.mxu0
  %v1530 = vadd.f32 0.0, %v1529
  %v1531 = vpop.f32.mrf.mxu0
  %v1532 = vadd.f32 0.0, %v1531
  %1533 = vmatmul.bf16.gmra.mxu0 %v1486
  %v1534 = vpop.f32.mrf.mxu0
  %v1535 = vadd.f32 0.0, %v1534
  %v1536 = vpop.f32.mrf.mxu0
  %v1537 = vadd.f32 0.0, %v1536
  %1538 = vmatmul.bf16.gmra.mxu0 %v1489
  %v1539 = vpop.f32.mrf.mxu0
  %v1540 = vpop.f32.mrf.mxu0
  %v1541 = vadd.f32 0.0, %v1540
  %1542 = vmatmul.bf16.gmra.mxu0 %v1492
  %v1543 = vpop.f32.mrf.mxu0
  %v1544 = vadd.f32 0.0, %v1543
  %v1545 = vpop.f32.mrf.mxu0
  %v1546 = vadd.f32 0.0, %v1545
  %1547 = vmatmul.bf16.gmra.mxu0 %v1495
  %v1548 = vpop.f32.mrf.mxu0
  %v1549 = vadd.f32 0.0, %v1548
  %v1550 = vpop.f32.mrf.mxu0
  %v1551 = vadd.f32 0.0, %v1550
  %1552 = vmatmul.bf16.gmra.mxu0 %v1498
  %v1553 = vpop.f32.mrf.mxu0
  %v1554 = vadd.f32 0.0, %v1553
  %v1555 = vpop.f32.mrf.mxu0
  %v1556 = vadd.f32 0.0, %v1555
  %1557 = vmatmul.bf16.gmra.mxu0 %v1501
  %v1558 = vpop.f32.mrf.mxu0
  %v1559 = vadd.f32 0.0, %v1558
  %v1560 = vpop.f32.mrf.mxu0
  %v1561 = vadd.f32 0.0, %v1560
  %1562 = vmatmul.bf16.gmra.mxu0 %v1504
  %v1563 = vpop.f32.mrf.mxu0
  %v1564 = vpop.f32.mrf.mxu0
  %1565 = vdwg.mxu0
  %v1567 = vunpack.c.l.b16 %v1434
  %v1568 = vpack.c.b16 %v264, %v1567
  %v1569 = vrot.slane %v1568, 1
  %v1570 = vrot.slane %v401, 1
  %v1571 = vsel %vm1445, %v1569, %v1570
  %v1572 = vrot.slane %v402, 1
  %v1573 = vsel %vm1445, %v1570, %v1572
  %v1574 = vrot.slane %v403, 1
  %v1575 = vsel %vm1445, %v1572, %v1574
  %v1576 = vrot.slane %v404, 1
  %v1577 = vsel %vm1445, %v1574, %v1576
  %v1578 = vrot.slane %v405, 1
  %v1579 = vsel %vm1445, %v1576, %v1578
  %v1580 = vrot.slane %v406, 1
  %v1581 = vsel %vm1445, %v1578, %v1580
  %v1582 = vrot.slane %v407, 1
  %v1583 = vsel %vm1445, %v1580, %v1582
  %v1584 = vrot.slane %v408, 1
  %v1585 = vsel %vm1445, %v1582, %v1584
  %v1586 = vrot.slane %v409, 1
  %v1587 = vsel %vm1445, %v1584, %v1586
  %v1588 = vrot.slane %v1038, 1
  %v1589 = vsel %vm1445, %v1586, %v1588
  %v1592 = vunpack.c.l.b16 %v1436
  %v1593 = vunpack.c.l.b16 %v1437
  %v1594 = vpack.c.b16 %v1593, %v1592
  %v1597 = vsel %vm302, %v1571, 0
  %v1600 = vsel %vm302, %v1573, 0
  %v1603 = vsel %vm302, %v1575, 0
  %v1606 = vsel %vm302, %v1577, 0
  %v1609 = vsel %vm302, %v1579, 0
  %v1612 = vsel %vm302, %v1581, 0
  %v1615 = vsel %vm302, %v1583, 0
  %v1618 = vsel %vm302, %v1585, 0
  %v1621 = vsel %vm302, %v1587, 0
  %v1624 = vsel %vm302, %v1589, 0
  %v1627 = vsel %vm302, %v1588, 0
  %1629 = vmatpush.bf16.msra.mxu0 0
  %1630 = vmatpush.bf16.msra.mxu0 0
  %1631 = vmatpush.bf16.msra.mxu0 0
  %1632 = vmatpush.bf16.msra.mxu0 0
  %1633 = vmatpush.bf16.msra.mxu0 0
  %1634 = vmatpush.bf16.msra.mxu0 0
  %1635 = vmatpush.bf16.msra.mxu0 0
  %1636 = vmatpush.bf16.msra.mxu0 %v1594
  %1637 = vmatmul.bf16.gmra.mxu0 %v1597
  %v1638 = vpop.f32.mrf.mxu0
  %v1639 = vpop.f32.mrf.mxu0
  %v1640 = vadd.f32 %v1517, %v1639
  %1641 = vmatmul.bf16.gmra.mxu0 %v1600
  %v1642 = vpop.f32.mrf.mxu0
  %v1643 = vadd.f32 %v1520, %v1642
  %v1644 = vpop.f32.mrf.mxu0
  %v1645 = vadd.f32 %v1522, %v1644
  %1646 = vmatmul.bf16.gmra.mxu0 %v1603
  %v1647 = vpop.f32.mrf.mxu0
  %v1648 = vadd.f32 %v1525, %v1647
  %v1649 = vpop.f32.mrf.mxu0
  %v1650 = vadd.f32 %v1527, %v1649
  %1651 = vmatmul.bf16.gmra.mxu0 %v1606
  %v1652 = vpop.f32.mrf.mxu0
  %v1653 = vadd.f32 %v1530, %v1652
  %v1654 = vpop.f32.mrf.mxu0
  %v1655 = vadd.f32 %v1532, %v1654
  %1656 = vmatmul.bf16.gmra.mxu0 %v1609
  %v1657 = vpop.f32.mrf.mxu0
  %v1658 = vadd.f32 %v1535, %v1657
  %v1659 = vpop.f32.mrf.mxu0
  %v1660 = vadd.f32 %v1537, %v1659
  %1661 = vmatmul.bf16.gmra.mxu0 %v1612
  %v1662 = vpop.f32.mrf.mxu0
  %v1663 = vpop.f32.mrf.mxu0
  %v1664 = vadd.f32 %v1541, %v1663
  %1665 = vmatmul.bf16.gmra.mxu0 %v1615
  %v1666 = vpop.f32.mrf.mxu0
  %v1667 = vadd.f32 %v1544, %v1666
  %v1668 = vpop.f32.mrf.mxu0
  %v1669 = vadd.f32 %v1546, %v1668
  %1670 = vmatmul.bf16.gmra.mxu0 %v1618
  %v1671 = vpop.f32.mrf.mxu0
  %v1672 = vadd.f32 %v1549, %v1671
  %v1673 = vpop.f32.mrf.mxu0
  %v1674 = vadd.f32 %v1551, %v1673
  %1675 = vmatmul.bf16.gmra.mxu0 %v1621
  %v1676 = vpop.f32.mrf.mxu0
  %v1677 = vadd.f32 %v1554, %v1676
  %v1678 = vpop.f32.mrf.mxu0
  %v1679 = vadd.f32 %v1556, %v1678
  %1680 = vmatmul.bf16.gmra.mxu0 %v1624
  %v1681 = vpop.f32.mrf.mxu0
  %v1682 = vadd.f32 %v1559, %v1681
  %v1683 = vpop.f32.mrf.mxu0
  %v1684 = vadd.f32 %v1561, %v1683
  %1685 = vmatmul.bf16.gmra.mxu0 %v1627
  %v1686 = vpop.f32.mrf.mxu0
  %v1687 = vpop.f32.mrf.mxu0
  %1688 = vdwg.mxu0
  %v1689 = vld [vmem:[#allocation2 + $0x8] sm:$0xe]
  %s1690 = scalar_lea.vmem %s1, 64
  %v1691 = vld [vmem:[%s1690] sm:$0xf]
  %v1692 = vld [vmem:[%s1690 + $0x4] sm:$0xf]
  %v1694 = vunpack.c.l.b16 %v1689
  %v1695 = vpack.c.b16 %v556, %v1694
  %v1696 = vrot.slane %v1695, 1
  %v1697 = vrot.slane %v577, 1
  %v1698 = vsel %vm1445, %v1696, %v1697
  %v1699 = vrot.slane %v578, 1
  %v1700 = vsel %vm1445, %v1697, %v1699
  %v1701 = vrot.slane %v579, 1
  %v1702 = vsel %vm1445, %v1699, %v1701
  %v1703 = vrot.slane %v580, 1
  %v1704 = vsel %vm1445, %v1701, %v1703
  %v1705 = vrot.slane %v581, 1
  %v1706 = vsel %vm1445, %v1703, %v1705
  %v1707 = vrot.slane %v582, 1
  %v1708 = vsel %vm1445, %v1705, %v1707
  %v1709 = vrot.slane %v583, 1
  %v1710 = vsel %vm1445, %v1707, %v1709
  %v1711 = vrot.slane %v584, 1
  %v1712 = vsel %vm1445, %v1709, %v1711
  %v1713 = vrot.slane %v585, 1
  %v1714 = vsel %vm1445, %v1711, %v1713
  %v1715 = vrot.slane %v1221, 1
  %v1716 = vsel %vm1445, %v1713, %v1715
  %v1719 = vunpack.c.l.b16 %v1691
  %v1720 = vunpack.c.l.b16 %v1692
  %v1721 = vpack.c.b16 %v1720, %v1719
  %v1724 = vsel %vm302, %v1698, 0
  %v1727 = vsel %vm302, %v1700, 0
  %v1730 = vsel %vm302, %v1702, 0
  %v1733 = vsel %vm302, %v1704, 0
  %v1736 = vsel %vm302, %v1706, 0
  %v1739 = vsel %vm302, %v1708, 0
  %v1742 = vsel %vm302, %v1710, 0
  %v1745 = vsel %vm302, %v1712, 0
  %v1748 = vsel %vm302, %v1714, 0
  %v1751 = vsel %vm302, %v1716, 0
  %v1754 = vsel %vm302, %v1715, 0
  %1756 = vmatpush.bf16.msra.mxu0 0
  %1757 = vmatpush.bf16.msra.mxu0 0
  %1758 = vmatpush.bf16.msra.mxu0 0
  %1759 = vmatpush.bf16.msra.mxu0 0
  %1760 = vmatpush.bf16.msra.mxu0 0
  %1761 = vmatpush.bf16.msra.mxu0 0
  %1762 = vmatpush.bf16.msra.mxu0 0
  %1763 = vmatpush.bf16.msra.mxu0 %v1721
  %1764 = vmatmul.bf16.gmra.mxu0 %v1724
  %v1765 = vpop.f32.mrf.mxu0
  %v1766 = vpop.f32.mrf.mxu0
  %v1767 = vadd.f32 0.0, %v1766
  %1768 = vmatmul.bf16.gmra.mxu0 %v1727
  %v1769 = vpop.f32.mrf.mxu0
  %v1770 = vadd.f32 0.0, %v1769
  %v1771 = vpop.f32.mrf.mxu0
  %v1772 = vadd.f32 0.0, %v1771
  %1773 = vmatmul.bf16.gmra.mxu0 %v1730
  %v1774 = vpop.f32.mrf.mxu0
  %v1775 = vadd.f32 0.0, %v1774
  %v1776 = vpop.f32.mrf.mxu0
  %v1777 = vadd.f32 0.0, %v1776
  %1778 = vmatmul.bf16.gmra.mxu0 %v1733
  %v1779 = vpop.f32.mrf.mxu0
  %v1780 = vadd.f32 0.0, %v1779
  %v1781 = vpop.f32.mrf.mxu0
  %v1782 = vadd.f32 0.0, %v1781
  %1783 = vmatmul.bf16.gmra.mxu0 %v1736
  %v1784 = vpop.f32.mrf.mxu0
  %v1785 = vadd.f32 0.0, %v1784
  %v1786 = vpop.f32.mrf.mxu0
  %v1787 = vadd.f32 0.0, %v1786
  %1788 = vmatmul.bf16.gmra.mxu0 %v1739
  %v1789 = vpop.f32.mrf.mxu0
  %v1790 = vpop.f32.mrf.mxu0
  %v1791 = vadd.f32 0.0, %v1790
  %1792 = vmatmul.bf16.gmra.mxu0 %v1742
  %v1793 = vpop.f32.mrf.mxu0
  %v1794 = vadd.f32 0.0, %v1793
  %v1795 = vpop.f32.mrf.mxu0
  %v1796 = vadd.f32 0.0, %v1795
  %1797 = vmatmul.bf16.gmra.mxu0 %v1745
  %v1798 = vpop.f32.mrf.mxu0
  %v1799 = vadd.f32 0.0, %v1798
  %v1800 = vpop.f32.mrf.mxu0
  %v1801 = vadd.f32 0.0, %v1800
  %1802 = vmatmul.bf16.gmra.mxu0 %v1748
  %v1803 = vpop.f32.mrf.mxu0
  %v1804 = vadd.f32 0.0, %v1803
  %v1805 = vpop.f32.mrf.mxu0
  %v1806 = vadd.f32 0.0, %v1805
  %1807 = vmatmul.bf16.gmra.mxu0 %v1751
  %v1808 = vpop.f32.mrf.mxu0
  %v1809 = vadd.f32 0.0, %v1808
  %v1810 = vpop.f32.mrf.mxu0
  %v1811 = vadd.f32 0.0, %v1810
  %1812 = vmatmul.bf16.gmra.mxu0 %v1754
  %v1813 = vpop.f32.mrf.mxu0
  %v1814 = vpop.f32.mrf.mxu0
  %1815 = vdwg.mxu0
  %v1816 = vadd.f32 %v1640, %v1767
  %v1817 = vadd.f32 %v1643, %v1770
  %v1818 = vadd.f32 %v1645, %v1772
  %v1819 = vadd.f32 %v1648, %v1775
  %v1820 = vadd.f32 %v1650, %v1777
  %v1821 = vadd.f32 %v1653, %v1780
  %v1822 = vadd.f32 %v1655, %v1782
  %v1823 = vadd.f32 %v1658, %v1785
  %v1824 = vadd.f32 %v1660, %v1787
  %v1825 = vadd.f32 %v1664, %v1791
  %v1826 = vadd.f32 %v1667, %v1794
  %v1827 = vadd.f32 %v1669, %v1796
  %v1828 = vadd.f32 %v1672, %v1799
  %v1829 = vadd.f32 %v1674, %v1801
  %v1830 = vadd.f32 %v1677, %v1804
  %v1831 = vadd.f32 %v1679, %v1806
  %v1832 = vadd.f32 %v1682, %v1809
  %v1833 = vadd.f32 %v1684, %v1811
  %1834 = vset.pattern.permute.xlu0 1
  %1835 = vperm.xlu0 %1834, %v704
  %v1836 = vpop.permute.xlu0 %1835
  %1838 = vset.pattern.permute.xlu0 1
  %1839 = vperm.xlu0 %1838, %v705
  %v1840 = vpop.permute.xlu0 %1839
  %1842 = vset.pattern.permute.xlu0 1
  %1843 = vperm.xlu0 %1842, %v706
  %v1844 = vpop.permute.xlu0 %1843
  %1846 = vset.pattern.permute.xlu0 1
  %1847 = vperm.xlu0 %1846, %v707
  %v1848 = vpop.permute.xlu0 %1847
  %1850 = vset.pattern.permute.xlu0 1
  %1851 = vperm.xlu0 %1850, %v708
  %v1852 = vpop.permute.xlu0 %1851
  %1854 = vset.pattern.permute.xlu0 1
  %1855 = vperm.xlu0 %1854, %v709
  %v1856 = vpop.permute.xlu0 %1855
  %1858 = vset.pattern.permute.xlu0 1
  %1859 = vperm.xlu0 %1858, %v710
  %v1860 = vpop.permute.xlu0 %1859
  %1862 = vset.pattern.permute.xlu0 1
  %1863 = vperm.xlu0 %1862, %v711
  %v1864 = vpop.permute.xlu0 %1863
  %1866 = vset.pattern.permute.xlu0 1
  %1867 = vperm.xlu0 %1866, %v712
  %v1868 = vpop.permute.xlu0 %1867
  %1870 = vset.pattern.permute.xlu0 1
  %1871 = vperm.xlu0 %1870, %v713
  %v1872 = vpop.permute.xlu0 %1871
  %1874 = vset.pattern.permute.xlu0 1
  %1875 = vperm.xlu0 %1874, %v714
  %v1876 = vpop.permute.xlu0 %1875
  %1878 = vset.pattern.permute.xlu0 1
  %1879 = vperm.xlu0 %1878, %v715
  %v1880 = vpop.permute.xlu0 %1879
  %1882 = vset.pattern.permute.xlu0 1
  %1883 = vperm.xlu0 %1882, %v716
  %v1884 = vpop.permute.xlu0 %1883
  %1886 = vset.pattern.permute.xlu0 1
  %1887 = vperm.xlu0 %1886, %v717
  %v1888 = vpop.permute.xlu0 %1887
  %1890 = vset.pattern.permute.xlu0 1
  %1891 = vperm.xlu0 %1890, %v718
  %v1892 = vpop.permute.xlu0 %1891
  %1894 = vset.pattern.permute.xlu0 1
  %1895 = vperm.xlu0 %1894, %v719
  %v1896 = vpop.permute.xlu0 %1895
  %1898 = vset.pattern.permute.xlu0 1
  %1899 = vperm.xlu0 %1898, %v720
  %v1900 = vpop.permute.xlu0 %1899
  %1902 = vset.pattern.permute.xlu0 1
  %1903 = vperm.xlu0 %1902, %v721
  %v1904 = vpop.permute.xlu0 %1903
  %v1906 = vmul.f32 %v1836, %v1816
  %v1907 = vmul.f32 %v1840, %v1817
  %v1908 = vmul.f32 %v1844, %v1818
  %v1909 = vmul.f32 %v1848, %v1819
  %v1910 = vmul.f32 %v1852, %v1820
  %v1911 = vmul.f32 %v1856, %v1821
  %v1912 = vmul.f32 %v1860, %v1822
  %v1913 = vmul.f32 %v1864, %v1823
  %v1914 = vmul.f32 %v1868, %v1824
  %v1915 = vmul.f32 %v1872, %v1825
  %v1916 = vmul.f32 %v1876, %v1826
  %v1917 = vmul.f32 %v1880, %v1827
  %v1918 = vmul.f32 %v1884, %v1828
  %v1919 = vmul.f32 %v1888, %v1829
  %v1920 = vmul.f32 %v1892, %v1830
  %v1921 = vmul.f32 %v1896, %v1831
  %v1922 = vmul.f32 %v1900, %v1832
  %v1923 = vmul.f32 %v1904, %v1833
  %v1924 = vadd.f32 %v1416, %v1906
  %v1925 = vadd.f32 %v1417, %v1907
  %v1926 = vadd.f32 %v1418, %v1908
  %v1927 = vadd.f32 %v1419, %v1909
  %v1928 = vadd.f32 %v1420, %v1910
  %v1929 = vadd.f32 %v1421, %v1911
  %v1930 = vadd.f32 %v1422, %v1912
  %v1931 = vadd.f32 %v1423, %v1913
  %v1932 = vadd.f32 %v1424, %v1914
  %v1933 = vadd.f32 %v1425, %v1915
  %v1934 = vadd.f32 %v1426, %v1916
  %v1935 = vadd.f32 %v1427, %v1917
  %v1936 = vadd.f32 %v1428, %v1918
  %v1937 = vadd.f32 %v1429, %v1919
  %v1938 = vadd.f32 %v1430, %v1920
  %v1939 = vadd.f32 %v1431, %v1921
  %v1940 = vadd.f32 %v1432, %v1922
  %v1941 = vadd.f32 %v1433, %v1923
  %v1942 = vld [vmem:[%s7] sm:$0x1]
  %v1943 = vld [vmem:[%s8] sm:$0x1]
  %vm1953 = vcmask 1046528
  %v1954 = vrot.slane %v1924, 1
  %v1955 = vrot.slane %v1925, 1
  %v1956 = vsel %vm1953, %v1954, %v1955
  %v1957 = vrot.slane %v1926, 1
  %v1958 = vsel %vm1953, %v1955, %v1957
  %v1959 = vrot.slane %v1927, 1
  %v1960 = vsel %vm1953, %v1957, %v1959
  %v1961 = vrot.slane %v1928, 1
  %v1962 = vsel %vm1953, %v1959, %v1961
  %v1963 = vrot.slane %v1929, 1
  %v1964 = vsel %vm1953, %v1961, %v1963
  %v1965 = vrot.slane %v1930, 1
  %v1966 = vsel %vm1953, %v1963, %v1965
  %v1967 = vrot.slane %v1931, 1
  %v1968 = vsel %vm1953, %v1965, %v1967
  %v1969 = vrot.slane %v1932, 1
  %v1970 = vsel %vm1953, %v1967, %v1969
  %v1979 = vsel %vm302, %v1956, 0.0
  %v1980 = vsel %vm302, %v1958, 0.0
  %v1981 = vadd.f32 %v1979, %v1980
  %v1982 = vsel %vm302, %v1960, 0.0
  %v1983 = vadd.f32 %v1981, %v1982
  %v1984 = vsel %vm302, %v1962, 0.0
  %v1985 = vadd.f32 %v1983, %v1984
  %v1986 = vsel %vm302, %v1964, 0.0
  %v1987 = vadd.f32 %v1985, %v1986
  %v1988 = vsel %vm302, %v1966, 0.0
  %v1989 = vadd.f32 %v1987, %v1988
  %v1990 = vsel %vm302, %v1968, 0.0
  %v1991 = vadd.f32 %v1989, %v1990
  %v1992 = vsel %vm302, %v1970, 0.0
  %v1993 = vadd.f32 %v1991, %v1992
  %v1994 = vrot.slane %v1993, 4
  %v1995 = vadd.f32 %v1993, %v1994
  %v1996 = vrot.slane %v1995, 2
  %v1997 = vadd.f32 %v1995, %v1996
  %v1998 = vrot.slane %v1997, 1
  %v1999 = vadd.f32 %v1997, %v1998
  %v2000 = vmul.f32 %v1924, %v1924
  %v2001 = vmul.f32 %v1925, %v1925
  %v2002 = vmul.f32 %v1926, %v1926
  %v2003 = vmul.f32 %v1927, %v1927
  %v2004 = vmul.f32 %v1928, %v1928
  %v2005 = vmul.f32 %v1929, %v1929
  %v2006 = vmul.f32 %v1930, %v1930
  %v2007 = vmul.f32 %v1931, %v1931
  %v2008 = vmul.f32 %v1932, %v1932
  %v2018 = vrot.slane %v2000, 1
  %v2019 = vrot.slane %v2001, 1
  %v2020 = vsel %vm1953, %v2018, %v2019
  %v2021 = vrot.slane %v2002, 1
  %v2022 = vsel %vm1953, %v2019, %v2021
  %v2023 = vrot.slane %v2003, 1
  %v2024 = vsel %vm1953, %v2021, %v2023
  %v2025 = vrot.slane %v2004, 1
  %v2026 = vsel %vm1953, %v2023, %v2025
  %v2027 = vrot.slane %v2005, 1
  %v2028 = vsel %vm1953, %v2025, %v2027
  %v2029 = vrot.slane %v2006, 1
  %v2030 = vsel %vm1953, %v2027, %v2029
  %v2031 = vrot.slane %v2007, 1
  %v2032 = vsel %vm1953, %v2029, %v2031
  %v2033 = vrot.slane %v2008, 1
  %v2034 = vsel %vm1953, %v2031, %v2033
  %v2043 = vsel %vm302, %v2020, 0.0
  %v2044 = vsel %vm302, %v2022, 0.0
  %v2045 = vadd.f32 %v2043, %v2044
  %v2046 = vsel %vm302, %v2024, 0.0
  %v2047 = vadd.f32 %v2045, %v2046
  %v2048 = vsel %vm302, %v2026, 0.0
  %v2049 = vadd.f32 %v2047, %v2048
  %v2050 = vsel %vm302, %v2028, 0.0
  %v2051 = vadd.f32 %v2049, %v2050
  %v2052 = vsel %vm302, %v2030, 0.0
  %v2053 = vadd.f32 %v2051, %v2052
  %v2054 = vsel %vm302, %v2032, 0.0
  %v2055 = vadd.f32 %v2053, %v2054
  %v2056 = vsel %vm302, %v2034, 0.0
  %v2057 = vadd.f32 %v2055, %v2056
  %v2058 = vrot.slane %v2057, 4
  %v2059 = vadd.f32 %v2057, %v2058
  %v2060 = vrot.slane %v2059, 2
  %v2061 = vadd.f32 %v2059, %v2060
  %v2062 = vrot.slane %v2061, 1
  %v2063 = vadd.f32 %v2061, %v2062
  %vm2064 = vcmask 1040384
  %v2065 = vsel %vm2064, %v1999, %v2063
  %v2067 = vsel %vm302, %v2065, 0
  %2069 = vmatpush.msra.mxu0 0.0
  %2070 = vmatpush.msra.mxu0 0.0
  %2071 = vmatpush.msra.mxu0 0.0
  %2072 = vmatpush.msra.mxu0 0.0
  %2073 = vmatpush.msra.mxu0 0.0
  %2074 = vmatpush.msra.mxu0 0.0
  %2075 = vmatpush.msra.mxu0 0.0
  %2076 = vmatpush.msra.mxu0 0.0
  %2077 = vmatpush.msra.mxu0 0.0
  %2078 = vmatpush.msra.mxu0 0.0
  %2079 = vmatpush.msra.mxu0 0.0
  %2080 = vmatpush.msra.mxu0 0.0
  %2081 = vmatpush.msra.mxu0 0.0
  %2082 = vmatpush.msra.mxu0 0.0
  %2083 = vmatpush.msra.mxu0 %v213
  %2084 = vmatpush.msra.mxu0 %v212
  %2085 = vmatmul.f32.gmra.mxu0 %v2067
  %v2086 = vpop.f32.mrf.mxu0
  %v2087 = vadd.f32 0.0, %v2086
  %2088 = vdwg.mxu0
  %v2089 = vrcp.pop 256.0
  %v2090 = vmul.f32 256.0, %v2089
  %v2091 = vsub.f32 1.0, %v2090
  %v2092 = vmul.f32 %v2089, %v2091
  %v2093 = vadd.f32 %v2089, %v2092
  %vm2094 = vweird.f32 %v2089
  %v2095 = vsel %vm2094, %v2089, %v2093
  %v2096 = vmul.f32 %v2087, %v2095
  %v2097 = vmul.f32 %v2096, %v2096
  %v2099 = vrot.slane %v2097, 7
  %v2101 = vsub.f32 %v2096, %v2099
  %v2102 = vadd.f32 %v2101, 1e-05
  %v2103 = vrsqrt.pop %v2102
  %v2104 = vmul.f32 %v2103, %v2102
  %v2105 = vmul.f32 %v2104, %v2103
  %v2106 = vmul.f32 0.5, %v2105
  %v2107 = vsub.f32 1.5, %v2106
  %v2108 = vmul.f32 %v2103, %v2107
  %vm2109 = vweird.f32 %v2102
  %vm2110 = vweird.f32 %v2103
  %vm2111 = vmor %vm2109, %vm2110
  %v2112 = vsel %vm2111, %v2103, %v2108
  %v2113 = vsel %vm2064, %v2096, %v2112
  %vm2114 = vcmask 31744
  %v2116 = vsel %vm2114, %v2113, 0
  %vm2118 = vcmask 1043456
  %v2120 = vsel %vm2118, %v214, 0
  %2122 = vmatpush.msra.mxu0 0.0
  %2123 = vmatpush.msra.mxu0 0.0
  %2124 = vmatpush.msra.mxu0 0.0
  %2125 = vmatpush.msra.mxu0 0.0
  %2126 = vmatpush.msra.mxu0 0.0
  %2127 = vmatpush.msra.mxu0 0.0
  %2128 = vmatpush.msra.mxu0 0.0
  %2129 = vmatpush.msra.mxu0 0.0
  %2130 = vmatpush.msra.mxu0 0.0
  %2131 = vmatpush.msra.mxu0 0.0
  %2132 = vmatpush.msra.mxu0 0.0
  %2133 = vmatpush.msra.mxu0 0.0
  %2134 = vmatpush.msra.mxu0 0.0
  %2135 = vmatpush.msra.mxu0 0.0
  %2136 = vmatpush.msra.mxu0 0.0
  %2137 = vmatpush.msra.mxu0 %v2120
  %2138 = vmatmul.f32.gmra.mxu0 %v2116
  %v2139 = vpop.f32.mrf.mxu0
  %v2140 = vadd.f32 0.0, %v2139
  %2141 = vdwg.mxu0
  %v2143 = vperm.slane %v1942, 0
  %v2145 = vmul.f32 %v2140, %v2143
  %v2147 = vrot.slane %v2145, 1
  %v2149 = vmul.f32 %v2140, %v2147
  %v2150 = vsub.f32 %v1943, %v2149
  %v2151 = vperm.slane %v2145, 1
  %v2152 = vmul.f32 %v1924, %v2151
  %v2153 = vmul.f32 %v1925, %v2151
  %v2154 = vmul.f32 %v1926, %v2151
  %v2155 = vmul.f32 %v1927, %v2151
  %v2156 = vmul.f32 %v1928, %v2151
  %v2157 = vmul.f32 %v1929, %v2151
  %v2158 = vmul.f32 %v1930, %v2151
  %v2159 = vmul.f32 %v1931, %v2151
  %v2160 = vmul.f32 %v1932, %v2151
  %v2162 = vperm.slane %v2150, 0
  %v2164 = vadd.f32 %v2152, %v2162
  %v2165 = vadd.f32 %v2153, %v2162
  %v2166 = vadd.f32 %v2154, %v2162
  %v2167 = vadd.f32 %v2155, %v2162
  %v2168 = vadd.f32 %v2156, %v2162
  %v2169 = vadd.f32 %v2157, %v2162
  %v2170 = vadd.f32 %v2158, %v2162
  %v2171 = vadd.f32 %v2159, %v2162
  %v2172 = vadd.f32 %v2160, %v2162
  %v2173 = vmax.f32 %v2164, 0.0
  %v2174 = vmax.f32 %v2165, 0.0
  %v2175 = vmax.f32 %v2166, 0.0
  %v2176 = vmax.f32 %v2167, 0.0
  %v2177 = vmax.f32 %v2168, 0.0
  %v2178 = vmax.f32 %v2169, 0.0
  %v2179 = vmax.f32 %v2170, 0.0
  %v2180 = vmax.f32 %v2171, 0.0
  %v2181 = vmax.f32 %v2172, 0.0
  %v2182 = vpack.c.bf16 %v2173, %v2173
  %v2183 = vpack.c.bf16 %v2174, %v2174
  %v2184 = vpack.c.bf16 %v2175, %v2175
  %v2185 = vpack.c.bf16 %v2176, %v2176
  %v2186 = vpack.c.bf16 %v2177, %v2177
  %v2187 = vpack.c.bf16 %v2178, %v2178
  %v2188 = vpack.c.bf16 %v2179, %v2179
  %v2189 = vpack.c.bf16 %v2180, %v2180
  %v2190 = vpack.c.bf16 %v2181, %v2181
  %vm2191 = vsmask.f32 256
  %vm2192 = vsmask.f32 4368
  %vm2193 = vmor %vm2191, %vm2192
  %v2195 = vshrl.u32 %v2182, 16
  %v2197 = vrot.slane %v2195, 7
  %v2198 = vshll.u32 %v2182, 16
  %v2200 = vor.u32 %v2197, %v2198
  %v2201 = vrot.slane %v2197, 4
  %v2203 = vshrl.u32 %v2183, 16
  %v2205 = vrot.slane %v2203, 7
  %v2206 = vshll.u32 %v2183, 16
  %v2208 = vor.u32 %v2205, %v2206
  %v2209 = vsel %vm2193, %v2201, %v2208
  %v2210 = vrot.slane %v2205, 4
  %v2212 = vshrl.u32 %v2184, 16
  %v2214 = vrot.slane %v2212, 7
  %v2215 = vshll.u32 %v2184, 16
  %v2217 = vor.u32 %v2214, %v2215
  %v2218 = vsel %vm2193, %v2210, %v2217
  %v2219 = vrot.slane %v2214, 4
  %v2221 = vshrl.u32 %v2185, 16
  %v2223 = vrot.slane %v2221, 7
  %v2224 = vshll.u32 %v2185, 16
  %v2226 = vor.u32 %v2223, %v2224
  %v2227 = vsel %vm2193, %v2219, %v2226
  %v2228 = vrot.slane %v2223, 4
  %v2230 = vshrl.u32 %v2186, 16
  %v2232 = vrot.slane %v2230, 7
  %v2233 = vshll.u32 %v2186, 16
  %v2235 = vor.u32 %v2232, %v2233
  %v2236 = vsel %vm2193, %v2228, %v2235
  %v2237 = vrot.slane %v2232, 4
  %v2239 = vshrl.u32 %v2187, 16
  %v2241 = vrot.slane %v2239, 7
  %v2242 = vshll.u32 %v2187, 16
  %v2244 = vor.u32 %v2241, %v2242
  %v2245 = vsel %vm2193, %v2237, %v2244
  %v2246 = vrot.slane %v2241, 4
  %v2248 = vshrl.u32 %v2188, 16
  %v2250 = vrot.slane %v2248, 7
  %v2251 = vshll.u32 %v2188, 16
  %v2253 = vor.u32 %v2250, %v2251
  %v2254 = vsel %vm2193, %v2246, %v2253
  %v2255 = vrot.slane %v2250, 4
  %v2257 = vshrl.u32 %v2189, 16
  %v2259 = vrot.slane %v2257, 7
  %v2260 = vshll.u32 %v2189, 16
  %v2262 = vor.u32 %v2259, %v2260
  %v2263 = vsel %vm2193, %v2255, %v2262
  %v2264 = vrot.slane %v2259, 4
  %v2266 = vshll.u32 %v2190, 16
  %v2268 = vsel %vm2193, %v2264, %v2266
  %2278 = vst.msk [vmem:[#allocation3 + $0x8] sm:$0xe] %vm138, %v2200
  %2279 = vst.msk [vmem:[#allocation3 + $0xc] sm:$0xf] %vm39, %v2209
  %2280 = vst.msk [vmem:[#allocation3 + $0x10] sm:$0xf] %vm39, %v2218
  %2281 = vst.msk [vmem:[#allocation3 + $0x14] sm:$0xf] %vm39, %v2227
  %2282 = vst.msk [vmem:[#allocation3 + $0x18] sm:$0xf] %vm39, %v2236
  %2283 = vst.msk [vmem:[#allocation3 + $0x1c] sm:$0xf] %vm39, %v2245
  %2284 = vst.msk [vmem:[#allocation3 + $0x20] sm:$0xf] %vm39, %v2254
  %2285 = vst.msk [vmem:[#allocation3 + $0x24] sm:$0xf] %vm39, %v2263
  %2286 = vst.msk [vmem:[#allocation3 + $0x28] sm:$0x1] %vm147, %v2268
  %v2287 = vld [vmem:[%s7] sm:$0x1]
  %v2288 = vld [vmem:[%s8] sm:$0x1]
  %vm2298 = vcmask 1044480
  %v2299 = vrot.slane %v1933, 3
  %v2300 = vrot.slane %v1934, 3
  %v2301 = vsel %vm2298, %v2299, %v2300
  %v2302 = vrot.slane %v1935, 3
  %v2303 = vsel %vm2298, %v2300, %v2302
  %v2304 = vrot.slane %v1936, 3
  %v2305 = vsel %vm2298, %v2302, %v2304
  %v2306 = vrot.slane %v1937, 3
  %v2307 = vsel %vm2298, %v2304, %v2306
  %v2308 = vrot.slane %v1938, 3
  %v2309 = vsel %vm2298, %v2306, %v2308
  %v2310 = vrot.slane %v1939, 3
  %v2311 = vsel %vm2298, %v2308, %v2310
  %v2312 = vrot.slane %v1940, 3
  %v2313 = vsel %vm2298, %v2310, %v2312
  %v2314 = vrot.slane %v1941, 3
  %v2315 = vsel %vm2298, %v2312, %v2314
  %v2324 = vsel %vm302, %v2301, 0.0
  %v2325 = vsel %vm302, %v2303, 0.0
  %v2326 = vadd.f32 %v2324, %v2325
  %v2327 = vsel %vm302, %v2305, 0.0
  %v2328 = vadd.f32 %v2326, %v2327
  %v2329 = vsel %vm302, %v2307, 0.0
  %v2330 = vadd.f32 %v2328, %v2329
  %v2331 = vsel %vm302, %v2309, 0.0
  %v2332 = vadd.f32 %v2330, %v2331
  %v2333 = vsel %vm302, %v2311, 0.0
  %v2334 = vadd.f32 %v2332, %v2333
  %v2335 = vsel %vm302, %v2313, 0.0
  %v2336 = vadd.f32 %v2334, %v2335
  %v2337 = vsel %vm302, %v2315, 0.0
  %v2338 = vadd.f32 %v2336, %v2337
  %v2339 = vrot.slane %v2338, 4
  %v2340 = vadd.f32 %v2338, %v2339
  %v2341 = vrot.slane %v2340, 2
  %v2342 = vadd.f32 %v2340, %v2341
  %v2343 = vrot.slane %v2342, 1
  %v2344 = vadd.f32 %v2342, %v2343
  %v2345 = vmul.f32 %v1933, %v1933
  %v2346 = vmul.f32 %v1934, %v1934
  %v2347 = vmul.f32 %v1935, %v1935
  %v2348 = vmul.f32 %v1936, %v1936
  %v2349 = vmul.f32 %v1937, %v1937
  %v2350 = vmul.f32 %v1938, %v1938
  %v2351 = vmul.f32 %v1939, %v1939
  %v2352 = vmul.f32 %v1940, %v1940
  %v2353 = vmul.f32 %v1941, %v1941
  %v2363 = vrot.slane %v2345, 3
  %v2364 = vrot.slane %v2346, 3
  %v2365 = vsel %vm2298, %v2363, %v2364
  %v2366 = vrot.slane %v2347, 3
  %v2367 = vsel %vm2298, %v2364, %v2366
  %v2368 = vrot.slane %v2348, 3
  %v2369 = vsel %vm2298, %v2366, %v2368
  %v2370 = vrot.slane %v2349, 3
  %v2371 = vsel %vm2298, %v2368, %v2370
  %v2372 = vrot.slane %v2350, 3
  %v2373 = vsel %vm2298, %v2370, %v2372
  %v2374 = vrot.slane %v2351, 3
  %v2375 = vsel %vm2298, %v2372, %v2374
  %v2376 = vrot.slane %v2352, 3
  %v2377 = vsel %vm2298, %v2374, %v2376
  %v2378 = vrot.slane %v2353, 3
  %v2379 = vsel %vm2298, %v2376, %v2378
  %v2388 = vsel %vm302, %v2365, 0.0
  %v2389 = vsel %vm302, %v2367, 0.0
  %v2390 = vadd.f32 %v2388, %v2389
  %v2391 = vsel %vm302, %v2369, 0.0
  %v2392 = vadd.f32 %v2390, %v2391
  %v2393 = vsel %vm302, %v2371, 0.0
  %v2394 = vadd.f32 %v2392, %v2393
  %v2395 = vsel %vm302, %v2373, 0.0
  %v2396 = vadd.f32 %v2394, %v2395
  %v2397 = vsel %vm302, %v2375, 0.0
  %v2398 = vadd.f32 %v2396, %v2397
  %v2399 = vsel %vm302, %v2377, 0.0
  %v2400 = vadd.f32 %v2398, %v2399
  %v2401 = vsel %vm302, %v2379, 0.0
  %v2402 = vadd.f32 %v2400, %v2401
  %v2403 = vrot.slane %v2402, 4
  %v2404 = vadd.f32 %v2402, %v2403
  %v2405 = vrot.slane %v2404, 2
  %v2406 = vadd.f32 %v2404, %v2405
  %v2407 = vrot.slane %v2406, 1
  %v2408 = vadd.f32 %v2406, %v2407
  %v2409 = vsel %vm2064, %v2344, %v2408
  %v2411 = vsel %vm302, %v2409, 0
  %2413 = vmatpush.msra.mxu0 0.0
  %2414 = vmatpush.msra.mxu0 0.0
  %2415 = vmatpush.msra.mxu0 0.0
  %2416 = vmatpush.msra.mxu0 0.0
  %2417 = vmatpush.msra.mxu0 0.0
  %2418 = vmatpush.msra.mxu0 0.0
  %2419 = vmatpush.msra.mxu0 0.0
  %2420 = vmatpush.msra.mxu0 0.0
  %2421 = vmatpush.msra.mxu0 0.0
  %2422 = vmatpush.msra.mxu0 0.0
  %2423 = vmatpush.msra.mxu0 0.0
  %2424 = vmatpush.msra.mxu0 0.0
  %2425 = vmatpush.msra.mxu0 0.0
  %2426 = vmatpush.msra.mxu0 0.0
  %2427 = vmatpush.msra.mxu0 %v213
  %2428 = vmatpush.msra.mxu0 %v212
  %2429 = vmatmul.f32.gmra.mxu0 %v2411
  %v2430 = vpop.f32.mrf.mxu0
  %v2431 = vadd.f32 0.0, %v2430
  %2432 = vdwg.mxu0
  %v2433 = vmul.f32 %v2431, %v2095
  %v2434 = vmul.f32 %v2433, %v2433
  %v2436 = vrot.slane %v2434, 7
  %v2438 = vsub.f32 %v2433, %v2436
  %v2439 = vadd.f32 %v2438, 1e-05
  %v2440 = vrsqrt.pop %v2439
  %v2441 = vmul.f32 %v2440, %v2439
  %v2442 = vmul.f32 %v2441, %v2440
  %v2443 = vmul.f32 0.5, %v2442
  %v2444 = vsub.f32 1.5, %v2443
  %v2445 = vmul.f32 %v2440, %v2444
  %vm2446 = vweird.f32 %v2439
  %vm2447 = vweird.f32 %v2440
  %vm2448 = vmor %vm2446, %vm2447
  %v2449 = vsel %vm2448, %v2440, %v2445
  %v2450 = vsel %vm2064, %v2433, %v2449
  %v2452 = vsel %vm2114, %v2450, 0
  %2454 = vmatpush.msra.mxu0 0.0
  %2455 = vmatpush.msra.mxu0 0.0
  %2456 = vmatpush.msra.mxu0 0.0
  %2457 = vmatpush.msra.mxu0 0.0
  %2458 = vmatpush.msra.mxu0 0.0
  %2459 = vmatpush.msra.mxu0 0.0
  %2460 = vmatpush.msra.mxu0 0.0
  %2461 = vmatpush.msra.mxu0 0.0
  %2462 = vmatpush.msra.mxu0 0.0
  %2463 = vmatpush.msra.mxu0 0.0
  %2464 = vmatpush.msra.mxu0 0.0
  %2465 = vmatpush.msra.mxu0 0.0
  %2466 = vmatpush.msra.mxu0 0.0
  %2467 = vmatpush.msra.mxu0 0.0
  %2468 = vmatpush.msra.mxu0 0.0
  %2469 = vmatpush.msra.mxu0 %v2120
  %2470 = vmatmul.f32.gmra.mxu0 %v2452
  %v2471 = vpop.f32.mrf.mxu0
  %v2472 = vadd.f32 0.0, %v2471
  %2473 = vdwg.mxu0
  %v2475 = vperm.slane %v2287, 0
  %v2477 = vmul.f32 %v2472, %v2475
  %v2479 = vrot.slane %v2477, 1
  %v2481 = vmul.f32 %v2472, %v2479
  %v2482 = vsub.f32 %v2288, %v2481
  %v2483 = vperm.slane %v2477, 1
  %v2484 = vmul.f32 %v1933, %v2483
  %v2485 = vmul.f32 %v1934, %v2483
  %v2486 = vmul.f32 %v1935, %v2483
  %v2487 = vmul.f32 %v1936, %v2483
  %v2488 = vmul.f32 %v1937, %v2483
  %v2489 = vmul.f32 %v1938, %v2483
  %v2490 = vmul.f32 %v1939, %v2483
  %v2491 = vmul.f32 %v1940, %v2483
  %v2492 = vmul.f32 %v1941, %v2483
  %v2494 = vperm.slane %v2482, 0
  %v2496 = vadd.f32 %v2484, %v2494
  %v2497 = vadd.f32 %v2485, %v2494
  %v2498 = vadd.f32 %v2486, %v2494
  %v2499 = vadd.f32 %v2487, %v2494
  %v2500 = vadd.f32 %v2488, %v2494
  %v2501 = vadd.f32 %v2489, %v2494
  %v2502 = vadd.f32 %v2490, %v2494
  %v2503 = vadd.f32 %v2491, %v2494
  %v2504 = vadd.f32 %v2492, %v2494
  %v2505 = vmax.f32 %v2496, 0.0
  %v2506 = vmax.f32 %v2497, 0.0
  %v2507 = vmax.f32 %v2498, 0.0
  %v2508 = vmax.f32 %v2499, 0.0
  %v2509 = vmax.f32 %v2500, 0.0
  %v2510 = vmax.f32 %v2501, 0.0
  %v2511 = vmax.f32 %v2502, 0.0
  %v2512 = vmax.f32 %v2503, 0.0
  %v2513 = vmax.f32 %v2504, 0.0
  %v2514 = vpack.c.bf16 %v2505, %v2505
  %v2515 = vpack.c.bf16 %v2506, %v2506
  %v2516 = vpack.c.bf16 %v2507, %v2507
  %v2517 = vpack.c.bf16 %v2508, %v2508
  %v2518 = vpack.c.bf16 %v2509, %v2509
  %v2519 = vpack.c.bf16 %v2510, %v2510
  %v2520 = vpack.c.bf16 %v2511, %v2511
  %v2521 = vpack.c.bf16 %v2512, %v2512
  %v2522 = vpack.c.bf16 %v2513, %v2513
  %v2524 = vshrl.u32 %v2514, 16
  %v2526 = vrot.slane %v2524, 7
  %v2527 = vshll.u32 %v2514, 16
  %v2529 = vor.u32 %v2526, %v2527
  %v2530 = vrot.slane %v2526, 4
  %v2532 = vshrl.u32 %v2515, 16
  %v2534 = vrot.slane %v2532, 7
  %v2535 = vshll.u32 %v2515, 16
  %v2537 = vor.u32 %v2534, %v2535
  %v2538 = vsel %vm2193, %v2530, %v2537
  %v2539 = vrot.slane %v2534, 4
  %v2541 = vshrl.u32 %v2516, 16
  %v2543 = vrot.slane %v2541, 7
  %v2544 = vshll.u32 %v2516, 16
  %v2546 = vor.u32 %v2543, %v2544
  %v2547 = vsel %vm2193, %v2539, %v2546
  %v2548 = vrot.slane %v2543, 4
  %v2550 = vshrl.u32 %v2517, 16
  %v2552 = vrot.slane %v2550, 7
  %v2553 = vshll.u32 %v2517, 16
  %v2555 = vor.u32 %v2552, %v2553
  %v2556 = vsel %vm2193, %v2548, %v2555
  %v2557 = vrot.slane %v2552, 4
  %v2559 = vshrl.u32 %v2518, 16
  %v2561 = vrot.slane %v2559, 7
  %v2562 = vshll.u32 %v2518, 16
  %v2564 = vor.u32 %v2561, %v2562
  %v2565 = vsel %vm2193, %v2557, %v2564
  %v2566 = vrot.slane %v2561, 4
  %v2568 = vshrl.u32 %v2519, 16
  %v2570 = vrot.slane %v2568, 7
  %v2571 = vshll.u32 %v2519, 16
  %v2573 = vor.u32 %v2570, %v2571
  %v2574 = vsel %vm2193, %v2566, %v2573
  %v2575 = vrot.slane %v2570, 4
  %v2577 = vshrl.u32 %v2520, 16
  %v2579 = vrot.slane %v2577, 7
  %v2580 = vshll.u32 %v2520, 16
  %v2582 = vor.u32 %v2579, %v2580
  %v2583 = vsel %vm2193, %v2575, %v2582
  %v2584 = vrot.slane %v2579, 4
  %v2586 = vshrl.u32 %v2521, 16
  %v2588 = vrot.slane %v2586, 7
  %v2589 = vshll.u32 %v2521, 16
  %v2591 = vor.u32 %v2588, %v2589
  %v2592 = vsel %vm2193, %v2584, %v2591
  %v2593 = vrot.slane %v2588, 4
  %v2595 = vshrl.u32 %v2522, 16
  %v2597 = vrot.slane %v2595, 7
  %v2598 = vshll.u32 %v2522, 16
  %v2600 = vor.u32 %v2597, %v2598
  %v2601 = vsel %vm2193, %v2593, %v2600
  %2611 = vst.msk [vmem:[#allocation3 + $0x30] sm:$0xc] %vm201, %v2529
  %2612 = vst.msk [vmem:[#allocation3 + $0x34] sm:$0xf] %vm39, %v2538
  %2613 = vst.msk [vmem:[#allocation3 + $0x38] sm:$0xf] %vm39, %v2547
  %2614 = vst.msk [vmem:[#allocation3 + $0x3c] sm:$0xf] %vm39, %v2556
  %2615 = vst.msk [vmem:[#allocation3 + $0x40] sm:$0xf] %vm39, %v2565
  %2616 = vst.msk [vmem:[#allocation3 + $0x44] sm:$0xf] %vm39, %v2574
  %2617 = vst.msk [vmem:[#allocation3 + $0x48] sm:$0xf] %vm39, %v2583
  %2618 = vst.msk [vmem:[#allocation3 + $0x4c] sm:$0xf] %vm39, %v2592
  %2619 = vst.msk [vmem:[#allocation3 + $0x50] sm:$0x3] %vm210, %v2601
  %v2620 = vld [vmem:[#allocation3] sm:$0xf]
  %v2621 = vld [vmem:[#allocation3 + $0x4] sm:$0xf]
  %v2622 = vld [vmem:[#allocation3 + $0x8] sm:$0xf]
  %v2623 = vld [vmem:[#allocation3 + $0xc] sm:$0xf]
  %v2624 = vld [vmem:[#allocation3 + $0x10] sm:$0xf]
  %v2625 = vld [vmem:[#allocation3 + $0x14] sm:$0xf]
  %v2626 = vld [vmem:[#allocation3 + $0x18] sm:$0xf]
  %v2627 = vld [vmem:[#allocation3 + $0x1c] sm:$0xf]
  %v2628 = vld [vmem:[#allocation3 + $0x20] sm:$0xf]
  %v2629 = vld [vmem:[#allocation3 + $0x24] sm:$0xf]
  %v2630 = vld [vmem:[#allocation3 + $0x28] sm:$0xf]
  %v2631 = vld [vmem:[#allocation3 + $0x2c] sm:$0xf]
  %v2632 = vld [vmem:[#allocation3 + $0x30] sm:$0xf]
  %v2633 = vld [vmem:[#allocation3 + $0x34] sm:$0xf]
  %v2634 = vld [vmem:[#allocation3 + $0x38] sm:$0xf]
  %v2635 = vld [vmem:[#allocation3 + $0x3c] sm:$0xf]
  %v2636 = vld [vmem:[#allocation3 + $0x40] sm:$0xf]
  %v2637 = vld [vmem:[#allocation3 + $0x44] sm:$0xf]
  %v2638 = vld [vmem:[#allocation3 + $0x48] sm:$0xf]
  %v2639 = vld [vmem:[#allocation3 + $0x4c] sm:$0xf]
  %v2640 = vld [vmem:[#allocation3 + $0x50] sm:$0x3]
  %v2641 = vld [vmem:[%s2] sm:$0xf]
  %v2642 = vld [vmem:[%s2 + $0x4] sm:$0xf]
  %v2643 = vld [vmem:[#allocation3 + $0x50] sm:$0xf]
  %v2644 = vld [vmem:[#allocation3 + $0x54] sm:$0x3]
  %s2645 = scalar_lea.vmem %s2, 24
  %v2646 = vld [vmem:[%s2645] sm:$0xf]
  %v2647 = vld [vmem:[%s2645 + $0x4] sm:$0xf]
  %v2669 = vunpack.c.l.b16 %v2621
  %v2670 = vunpack.c.l.b16 %v2622
  %v2671 = vunpack.c.l.b16 %v2623
  %v2672 = vunpack.c.l.b16 %v2624
  %v2673 = vunpack.c.l.b16 %v2625
  %v2674 = vunpack.c.l.b16 %v2626
  %v2675 = vunpack.c.l.b16 %v2627
  %v2676 = vunpack.c.l.b16 %v2628
  %v2677 = vunpack.c.l.b16 %v2629
  %v2678 = vunpack.c.l.b16 %v2630
  %v2679 = vunpack.c.l.b16 %v2631
  %v2680 = vunpack.c.l.b16 %v2632
  %v2681 = vunpack.c.l.b16 %v2633
  %v2682 = vunpack.c.l.b16 %v2634
  %v2683 = vunpack.c.l.b16 %v2635
  %v2684 = vunpack.c.l.b16 %v2636
  %v2685 = vunpack.c.l.b16 %v2637
  %v2686 = vunpack.c.l.b16 %v2638
  %v2687 = vunpack.c.l.b16 %v2639
  %v2688 = vunpack.c.l.b16 %v2643
  %v2689 = vunpack.c.l.b16 %v2644
  %v2690 = vpack.c.b16 %v2670, %v2669
  %v2691 = vpack.c.b16 %v2672, %v2671
  %v2692 = vpack.c.b16 %v2674, %v2673
  %v2693 = vpack.c.b16 %v2676, %v2675
  %v2694 = vpack.c.b16 %v2678, %v2677
  %v2695 = vpack.c.b16 %v2680, %v2679
  %v2696 = vpack.c.b16 %v2682, %v2681
  %v2697 = vpack.c.b16 %v2684, %v2683
  %v2698 = vpack.c.b16 %v2686, %v2685
  %v2699 = vpack.c.b16 %v2688, %v2687
  %v2700 = vpack.c.b16 %v2689, %v2689
  %v2703 = vunpack.c.l.b16 %v2646
  %v2704 = vunpack.c.l.b16 %v2647
  %v2705 = vpack.c.b16 %v2704, %v2703
  %v2708 = vsel %vm302, %v2690, 0
  %v2711 = vsel %vm302, %v2691, 0
  %v2714 = vsel %vm302, %v2692, 0
  %v2717 = vsel %vm302, %v2693, 0
  %v2720 = vsel %vm302, %v2694, 0
  %v2723 = vsel %vm302, %v2695, 0
  %v2726 = vsel %vm302, %v2696, 0
  %v2729 = vsel %vm302, %v2697, 0
  %v2732 = vsel %vm302, %v2698, 0
  %v2735 = vsel %vm302, %v2699, 0
  %v2738 = vsel %vm302, %v2700, 0
  %2740 = vmatpush.bf16.msra.mxu0 0
  %2741 = vmatpush.bf16.msra.mxu0 0
  %2742 = vmatpush.bf16.msra.mxu0 0
  %2743 = vmatpush.bf16.msra.mxu0 0
  %2744 = vmatpush.bf16.msra.mxu0 0
  %2745 = vmatpush.bf16.msra.mxu0 0
  %2746 = vmatpush.bf16.msra.mxu0 0
  %2747 = vmatpush.bf16.msra.mxu0 %v2705
  %2748 = vmatmul.bf16.gmra.mxu0 %v2708
  %v2749 = vpop.f32.mrf.mxu0
  %v2750 = vpop.f32.mrf.mxu0
  %v2751 = vadd.f32 0.0, %v2750
  %2752 = vmatmul.bf16.gmra.mxu0 %v2711
  %v2753 = vpop.f32.mrf.mxu0
  %v2754 = vadd.f32 0.0, %v2753
  %v2755 = vpop.f32.mrf.mxu0
  %v2756 = vadd.f32 0.0, %v2755
  %2757 = vmatmul.bf16.gmra.mxu0 %v2714
  %v2758 = vpop.f32.mrf.mxu0
  %v2759 = vadd.f32 0.0, %v2758
  %v2760 = vpop.f32.mrf.mxu0
  %v2761 = vadd.f32 0.0, %v2760
  %2762 = vmatmul.bf16.gmra.mxu0 %v2717
  %v2763 = vpop.f32.mrf.mxu0
  %v2764 = vadd.f32 0.0, %v2763
  %v2765 = vpop.f32.mrf.mxu0
  %v2766 = vadd.f32 0.0, %v2765
  %2767 = vmatmul.bf16.gmra.mxu0 %v2720
  %v2768 = vpop.f32.mrf.mxu0
  %v2769 = vadd.f32 0.0, %v2768
  %v2770 = vpop.f32.mrf.mxu0
  %v2771 = vadd.f32 0.0, %v2770
  %2772 = vmatmul.bf16.gmra.mxu0 %v2723
  %v2773 = vpop.f32.mrf.mxu0
  %v2774 = vpop.f32.mrf.mxu0
  %v2775 = vadd.f32 0.0, %v2774
  %2776 = vmatmul.bf16.gmra.mxu0 %v2726
  %v2777 = vpop.f32.mrf.mxu0
  %v2778 = vadd.f32 0.0, %v2777
  %v2779 = vpop.f32.mrf.mxu0
  %v2780 = vadd.f32 0.0, %v2779
  %2781 = vmatmul.bf16.gmra.mxu0 %v2729
  %v2782 = vpop.f32.mrf.mxu0
  %v2783 = vadd.f32 0.0, %v2782
  %v2784 = vpop.f32.mrf.mxu0
  %v2785 = vadd.f32 0.0, %v2784
  %2786 = vmatmul.bf16.gmra.mxu0 %v2732
  %v2787 = vpop.f32.mrf.mxu0
  %v2788 = vadd.f32 0.0, %v2787
  %v2789 = vpop.f32.mrf.mxu0
  %v2790 = vadd.f32 0.0, %v2789
  %2791 = vmatmul.bf16.gmra.mxu0 %v2735
  %v2792 = vpop.f32.mrf.mxu0
  %v2793 = vadd.f32 0.0, %v2792
  %v2794 = vpop.f32.mrf.mxu0
  %v2795 = vadd.f32 0.0, %v2794
  %2796 = vmatmul.bf16.gmra.mxu0 %v2738
  %v2797 = vpop.f32.mrf.mxu0
  %v2798 = vpop.f32.mrf.mxu0
  %2799 = vdwg.mxu0
  %v2802 = vunpack.c.l.b16 %v2620
  %v2803 = vunpack.c.l.b16 %v2640
  %v2804 = vpack.c.b16 %v2669, %v2802
  %v2805 = vpack.c.b16 %v2671, %v2670
  %v2806 = vpack.c.b16 %v2673, %v2672
  %v2807 = vpack.c.b16 %v2675, %v2674
  %v2808 = vpack.c.b16 %v2677, %v2676
  %v2809 = vpack.c.b16 %v2679, %v2678
  %v2810 = vpack.c.b16 %v2681, %v2680
  %v2811 = vpack.c.b16 %v2683, %v2682
  %v2812 = vpack.c.b16 %v2685, %v2684
  %v2813 = vpack.c.b16 %v2687, %v2686
  %v2814 = vpack.c.b16 %v2803, %v2803
  %v2817 = vunpack.c.l.b16 %v2641
  %v2818 = vunpack.c.l.b16 %v2642
  %v2819 = vpack.c.b16 %v2818, %v2817
  %v2822 = vsel %vm302, %v2804, 0
  %v2825 = vsel %vm302, %v2805, 0
  %v2828 = vsel %vm302, %v2806, 0
  %v2831 = vsel %vm302, %v2807, 0
  %v2834 = vsel %vm302, %v2808, 0
  %v2837 = vsel %vm302, %v2809, 0
  %v2840 = vsel %vm302, %v2810, 0
  %v2843 = vsel %vm302, %v2811, 0
  %v2846 = vsel %vm302, %v2812, 0
  %v2849 = vsel %vm302, %v2813, 0
  %v2852 = vsel %vm302, %v2814, 0
  %2854 = vmatpush.bf16.msra.mxu0 0
  %2855 = vmatpush.bf16.msra.mxu0 0
  %2856 = vmatpush.bf16.msra.mxu0 0
  %2857 = vmatpush.bf16.msra.mxu0 0
  %2858 = vmatpush.bf16.msra.mxu0 0
  %2859 = vmatpush.bf16.msra.mxu0 0
  %2860 = vmatpush.bf16.msra.mxu0 0
  %2861 = vmatpush.bf16.msra.mxu0 %v2819
  %2862 = vmatmul.bf16.gmra.mxu0 %v2822
  %v2863 = vpop.f32.mrf.mxu0
  %v2864 = vpop.f32.mrf.mxu0
  %v2865 = vadd.f32 %v2751, %v2864
  %2866 = vmatmul.bf16.gmra.mxu0 %v2825
  %v2867 = vpop.f32.mrf.mxu0
  %v2868 = vadd.f32 %v2754, %v2867
  %v2869 = vpop.f32.mrf.mxu0
  %v2870 = vadd.f32 %v2756, %v2869
  %2871 = vmatmul.bf16.gmra.mxu0 %v2828
  %v2872 = vpop.f32.mrf.mxu0
  %v2873 = vadd.f32 %v2759, %v2872
  %v2874 = vpop.f32.mrf.mxu0
  %v2875 = vadd.f32 %v2761, %v2874
  %2876 = vmatmul.bf16.gmra.mxu0 %v2831
  %v2877 = vpop.f32.mrf.mxu0
  %v2878 = vadd.f32 %v2764, %v2877
  %v2879 = vpop.f32.mrf.mxu0
  %v2880 = vadd.f32 %v2766, %v2879
  %2881 = vmatmul.bf16.gmra.mxu0 %v2834
  %v2882 = vpop.f32.mrf.mxu0
  %v2883 = vadd.f32 %v2769, %v2882
  %v2884 = vpop.f32.mrf.mxu0
  %v2885 = vadd.f32 %v2771, %v2884
  %2886 = vmatmul.bf16.gmra.mxu0 %v2837
  %v2887 = vpop.f32.mrf.mxu0
  %v2888 = vpop.f32.mrf.mxu0
  %v2889 = vadd.f32 %v2775, %v2888
  %2890 = vmatmul.bf16.gmra.mxu0 %v2840
  %v2891 = vpop.f32.mrf.mxu0
  %v2892 = vadd.f32 %v2778, %v2891
  %v2893 = vpop.f32.mrf.mxu0
  %v2894 = vadd.f32 %v2780, %v2893
  %2895 = vmatmul.bf16.gmra.mxu0 %v2843
  %v2896 = vpop.f32.mrf.mxu0
  %v2897 = vadd.f32 %v2783, %v2896
  %v2898 = vpop.f32.mrf.mxu0
  %v2899 = vadd.f32 %v2785, %v2898
  %2900 = vmatmul.bf16.gmra.mxu0 %v2846
  %v2901 = vpop.f32.mrf.mxu0
  %v2902 = vadd.f32 %v2788, %v2901
  %v2903 = vpop.f32.mrf.mxu0
  %v2904 = vadd.f32 %v2790, %v2903
  %2905 = vmatmul.bf16.gmra.mxu0 %v2849
  %v2906 = vpop.f32.mrf.mxu0
  %v2907 = vadd.f32 %v2793, %v2906
  %v2908 = vpop.f32.mrf.mxu0
  %v2909 = vadd.f32 %v2795, %v2908
  %2910 = vmatmul.bf16.gmra.mxu0 %v2852
  %v2911 = vpop.f32.mrf.mxu0
  %v2912 = vpop.f32.mrf.mxu0
  %2913 = vdwg.mxu0
  %v2914 = vld [vmem:[#allocation3 + $0x8] sm:$0xf]
  %v2915 = vld [vmem:[#allocation3 + $0xc] sm:$0xf]
  %v2916 = vld [vmem:[#allocation3 + $0x10] sm:$0xf]
  %v2917 = vld [vmem:[#allocation3 + $0x14] sm:$0xf]
  %v2918 = vld [vmem:[#allocation3 + $0x18] sm:$0xf]
  %v2919 = vld [vmem:[#allocation3 + $0x1c] sm:$0xf]
  %v2920 = vld [vmem:[#allocation3 + $0x20] sm:$0xf]
  %v2921 = vld [vmem:[#allocation3 + $0x24] sm:$0xf]
  %v2922 = vld [vmem:[#allocation3 + $0x28] sm:$0xf]
  %v2923 = vld [vmem:[#allocation3 + $0x2c] sm:$0xf]
  %v2924 = vld [vmem:[#allocation3 + $0x30] sm:$0xf]
  %v2925 = vld [vmem:[#allocation3 + $0x34] sm:$0xf]
  %v2926 = vld [vmem:[#allocation3 + $0x38] sm:$0xf]
  %v2927 = vld [vmem:[#allocation3 + $0x3c] sm:$0xf]
  %v2928 = vld [vmem:[#allocation3 + $0x40] sm:$0xf]
  %v2929 = vld [vmem:[#allocation3 + $0x44] sm:$0xf]
  %v2930 = vld [vmem:[#allocation3 + $0x48] sm:$0xf]
  %v2931 = vld [vmem:[#allocation3 + $0x4c] sm:$0xf]
  %v2932 = vld [vmem:[#allocation3 + $0x50] sm:$0xf]
  %v2933 = vld [vmem:[#allocation3 + $0x54] sm:$0xf]
  %v2934 = vld [vmem:[#allocation3 + $0x58] sm:$0x3]
  %s2935 = scalar_lea.vmem %s2, 48
  %v2936 = vld [vmem:[%s2935] sm:$0xf]
  %v2937 = vld [vmem:[%s2935 + $0x4] sm:$0xf]
  %v2959 = vunpack.c.l.b16 %v2914
  %v2960 = vunpack.c.l.b16 %v2915
  %v2961 = vunpack.c.l.b16 %v2916
  %v2962 = vunpack.c.l.b16 %v2917
  %v2963 = vunpack.c.l.b16 %v2918
  %v2964 = vunpack.c.l.b16 %v2919
  %v2965 = vunpack.c.l.b16 %v2920
  %v2966 = vunpack.c.l.b16 %v2921
  %v2967 = vunpack.c.l.b16 %v2922
  %v2968 = vunpack.c.l.b16 %v2923
  %v2969 = vunpack.c.l.b16 %v2924
  %v2970 = vunpack.c.l.b16 %v2925
  %v2971 = vunpack.c.l.b16 %v2926
  %v2972 = vunpack.c.l.b16 %v2927
  %v2973 = vunpack.c.l.b16 %v2928
  %v2974 = vunpack.c.l.b16 %v2929
  %v2975 = vunpack.c.l.b16 %v2930
  %v2976 = vunpack.c.l.b16 %v2931
  %v2977 = vunpack.c.l.b16 %v2932
  %v2978 = vunpack.c.l.b16 %v2933
  %v2979 = vunpack.c.l.b16 %v2934
  %v2980 = vpack.c.b16 %v2960, %v2959
  %v2981 = vpack.c.b16 %v2962, %v2961
  %v2982 = vpack.c.b16 %v2964, %v2963
  %v2983 = vpack.c.b16 %v2966, %v2965
  %v2984 = vpack.c.b16 %v2968, %v2967
  %v2985 = vpack.c.b16 %v2970, %v2969
  %v2986 = vpack.c.b16 %v2972, %v2971
  %v2987 = vpack.c.b16 %v2974, %v2973
  %v2988 = vpack.c.b16 %v2976, %v2975
  %v2989 = vpack.c.b16 %v2978, %v2977
  %v2990 = vpack.c.b16 %v2979, %v2979
  %v2993 = vunpack.c.l.b16 %v2936
  %v2994 = vunpack.c.l.b16 %v2937
  %v2995 = vpack.c.b16 %v2994, %v2993
  %v2998 = vsel %vm302, %v2980, 0
  %v3001 = vsel %vm302, %v2981, 0
  %v3004 = vsel %vm302, %v2982, 0
  %v3007 = vsel %vm302, %v2983, 0
  %v3010 = vsel %vm302, %v2984, 0
  %v3013 = vsel %vm302, %v2985, 0
  %v3016 = vsel %vm302, %v2986, 0
  %v3019 = vsel %vm302, %v2987, 0
  %v3022 = vsel %vm302, %v2988, 0
  %v3025 = vsel %vm302, %v2989, 0
  %v3028 = vsel %vm302, %v2990, 0
  %3030 = vmatpush.bf16.msra.mxu0 0
  %3031 = vmatpush.bf16.msra.mxu0 0
  %3032 = vmatpush.bf16.msra.mxu0 0
  %3033 = vmatpush.bf16.msra.mxu0 0
  %3034 = vmatpush.bf16.msra.mxu0 0
  %3035 = vmatpush.bf16.msra.mxu0 0
  %3036 = vmatpush.bf16.msra.mxu0 0
  %3037 = vmatpush.bf16.msra.mxu0 %v2995
  %3038 = vmatmul.bf16.gmra.mxu0 %v2998
  %v3039 = vpop.f32.mrf.mxu0
  %v3040 = vpop.f32.mrf.mxu0
  %v3041 = vadd.f32 0.0, %v3040
  %3042 = vmatmul.bf16.gmra.mxu0 %v3001
  %v3043 = vpop.f32.mrf.mxu0
  %v3044 = vadd.f32 0.0, %v3043
  %v3045 = vpop.f32.mrf.mxu0
  %v3046 = vadd.f32 0.0, %v3045
  %3047 = vmatmul.bf16.gmra.mxu0 %v3004
  %v3048 = vpop.f32.mrf.mxu0
  %v3049 = vadd.f32 0.0, %v3048
  %v3050 = vpop.f32.mrf.mxu0
  %v3051 = vadd.f32 0.0, %v3050
  %3052 = vmatmul.bf16.gmra.mxu0 %v3007
  %v3053 = vpop.f32.mrf.mxu0
  %v3054 = vadd.f32 0.0, %v3053
  %v3055 = vpop.f32.mrf.mxu0
  %v3056 = vadd.f32 0.0, %v3055
  %3057 = vmatmul.bf16.gmra.mxu0 %v3010
  %v3058 = vpop.f32.mrf.mxu0
  %v3059 = vadd.f32 0.0, %v3058
  %v3060 = vpop.f32.mrf.mxu0
  %v3061 = vadd.f32 0.0, %v3060
  %3062 = vmatmul.bf16.gmra.mxu0 %v3013
  %v3063 = vpop.f32.mrf.mxu0
  %v3064 = vpop.f32.mrf.mxu0
  %v3065 = vadd.f32 0.0, %v3064
  %3066 = vmatmul.bf16.gmra.mxu0 %v3016
  %v3067 = vpop.f32.mrf.mxu0
  %v3068 = vadd.f32 0.0, %v3067
  %v3069 = vpop.f32.mrf.mxu0
  %v3070 = vadd.f32 0.0, %v3069
  %3071 = vmatmul.bf16.gmra.mxu0 %v3019
  %v3072 = vpop.f32.mrf.mxu0
  %v3073 = vadd.f32 0.0, %v3072
  %v3074 = vpop.f32.mrf.mxu0
  %v3075 = vadd.f32 0.0, %v3074
  %3076 = vmatmul.bf16.gmra.mxu0 %v3022
  %v3077 = vpop.f32.mrf.mxu0
  %v3078 = vadd.f32 0.0, %v3077
  %v3079 = vpop.f32.mrf.mxu0
  %v3080 = vadd.f32 0.0, %v3079
  %3081 = vmatmul.bf16.gmra.mxu0 %v3025
  %v3082 = vpop.f32.mrf.mxu0
  %v3083 = vadd.f32 0.0, %v3082
  %v3084 = vpop.f32.mrf.mxu0
  %v3085 = vadd.f32 0.0, %v3084
  %3086 = vmatmul.bf16.gmra.mxu0 %v3028
  %v3087 = vpop.f32.mrf.mxu0
  %v3088 = vpop.f32.mrf.mxu0
  %3089 = vdwg.mxu0
  %v3090 = vadd.f32 %v2865, %v3041
  %v3091 = vadd.f32 %v2868, %v3044
  %v3092 = vadd.f32 %v2870, %v3046
  %v3093 = vadd.f32 %v2873, %v3049
  %v3094 = vadd.f32 %v2875, %v3051
  %v3095 = vadd.f32 %v2878, %v3054
  %v3096 = vadd.f32 %v2880, %v3056
  %v3097 = vadd.f32 %v2883, %v3059
  %v3098 = vadd.f32 %v2885, %v3061
  %v3099 = vadd.f32 %v2889, %v3065
  %v3100 = vadd.f32 %v2892, %v3068
  %v3101 = vadd.f32 %v2894, %v3070
  %v3102 = vadd.f32 %v2897, %v3073
  %v3103 = vadd.f32 %v2899, %v3075
  %v3104 = vadd.f32 %v2902, %v3078
  %v3105 = vadd.f32 %v2904, %v3080
  %v3106 = vadd.f32 %v2907, %v3083
  %v3107 = vadd.f32 %v2909, %v3085
  %v3108 = vld [vmem:[%s4 + $0x8] sm:$0xff]
  %v3109 = vld [vmem:[%s4 + $0x10] sm:$0xff]
  %v3110 = vld [vmem:[%s4 + $0x18] sm:$0xff]
  %v3111 = vld [vmem:[%s4 + $0x20] sm:$0xff]
  %v3112 = vld [vmem:[%s4 + $0x28] sm:$0xff]
  %v3113 = vld [vmem:[%s4 + $0x30] sm:$0xff]
  %v3114 = vld [vmem:[%s4 + $0x38] sm:$0xff]
  %v3115 = vld [vmem:[%s4 + $0x40] sm:$0xff]
  %v3116 = vld [vmem:[%s4 + $0x48] sm:$0xff]
  %v3117 = vld [vmem:[%s4 + $0x58] sm:$0xff]
  %v3118 = vld [vmem:[%s4 + $0x60] sm:$0xff]
  %v3119 = vld [vmem:[%s4 + $0x68] sm:$0xff]
  %v3120 = vld [vmem:[%s4 + $0x70] sm:$0xff]
  %v3121 = vld [vmem:[%s4 + $0x78] sm:$0xff]
  %v3122 = vld [vmem:[%s4 + $0x80] sm:$0xff]
  %v3123 = vld [vmem:[%s4 + $0x88] sm:$0xff]
  %v3124 = vld [vmem:[%s4 + $0x90] sm:$0xff]
  %v3125 = vld [vmem:[%s4 + $0x98] sm:$0xff]
  %3127 = vset.pattern.permute.xlu0 0
  %3128 = vperm.xlu0 %3127, %v3108
  %v3129 = vpop.permute.xlu0 %3128
  %3132 = vset.pattern.permute.xlu0 0
  %3133 = vperm.xlu0 %3132, %v3109
  %v3134 = vpop.permute.xlu0 %3133
  %3137 = vset.pattern.permute.xlu0 0
  %3138 = vperm.xlu0 %3137, %v3110
  %v3139 = vpop.permute.xlu0 %3138
  %3142 = vset.pattern.permute.xlu0 0
  %3143 = vperm.xlu0 %3142, %v3111
  %v3144 = vpop.permute.xlu0 %3143
  %3147 = vset.pattern.permute.xlu0 0
  %3148 = vperm.xlu0 %3147, %v3112
  %v3149 = vpop.permute.xlu0 %3148
  %3152 = vset.pattern.permute.xlu0 0
  %3153 = vperm.xlu0 %3152, %v3113
  %v3154 = vpop.permute.xlu0 %3153
  %3157 = vset.pattern.permute.xlu0 0
  %3158 = vperm.xlu0 %3157, %v3114
  %v3159 = vpop.permute.xlu0 %3158
  %3162 = vset.pattern.permute.xlu0 0
  %3163 = vperm.xlu0 %3162, %v3115
  %v3164 = vpop.permute.xlu0 %3163
  %3167 = vset.pattern.permute.xlu0 0
  %3168 = vperm.xlu0 %3167, %v3116
  %v3169 = vpop.permute.xlu0 %3168
  %3172 = vset.pattern.permute.xlu0 0
  %3173 = vperm.xlu0 %3172, %v3117
  %v3174 = vpop.permute.xlu0 %3173
  %3177 = vset.pattern.permute.xlu0 0
  %3178 = vperm.xlu0 %3177, %v3118
  %v3179 = vpop.permute.xlu0 %3178
  %3182 = vset.pattern.permute.xlu0 0
  %3183 = vperm.xlu0 %3182, %v3119
  %v3184 = vpop.permute.xlu0 %3183
  %3187 = vset.pattern.permute.xlu0 0
  %3188 = vperm.xlu0 %3187, %v3120
  %v3189 = vpop.permute.xlu0 %3188
  %3192 = vset.pattern.permute.xlu0 0
  %3193 = vperm.xlu0 %3192, %v3121
  %v3194 = vpop.permute.xlu0 %3193
  %3197 = vset.pattern.permute.xlu0 0
  %3198 = vperm.xlu0 %3197, %v3122
  %v3199 = vpop.permute.xlu0 %3198
  %3202 = vset.pattern.permute.xlu0 0
  %3203 = vperm.xlu0 %3202, %v3123
  %v3204 = vpop.permute.xlu0 %3203
  %3207 = vset.pattern.permute.xlu0 0
  %3208 = vperm.xlu0 %3207, %v3124
  %v3209 = vpop.permute.xlu0 %3208
  %3212 = vset.pattern.permute.xlu0 0
  %3213 = vperm.xlu0 %3212, %v3125
  %v3214 = vpop.permute.xlu0 %3213
  %v3216 = vmul.f32 %v3129, %v3090
  %v3217 = vmul.f32 %v3134, %v3091
  %v3218 = vmul.f32 %v3139, %v3092
  %v3219 = vmul.f32 %v3144, %v3093
  %v3220 = vmul.f32 %v3149, %v3094
  %v3221 = vmul.f32 %v3154, %v3095
  %v3222 = vmul.f32 %v3159, %v3096
  %v3223 = vmul.f32 %v3164, %v3097
  %v3224 = vmul.f32 %v3169, %v3098
  %v3225 = vmul.f32 %v3174, %v3099
  %v3226 = vmul.f32 %v3179, %v3100
  %v3227 = vmul.f32 %v3184, %v3101
  %v3228 = vmul.f32 %v3189, %v3102
  %v3229 = vmul.f32 %v3194, %v3103
  %v3230 = vmul.f32 %v3199, %v3104
  %v3231 = vmul.f32 %v3204, %v3105
  %v3232 = vmul.f32 %v3209, %v3106
  %v3233 = vmul.f32 %v3214, %v3107
  %v3234 = vadd.f32 %v3216, 0.0
  %v3235 = vadd.f32 %v3217, 0.0
  %v3236 = vadd.f32 %v3218, 0.0
  %v3237 = vadd.f32 %v3219, 0.0
  %v3238 = vadd.f32 %v3220, 0.0
  %v3239 = vadd.f32 %v3221, 0.0
  %v3240 = vadd.f32 %v3222, 0.0
  %v3241 = vadd.f32 %v3223, 0.0
  %v3242 = vadd.f32 %v3224, 0.0
  %v3243 = vadd.f32 %v3225, 0.0
  %v3244 = vadd.f32 %v3226, 0.0
  %v3245 = vadd.f32 %v3227, 0.0
  %v3246 = vadd.f32 %v3228, 0.0
  %v3247 = vadd.f32 %v3229, 0.0
  %v3248 = vadd.f32 %v3230, 0.0
  %v3249 = vadd.f32 %v3231, 0.0
  %v3250 = vadd.f32 %v3232, 0.0
  %v3251 = vadd.f32 %v3233, 0.0
  %v3252 = vld [vmem:[#allocation3 + $0x50] sm:$0x7]
  %s3253 = scalar_lea.vmem %s2, 8
  %v3254 = vld [vmem:[%s3253] sm:$0xf]
  %v3255 = vld [vmem:[%s3253 + $0x4] sm:$0xf]
  %v3256 = vld [vmem:[#allocation3 + $0x54] sm:$0x7]
  %s3257 = scalar_lea.vmem %s2, 32
  %v3258 = vld [vmem:[%s3257] sm:$0xf]
  %v3259 = vld [vmem:[%s3257 + $0x4] sm:$0xf]
  %v3261 = vunpack.c.l.b16 %v3256
  %v3262 = vpack.c.b16 %v3261, %v3261
  %v3263 = vshrl.u32 %v2690, 16
  %v3265 = vshll.u32 %v2690, 16
  %v3267 = vrot.slane %v3265, 1
  %v3268 = vor.u32 %v3263, %v3267
  %v3269 = vshll.u32 %v2691, 16
  %v3271 = vrot.slane %v3269, 1
  %v3272 = vsel %vm859, %v3268, %v3271
  %v3273 = vshrl.u32 %v2691, 16
  %v3275 = vor.u32 %v3273, %v3271
  %v3276 = vshll.u32 %v2692, 16
  %v3278 = vrot.slane %v3276, 1
  %v3279 = vsel %vm859, %v3275, %v3278
  %v3280 = vshrl.u32 %v2692, 16
  %v3282 = vor.u32 %v3280, %v3278
  %v3283 = vshll.u32 %v2693, 16
  %v3285 = vrot.slane %v3283, 1
  %v3286 = vsel %vm859, %v3282, %v3285
  %v3287 = vshrl.u32 %v2693, 16
  %v3289 = vor.u32 %v3287, %v3285
  %v3290 = vshll.u32 %v2694, 16
  %v3292 = vrot.slane %v3290, 1
  %v3293 = vsel %vm859, %v3289, %v3292
  %v3294 = vshrl.u32 %v2694, 16
  %v3296 = vor.u32 %v3294, %v3292
  %v3297 = vshll.u32 %v2695, 16
  %v3299 = vrot.slane %v3297, 1
  %v3300 = vsel %vm859, %v3296, %v3299
  %v3301 = vshrl.u32 %v2695, 16
  %v3303 = vor.u32 %v3301, %v3299
  %v3304 = vshll.u32 %v2696, 16
  %v3306 = vrot.slane %v3304, 1
  %v3307 = vsel %vm859, %v3303, %v3306
  %v3308 = vshrl.u32 %v2696, 16
  %v3310 = vor.u32 %v3308, %v3306
  %v3311 = vshll.u32 %v2697, 16
  %v3313 = vrot.slane %v3311, 1
  %v3314 = vsel %vm859, %v3310, %v3313
  %v3315 = vshrl.u32 %v2697, 16
  %v3317 = vor.u32 %v3315, %v3313
  %v3318 = vshll.u32 %v2698, 16
  %v3320 = vrot.slane %v3318, 1
  %v3321 = vsel %vm859, %v3317, %v3320
  %v3322 = vshrl.u32 %v2698, 16
  %v3324 = vor.u32 %v3322, %v3320
  %v3325 = vshll.u32 %v2699, 16
  %v3327 = vrot.slane %v3325, 1
  %v3328 = vsel %vm859, %v3324, %v3327
  %v3329 = vshrl.u32 %v2699, 16
  %v3331 = vor.u32 %v3329, %v3327
  %v3333 = vshll.u32 %v3262, 16
  %v3335 = vrot.slane %v3333, 1
  %v3336 = vsel %vm859, %v3331, %v3335
  %v3337 = vshrl.u32 %v3262, 16
  %v3339 = vor.u32 %v3337, %v3335
  %v3342 = vunpack.c.l.b16 %v3258
  %v3343 = vunpack.c.l.b16 %v3259
  %v3344 = vpack.c.b16 %v3343, %v3342
  %v3347 = vsel %vm302, %v3272, 0
  %v3350 = vsel %vm302, %v3279, 0
  %v3353 = vsel %vm302, %v3286, 0
  %v3356 = vsel %vm302, %v3293, 0
  %v3359 = vsel %vm302, %v3300, 0
  %v3362 = vsel %vm302, %v3307, 0
  %v3365 = vsel %vm302, %v3314, 0
  %v3368 = vsel %vm302, %v3321, 0
  %v3371 = vsel %vm302, %v3328, 0
  %v3374 = vsel %vm302, %v3336, 0
  %v3377 = vsel %vm302, %v3339, 0
  %3379 = vmatpush.bf16.msra.mxu0 0
  %3380 = vmatpush.bf16.msra.mxu0 0
  %3381 = vmatpush.bf16.msra.mxu0 0
  %3382 = vmatpush.bf16.msra.mxu0 0
  %3383 = vmatpush.bf16.msra.mxu0 0
  %3384 = vmatpush.bf16.msra.mxu0 0
  %3385 = vmatpush.bf16.msra.mxu0 0
  %3386 = vmatpush.bf16.msra.mxu0 %v3344
  %3387 = vmatmul.bf16.gmra.mxu0 %v3347
  %v3388 = vpop.f32.mrf.mxu0
  %v3389 = vpop.f32.mrf.mxu0
  %v3390 = vadd.f32 0.0, %v3389
  %3391 = vmatmul.bf16.gmra.mxu0 %v3350
  %v3392 = vpop.f32.mrf.mxu0
  %v3393 = vadd.f32 0.0, %v3392
  %v3394 = vpop.f32.mrf.mxu0
  %v3395 = vadd.f32 0.0, %v3394
  %3396 = vmatmul.bf16.gmra.mxu0 %v3353
  %v3397 = vpop.f32.mrf.mxu0
  %v3398 = vadd.f32 0.0, %v3397
  %v3399 = vpop.f32.mrf.mxu0
  %v3400 = vadd.f32 0.0, %v3399
  %3401 = vmatmul.bf16.gmra.mxu0 %v3356
  %v3402 = vpop.f32.mrf.mxu0
  %v3403 = vadd.f32 0.0, %v3402
  %v3404 = vpop.f32.mrf.mxu0
  %v3405 = vadd.f32 0.0, %v3404
  %3406 = vmatmul.bf16.gmra.mxu0 %v3359
  %v3407 = vpop.f32.mrf.mxu0
  %v3408 = vadd.f32 0.0, %v3407
  %v3409 = vpop.f32.mrf.mxu0
  %v3410 = vadd.f32 0.0, %v3409
  %3411 = vmatmul.bf16.gmra.mxu0 %v3362
  %v3412 = vpop.f32.mrf.mxu0
  %v3413 = vpop.f32.mrf.mxu0
  %v3414 = vadd.f32 0.0, %v3413
  %3415 = vmatmul.bf16.gmra.mxu0 %v3365
  %v3416 = vpop.f32.mrf.mxu0
  %v3417 = vadd.f32 0.0, %v3416
  %v3418 = vpop.f32.mrf.mxu0
  %v3419 = vadd.f32 0.0, %v3418
  %3420 = vmatmul.bf16.gmra.mxu0 %v3368
  %v3421 = vpop.f32.mrf.mxu0
  %v3422 = vadd.f32 0.0, %v3421
  %v3423 = vpop.f32.mrf.mxu0
  %v3424 = vadd.f32 0.0, %v3423
  %3425 = vmatmul.bf16.gmra.mxu0 %v3371
  %v3426 = vpop.f32.mrf.mxu0
  %v3427 = vadd.f32 0.0, %v3426
  %v3428 = vpop.f32.mrf.mxu0
  %v3429 = vadd.f32 0.0, %v3428
  %3430 = vmatmul.bf16.gmra.mxu0 %v3374
  %v3431 = vpop.f32.mrf.mxu0
  %v3432 = vadd.f32 0.0, %v3431
  %v3433 = vpop.f32.mrf.mxu0
  %v3434 = vadd.f32 0.0, %v3433
  %3435 = vmatmul.bf16.gmra.mxu0 %v3377
  %v3436 = vpop.f32.mrf.mxu0
  %v3437 = vpop.f32.mrf.mxu0
  %3438 = vdwg.mxu0
  %v3440 = vunpack.c.l.b16 %v3252
  %v3441 = vpack.c.b16 %v3440, %v3440
  %v3442 = vshrl.u32 %v2804, 16
  %v3444 = vshll.u32 %v2804, 16
  %v3446 = vrot.slane %v3444, 1
  %v3447 = vor.u32 %v3442, %v3446
  %v3448 = vshll.u32 %v2805, 16
  %v3450 = vrot.slane %v3448, 1
  %v3451 = vsel %vm859, %v3447, %v3450
  %v3452 = vshrl.u32 %v2805, 16
  %v3454 = vor.u32 %v3452, %v3450
  %v3455 = vshll.u32 %v2806, 16
  %v3457 = vrot.slane %v3455, 1
  %v3458 = vsel %vm859, %v3454, %v3457
  %v3459 = vshrl.u32 %v2806, 16
  %v3461 = vor.u32 %v3459, %v3457
  %v3462 = vshll.u32 %v2807, 16
  %v3464 = vrot.slane %v3462, 1
  %v3465 = vsel %vm859, %v3461, %v3464
  %v3466 = vshrl.u32 %v2807, 16
  %v3468 = vor.u32 %v3466, %v3464
  %v3469 = vshll.u32 %v2808, 16
  %v3471 = vrot.slane %v3469, 1
  %v3472 = vsel %vm859, %v3468, %v3471
  %v3473 = vshrl.u32 %v2808, 16
  %v3475 = vor.u32 %v3473, %v3471
  %v3476 = vshll.u32 %v2809, 16
  %v3478 = vrot.slane %v3476, 1
  %v3479 = vsel %vm859, %v3475, %v3478
  %v3480 = vshrl.u32 %v2809, 16
  %v3482 = vor.u32 %v3480, %v3478
  %v3483 = vshll.u32 %v2810, 16
  %v3485 = vrot.slane %v3483, 1
  %v3486 = vsel %vm859, %v3482, %v3485
  %v3487 = vshrl.u32 %v2810, 16
  %v3489 = vor.u32 %v3487, %v3485
  %v3490 = vshll.u32 %v2811, 16
  %v3492 = vrot.slane %v3490, 1
  %v3493 = vsel %vm859, %v3489, %v3492
  %v3494 = vshrl.u32 %v2811, 16
  %v3496 = vor.u32 %v3494, %v3492
  %v3497 = vshll.u32 %v2812, 16
  %v3499 = vrot.slane %v3497, 1
  %v3500 = vsel %vm859, %v3496, %v3499
  %v3501 = vshrl.u32 %v2812, 16
  %v3503 = vor.u32 %v3501, %v3499
  %v3504 = vshll.u32 %v2813, 16
  %v3506 = vrot.slane %v3504, 1
  %v3507 = vsel %vm859, %v3503, %v3506
  %v3508 = vshrl.u32 %v2813, 16
  %v3510 = vor.u32 %v3508, %v3506
  %v3512 = vshll.u32 %v3441, 16
  %v3514 = vrot.slane %v3512, 1
  %v3515 = vsel %vm859, %v3510, %v3514
  %v3516 = vshrl.u32 %v3441, 16
  %v3518 = vor.u32 %v3516, %v3514
  %v3521 = vunpack.c.l.b16 %v3254
  %v3522 = vunpack.c.l.b16 %v3255
  %v3523 = vpack.c.b16 %v3522, %v3521
  %v3526 = vsel %vm302, %v3451, 0
  %v3529 = vsel %vm302, %v3458, 0
  %v3532 = vsel %vm302, %v3465, 0
  %v3535 = vsel %vm302, %v3472, 0
  %v3538 = vsel %vm302, %v3479, 0
  %v3541 = vsel %vm302, %v3486, 0
  %v3544 = vsel %vm302, %v3493, 0
  %v3547 = vsel %vm302, %v3500, 0
  %v3550 = vsel %vm302, %v3507, 0
  %v3553 = vsel %vm302, %v3515, 0
  %v3556 = vsel %vm302, %v3518, 0
  %3558 = vmatpush.bf16.msra.mxu0 0
  %3559 = vmatpush.bf16.msra.mxu0 0
  %3560 = vmatpush.bf16.msra.mxu0 0
  %3561 = vmatpush.bf16.msra.mxu0 0
  %3562 = vmatpush.bf16.msra.mxu0 0
  %3563 = vmatpush.bf16.msra.mxu0 0
  %3564 = vmatpush.bf16.msra.mxu0 0
  %3565 = vmatpush.bf16.msra.mxu0 %v3523
  %3566 = vmatmul.bf16.gmra.mxu0 %v3526
  %v3567 = vpop.f32.mrf.mxu0
  %v3568 = vpop.f32.mrf.mxu0
  %v3569 = vadd.f32 %v3390, %v3568
  %3570 = vmatmul.bf16.gmra.mxu0 %v3529
  %v3571 = vpop.f32.mrf.mxu0
  %v3572 = vadd.f32 %v3393, %v3571
  %v3573 = vpop.f32.mrf.mxu0
  %v3574 = vadd.f32 %v3395, %v3573
  %3575 = vmatmul.bf16.gmra.mxu0 %v3532
  %v3576 = vpop.f32.mrf.mxu0
  %v3577 = vadd.f32 %v3398, %v3576
  %v3578 = vpop.f32.mrf.mxu0
  %v3579 = vadd.f32 %v3400, %v3578
  %3580 = vmatmul.bf16.gmra.mxu0 %v3535
  %v3581 = vpop.f32.mrf.mxu0
  %v3582 = vadd.f32 %v3403, %v3581
  %v3583 = vpop.f32.mrf.mxu0
  %v3584 = vadd.f32 %v3405, %v3583
  %3585 = vmatmul.bf16.gmra.mxu0 %v3538
  %v3586 = vpop.f32.mrf.mxu0
  %v3587 = vadd.f32 %v3408, %v3586
  %v3588 = vpop.f32.mrf.mxu0
  %v3589 = vadd.f32 %v3410, %v3588
  %3590 = vmatmul.bf16.gmra.mxu0 %v3541
  %v3591 = vpop.f32.mrf.mxu0
  %v3592 = vpop.f32.mrf.mxu0
  %v3593 = vadd.f32 %v3414, %v3592
  %3594 = vmatmul.bf16.gmra.mxu0 %v3544
  %v3595 = vpop.f32.mrf.mxu0
  %v3596 = vadd.f32 %v3417, %v3595
  %v3597 = vpop.f32.mrf.mxu0
  %v3598 = vadd.f32 %v3419, %v3597
  %3599 = vmatmul.bf16.gmra.mxu0 %v3547
  %v3600 = vpop.f32.mrf.mxu0
  %v3601 = vadd.f32 %v3422, %v3600
  %v3602 = vpop.f32.mrf.mxu0
  %v3603 = vadd.f32 %v3424, %v3602
  %3604 = vmatmul.bf16.gmra.mxu0 %v3550
  %v3605 = vpop.f32.mrf.mxu0
  %v3606 = vadd.f32 %v3427, %v3605
  %v3607 = vpop.f32.mrf.mxu0
  %v3608 = vadd.f32 %v3429, %v3607
  %3609 = vmatmul.bf16.gmra.mxu0 %v3553
  %v3610 = vpop.f32.mrf.mxu0
  %v3611 = vadd.f32 %v3432, %v3610
  %v3612 = vpop.f32.mrf.mxu0
  %v3613 = vadd.f32 %v3434, %v3612
  %3614 = vmatmul.bf16.gmra.mxu0 %v3556
  %v3615 = vpop.f32.mrf.mxu0
  %v3616 = vpop.f32.mrf.mxu0
  %3617 = vdwg.mxu0
  %v3618 = vld [vmem:[#allocation3 + $0x58] sm:$0x7]
  %s3619 = scalar_lea.vmem %s2, 56
  %v3620 = vld [vmem:[%s3619] sm:$0xf]
  %v3621 = vld [vmem:[%s3619 + $0x4] sm:$0xf]
  %v3623 = vunpack.c.l.b16 %v3618
  %v3624 = vpack.c.b16 %v3623, %v3623
  %v3625 = vshrl.u32 %v2980, 16
  %v3627 = vshll.u32 %v2980, 16
  %v3629 = vrot.slane %v3627, 1
  %v3630 = vor.u32 %v3625, %v3629
  %v3631 = vshll.u32 %v2981, 16
  %v3633 = vrot.slane %v3631, 1
  %v3634 = vsel %vm859, %v3630, %v3633
  %v3635 = vshrl.u32 %v2981, 16
  %v3637 = vor.u32 %v3635, %v3633
  %v3638 = vshll.u32 %v2982, 16
  %v3640 = vrot.slane %v3638, 1
  %v3641 = vsel %vm859, %v3637, %v3640
  %v3642 = vshrl.u32 %v2982, 16
  %v3644 = vor.u32 %v3642, %v3640
  %v3645 = vshll.u32 %v2983, 16
  %v3647 = vrot.slane %v3645, 1
  %v3648 = vsel %vm859, %v3644, %v3647
  %v3649 = vshrl.u32 %v2983, 16
  %v3651 = vor.u32 %v3649, %v3647
  %v3652 = vshll.u32 %v2984, 16
  %v3654 = vrot.slane %v3652, 1
  %v3655 = vsel %vm859, %v3651, %v3654
  %v3656 = vshrl.u32 %v2984, 16
  %v3658 = vor.u32 %v3656, %v3654
  %v3659 = vshll.u32 %v2985, 16
  %v3661 = vrot.slane %v3659, 1
  %v3662 = vsel %vm859, %v3658, %v3661
  %v3663 = vshrl.u32 %v2985, 16
  %v3665 = vor.u32 %v3663, %v3661
  %v3666 = vshll.u32 %v2986, 16
  %v3668 = vrot.slane %v3666, 1
  %v3669 = vsel %vm859, %v3665, %v3668
  %v3670 = vshrl.u32 %v2986, 16
  %v3672 = vor.u32 %v3670, %v3668
  %v3673 = vshll.u32 %v2987, 16
  %v3675 = vrot.slane %v3673, 1
  %v3676 = vsel %vm859, %v3672, %v3675
  %v3677 = vshrl.u32 %v2987, 16
  %v3679 = vor.u32 %v3677, %v3675
  %v3680 = vshll.u32 %v2988, 16
  %v3682 = vrot.slane %v3680, 1
  %v3683 = vsel %vm859, %v3679, %v3682
  %v3684 = vshrl.u32 %v2988, 16
  %v3686 = vor.u32 %v3684, %v3682
  %v3687 = vshll.u32 %v2989, 16
  %v3689 = vrot.slane %v3687, 1
  %v3690 = vsel %vm859, %v3686, %v3689
  %v3691 = vshrl.u32 %v2989, 16
  %v3693 = vor.u32 %v3691, %v3689
  %v3695 = vshll.u32 %v3624, 16
  %v3697 = vrot.slane %v3695, 1
  %v3698 = vsel %vm859, %v3693, %v3697
  %v3699 = vshrl.u32 %v3624, 16
  %v3701 = vor.u32 %v3699, %v3697
  %v3704 = vunpack.c.l.b16 %v3620
  %v3705 = vunpack.c.l.b16 %v3621
  %v3706 = vpack.c.b16 %v3705, %v3704
  %v3709 = vsel %vm302, %v3634, 0
  %v3712 = vsel %vm302, %v3641, 0
  %v3715 = vsel %vm302, %v3648, 0
  %v3718 = vsel %vm302, %v3655, 0
  %v3721 = vsel %vm302, %v3662, 0
  %v3724 = vsel %vm302, %v3669, 0
  %v3727 = vsel %vm302, %v3676, 0
  %v3730 = vsel %vm302, %v3683, 0
  %v3733 = vsel %vm302, %v3690, 0
  %v3736 = vsel %vm302, %v3698, 0
  %v3739 = vsel %vm302, %v3701, 0
  %3741 = vmatpush.bf16.msra.mxu0 0
  %3742 = vmatpush.bf16.msra.mxu0 0
  %3743 = vmatpush.bf16.msra.mxu0 0
  %3744 = vmatpush.bf16.msra.mxu0 0
  %3745 = vmatpush.bf16.msra.mxu0 0
  %3746 = vmatpush.bf16.msra.mxu0 0
  %3747 = vmatpush.bf16.msra.mxu0 0
  %3748 = vmatpush.bf16.msra.mxu0 %v3706
  %3749 = vmatmul.bf16.gmra.mxu0 %v3709
  %v3750 = vpop.f32.mrf.mxu0
  %v3751 = vpop.f32.mrf.mxu0
  %v3752 = vadd.f32 0.0, %v3751
  %3753 = vmatmul.bf16.gmra.mxu0 %v3712
  %v3754 = vpop.f32.mrf.mxu0
  %v3755 = vadd.f32 0.0, %v3754
  %v3756 = vpop.f32.mrf.mxu0
  %v3757 = vadd.f32 0.0, %v3756
  %3758 = vmatmul.bf16.gmra.mxu0 %v3715
  %v3759 = vpop.f32.mrf.mxu0
  %v3760 = vadd.f32 0.0, %v3759
  %v3761 = vpop.f32.mrf.mxu0
  %v3762 = vadd.f32 0.0, %v3761
  %3763 = vmatmul.bf16.gmra.mxu0 %v3718
  %v3764 = vpop.f32.mrf.mxu0
  %v3765 = vadd.f32 0.0, %v3764
  %v3766 = vpop.f32.mrf.mxu0
  %v3767 = vadd.f32 0.0, %v3766
  %3768 = vmatmul.bf16.gmra.mxu0 %v3721
  %v3769 = vpop.f32.mrf.mxu0
  %v3770 = vadd.f32 0.0, %v3769
  %v3771 = vpop.f32.mrf.mxu0
  %v3772 = vadd.f32 0.0, %v3771
  %3773 = vmatmul.bf16.gmra.mxu0 %v3724
  %v3774 = vpop.f32.mrf.mxu0
  %v3775 = vpop.f32.mrf.mxu0
  %v3776 = vadd.f32 0.0, %v3775
  %3777 = vmatmul.bf16.gmra.mxu0 %v3727
  %v3778 = vpop.f32.mrf.mxu0
  %v3779 = vadd.f32 0.0, %v3778
  %v3780 = vpop.f32.mrf.mxu0
  %v3781 = vadd.f32 0.0, %v3780
  %3782 = vmatmul.bf16.gmra.mxu0 %v3730
  %v3783 = vpop.f32.mrf.mxu0
  %v3784 = vadd.f32 0.0, %v3783
  %v3785 = vpop.f32.mrf.mxu0
  %v3786 = vadd.f32 0.0, %v3785
  %3787 = vmatmul.bf16.gmra.mxu0 %v3733
  %v3788 = vpop.f32.mrf.mxu0
  %v3789 = vadd.f32 0.0, %v3788
  %v3790 = vpop.f32.mrf.mxu0
  %v3791 = vadd.f32 0.0, %v3790
  %3792 = vmatmul.bf16.gmra.mxu0 %v3736
  %v3793 = vpop.f32.mrf.mxu0
  %v3794 = vadd.f32 0.0, %v3793
  %v3795 = vpop.f32.mrf.mxu0
  %v3796 = vadd.f32 0.0, %v3795
  %3797 = vmatmul.bf16.gmra.mxu0 %v3739
  %v3798 = vpop.f32.mrf.mxu0
  %v3799 = vpop.f32.mrf.mxu0
  %3800 = vdwg.mxu0
  %v3801 = vadd.f32 %v3569, %v3752
  %v3802 = vadd.f32 %v3572, %v3755
  %v3803 = vadd.f32 %v3574, %v3757
  %v3804 = vadd.f32 %v3577, %v3760
  %v3805 = vadd.f32 %v3579, %v3762
  %v3806 = vadd.f32 %v3582, %v3765
  %v3807 = vadd.f32 %v3584, %v3767
  %v3808 = vadd.f32 %v3587, %v3770
  %v3809 = vadd.f32 %v3589, %v3772
  %v3810 = vadd.f32 %v3593, %v3776
  %v3811 = vadd.f32 %v3596, %v3779
  %v3812 = vadd.f32 %v3598, %v3781
  %v3813 = vadd.f32 %v3601, %v3784
  %v3814 = vadd.f32 %v3603, %v3786
  %v3815 = vadd.f32 %v3606, %v3789
  %v3816 = vadd.f32 %v3608, %v3791
  %v3817 = vadd.f32 %v3611, %v3794
  %v3818 = vadd.f32 %v3613, %v3796
  %v3819 = vadd.f32 %v3234, %v3801
  %v3820 = vadd.f32 %v3235, %v3802
  %v3821 = vadd.f32 %v3236, %v3803
  %v3822 = vadd.f32 %v3237, %v3804
  %v3823 = vadd.f32 %v3238, %v3805
  %v3824 = vadd.f32 %v3239, %v3806
  %v3825 = vadd.f32 %v3240, %v3807
  %v3826 = vadd.f32 %v3241, %v3808
  %v3827 = vadd.f32 %v3242, %v3809
  %v3828 = vadd.f32 %v3243, %v3810
  %v3829 = vadd.f32 %v3244, %v3811
  %v3830 = vadd.f32 %v3245, %v3812
  %v3831 = vadd.f32 %v3246, %v3813
  %v3832 = vadd.f32 %v3247, %v3814
  %v3833 = vadd.f32 %v3248, %v3815
  %v3834 = vadd.f32 %v3249, %v3816
  %v3835 = vadd.f32 %v3250, %v3817
  %v3836 = vadd.f32 %v3251, %v3818
  %v3837 = vld [vmem:[#allocation3] sm:$0xe]
  %s3838 = scalar_lea.vmem %s2, 16
  %v3839 = vld [vmem:[%s3838] sm:$0xf]
  %v3840 = vld [vmem:[%s3838 + $0x4] sm:$0xf]
  %v3841 = vld [vmem:[#allocation3 + $0x4] sm:$0xe]
  %s3842 = scalar_lea.vmem %s2, 40
  %v3843 = vld [vmem:[%s3842] sm:$0xf]
  %v3844 = vld [vmem:[%s3842 + $0x4] sm:$0xf]
  %v3846 = vunpack.c.l.b16 %v3841
  %v3847 = vpack.c.b16 %v2670, %v3846
  %v3848 = vrot.slane %v3847, 1
  %v3849 = vrot.slane %v2691, 1
  %v3850 = vsel %vm1445, %v3848, %v3849
  %v3851 = vrot.slane %v2692, 1
  %v3852 = vsel %vm1445, %v3849, %v3851
  %v3853 = vrot.slane %v2693, 1
  %v3854 = vsel %vm1445, %v3851, %v3853
  %v3855 = vrot.slane %v2694, 1
  %v3856 = vsel %vm1445, %v3853, %v3855
  %v3857 = vrot.slane %v2695, 1
  %v3858 = vsel %vm1445, %v3855, %v3857
  %v3859 = vrot.slane %v2696, 1
  %v3860 = vsel %vm1445, %v3857, %v3859
  %v3861 = vrot.slane %v2697, 1
  %v3862 = vsel %vm1445, %v3859, %v3861
  %v3863 = vrot.slane %v2698, 1
  %v3864 = vsel %vm1445, %v3861, %v3863
  %v3865 = vrot.slane %v2699, 1
  %v3866 = vsel %vm1445, %v3863, %v3865
  %v3867 = vrot.slane %v3262, 1
  %v3868 = vsel %vm1445, %v3865, %v3867
  %v3871 = vunpack.c.l.b16 %v3843
  %v3872 = vunpack.c.l.b16 %v3844
  %v3873 = vpack.c.b16 %v3872, %v3871
  %v3876 = vsel %vm302, %v3850, 0
  %v3879 = vsel %vm302, %v3852, 0
  %v3882 = vsel %vm302, %v3854, 0
  %v3885 = vsel %vm302, %v3856, 0
  %v3888 = vsel %vm302, %v3858, 0
  %v3891 = vsel %vm302, %v3860, 0
  %v3894 = vsel %vm302, %v3862, 0
  %v3897 = vsel %vm302, %v3864, 0
  %v3900 = vsel %vm302, %v3866, 0
  %v3903 = vsel %vm302, %v3868, 0
  %v3906 = vsel %vm302, %v3867, 0
  %3908 = vmatpush.bf16.msra.mxu0 0
  %3909 = vmatpush.bf16.msra.mxu0 0
  %3910 = vmatpush.bf16.msra.mxu0 0
  %3911 = vmatpush.bf16.msra.mxu0 0
  %3912 = vmatpush.bf16.msra.mxu0 0
  %3913 = vmatpush.bf16.msra.mxu0 0
  %3914 = vmatpush.bf16.msra.mxu0 0
  %3915 = vmatpush.bf16.msra.mxu0 %v3873
  %3916 = vmatmul.bf16.gmra.mxu0 %v3876
  %v3917 = vpop.f32.mrf.mxu0
  %v3918 = vpop.f32.mrf.mxu0
  %v3919 = vadd.f32 0.0, %v3918
  %3920 = vmatmul.bf16.gmra.mxu0 %v3879
  %v3921 = vpop.f32.mrf.mxu0
  %v3922 = vadd.f32 0.0, %v3921
  %v3923 = vpop.f32.mrf.mxu0
  %v3924 = vadd.f32 0.0, %v3923
  %3925 = vmatmul.bf16.gmra.mxu0 %v3882
  %v3926 = vpop.f32.mrf.mxu0
  %v3927 = vadd.f32 0.0, %v3926
  %v3928 = vpop.f32.mrf.mxu0
  %v3929 = vadd.f32 0.0, %v3928
  %3930 = vmatmul.bf16.gmra.mxu0 %v3885
  %v3931 = vpop.f32.mrf.mxu0
  %v3932 = vadd.f32 0.0, %v3931
  %v3933 = vpop.f32.mrf.mxu0
  %v3934 = vadd.f32 0.0, %v3933
  %3935 = vmatmul.bf16.gmra.mxu0 %v3888
  %v3936 = vpop.f32.mrf.mxu0
  %v3937 = vadd.f32 0.0, %v3936
  %v3938 = vpop.f32.mrf.mxu0
  %v3939 = vadd.f32 0.0, %v3938
  %3940 = vmatmul.bf16.gmra.mxu0 %v3891
  %v3941 = vpop.f32.mrf.mxu0
  %v3942 = vpop.f32.mrf.mxu0
  %v3943 = vadd.f32 0.0, %v3942
  %3944 = vmatmul.bf16.gmra.mxu0 %v3894
  %v3945 = vpop.f32.mrf.mxu0
  %v3946 = vadd.f32 0.0, %v3945
  %v3947 = vpop.f32.mrf.mxu0
  %v3948 = vadd.f32 0.0, %v3947
  %3949 = vmatmul.bf16.gmra.mxu0 %v3897
  %v3950 = vpop.f32.mrf.mxu0
  %v3951 = vadd.f32 0.0, %v3950
  %v3952 = vpop.f32.mrf.mxu0
  %v3953 = vadd.f32 0.0, %v3952
  %3954 = vmatmul.bf16.gmra.mxu0 %v3900
  %v3955 = vpop.f32.mrf.mxu0
  %v3956 = vadd.f32 0.0, %v3955
  %v3957 = vpop.f32.mrf.mxu0
  %v3958 = vadd.f32 0.0, %v3957
  %3959 = vmatmul.bf16.gmra.mxu0 %v3903
  %v3960 = vpop.f32.mrf.mxu0
  %v3961 = vadd.f32 0.0, %v3960
  %v3962 = vpop.f32.mrf.mxu0
  %v3963 = vadd.f32 0.0, %v3962
  %3964 = vmatmul.bf16.gmra.mxu0 %v3906
  %v3965 = vpop.f32.mrf.mxu0
  %v3966 = vpop.f32.mrf.mxu0
  %3967 = vdwg.mxu0
  %v3969 = vunpack.c.l.b16 %v3837
  %v3970 = vpack.c.b16 %v2669, %v3969
  %v3971 = vrot.slane %v3970, 1
  %v3972 = vrot.slane %v2805, 1
  %v3973 = vsel %vm1445, %v3971, %v3972
  %v3974 = vrot.slane %v2806, 1
  %v3975 = vsel %vm1445, %v3972, %v3974
  %v3976 = vrot.slane %v2807, 1
  %v3977 = vsel %vm1445, %v3974, %v3976
  %v3978 = vrot.slane %v2808, 1
  %v3979 = vsel %vm1445, %v3976, %v3978
  %v3980 = vrot.slane %v2809, 1
  %v3981 = vsel %vm1445, %v3978, %v3980
  %v3982 = vrot.slane %v2810, 1
  %v3983 = vsel %vm1445, %v3980, %v3982
  %v3984 = vrot.slane %v2811, 1
  %v3985 = vsel %vm1445, %v3982, %v3984
  %v3986 = vrot.slane %v2812, 1
  %v3987 = vsel %vm1445, %v3984, %v3986
  %v3988 = vrot.slane %v2813, 1
  %v3989 = vsel %vm1445, %v3986, %v3988
  %v3990 = vrot.slane %v3441, 1
  %v3991 = vsel %vm1445, %v3988, %v3990
  %v3994 = vunpack.c.l.b16 %v3839
  %v3995 = vunpack.c.l.b16 %v3840
  %v3996 = vpack.c.b16 %v3995, %v3994
  %v3999 = vsel %vm302, %v3973, 0
  %v4002 = vsel %vm302, %v3975, 0
  %v4005 = vsel %vm302, %v3977, 0
  %v4008 = vsel %vm302, %v3979, 0
  %v4011 = vsel %vm302, %v3981, 0
  %v4014 = vsel %vm302, %v3983, 0
  %v4017 = vsel %vm302, %v3985, 0
  %v4020 = vsel %vm302, %v3987, 0
  %v4023 = vsel %vm302, %v3989, 0
  %v4026 = vsel %vm302, %v3991, 0
  %v4029 = vsel %vm302, %v3990, 0
  %4031 = vmatpush.bf16.msra.mxu0 0
  %4032 = vmatpush.bf16.msra.mxu0 0
  %4033 = vmatpush.bf16.msra.mxu0 0
  %4034 = vmatpush.bf16.msra.mxu0 0
  %4035 = vmatpush.bf16.msra.mxu0 0
  %4036 = vmatpush.bf16.msra.mxu0 0
  %4037 = vmatpush.bf16.msra.mxu0 0
  %4038 = vmatpush.bf16.msra.mxu0 %v3996
  %4039 = vmatmul.bf16.gmra.mxu0 %v3999
  %v4040 = vpop.f32.mrf.mxu0
  %v4041 = vpop.f32.mrf.mxu0
  %v4042 = vadd.f32 %v3919, %v4041
  %4043 = vmatmul.bf16.gmra.mxu0 %v4002
  %v4044 = vpop.f32.mrf.mxu0
  %v4045 = vadd.f32 %v3922, %v4044
  %v4046 = vpop.f32.mrf.mxu0
  %v4047 = vadd.f32 %v3924, %v4046
  %4048 = vmatmul.bf16.gmra.mxu0 %v4005
  %v4049 = vpop.f32.mrf.mxu0
  %v4050 = vadd.f32 %v3927, %v4049
  %v4051 = vpop.f32.mrf.mxu0
  %v4052 = vadd.f32 %v3929, %v4051
  %4053 = vmatmul.bf16.gmra.mxu0 %v4008
  %v4054 = vpop.f32.mrf.mxu0
  %v4055 = vadd.f32 %v3932, %v4054
  %v4056 = vpop.f32.mrf.mxu0
  %v4057 = vadd.f32 %v3934, %v4056
  %4058 = vmatmul.bf16.gmra.mxu0 %v4011
  %v4059 = vpop.f32.mrf.mxu0
  %v4060 = vadd.f32 %v3937, %v4059
  %v4061 = vpop.f32.mrf.mxu0
  %v4062 = vadd.f32 %v3939, %v4061
  %4063 = vmatmul.bf16.gmra.mxu0 %v4014
  %v4064 = vpop.f32.mrf.mxu0
  %v4065 = vpop.f32.mrf.mxu0
  %v4066 = vadd.f32 %v3943, %v4065
  %4067 = vmatmul.bf16.gmra.mxu0 %v4017
  %v4068 = vpop.f32.mrf.mxu0
  %v4069 = vadd.f32 %v3946, %v4068
  %v4070 = vpop.f32.mrf.mxu0
  %v4071 = vadd.f32 %v3948, %v4070
  %4072 = vmatmul.bf16.gmra.mxu0 %v4020
  %v4073 = vpop.f32.mrf.mxu0
  %v4074 = vadd.f32 %v3951, %v4073
  %v4075 = vpop.f32.mrf.mxu0
  %v4076 = vadd.f32 %v3953, %v4075
  %4077 = vmatmul.bf16.gmra.mxu0 %v4023
  %v4078 = vpop.f32.mrf.mxu0
  %v4079 = vadd.f32 %v3956, %v4078
  %v4080 = vpop.f32.mrf.mxu0
  %v4081 = vadd.f32 %v3958, %v4080
  %4082 = vmatmul.bf16.gmra.mxu0 %v4026
  %v4083 = vpop.f32.mrf.mxu0
  %v4084 = vadd.f32 %v3961, %v4083
  %v4085 = vpop.f32.mrf.mxu0
  %v4086 = vadd.f32 %v3963, %v4085
  %4087 = vmatmul.bf16.gmra.mxu0 %v4029
  %v4088 = vpop.f32.mrf.mxu0
  %v4089 = vpop.f32.mrf.mxu0
  %4090 = vdwg.mxu0
  %v4091 = vld [vmem:[#allocation3 + $0x8] sm:$0xe]
  %s4092 = scalar_lea.vmem %s2, 64
  %v4093 = vld [vmem:[%s4092] sm:$0xf]
  %v4094 = vld [vmem:[%s4092 + $0x4] sm:$0xf]
  %v4096 = vunpack.c.l.b16 %v4091
  %v4097 = vpack.c.b16 %v2960, %v4096
  %v4098 = vrot.slane %v4097, 1
  %v4099 = vrot.slane %v2981, 1
  %v4100 = vsel %vm1445, %v4098, %v4099
  %v4101 = vrot.slane %v2982, 1
  %v4102 = vsel %vm1445, %v4099, %v4101
  %v4103 = vrot.slane %v2983, 1
  %v4104 = vsel %vm1445, %v4101, %v4103
  %v4105 = vrot.slane %v2984, 1
  %v4106 = vsel %vm1445, %v4103, %v4105
  %v4107 = vrot.slane %v2985, 1
  %v4108 = vsel %vm1445, %v4105, %v4107
  %v4109 = vrot.slane %v2986, 1
  %v4110 = vsel %vm1445, %v4107, %v4109
  %v4111 = vrot.slane %v2987, 1
  %v4112 = vsel %vm1445, %v4109, %v4111
  %v4113 = vrot.slane %v2988, 1
  %v4114 = vsel %vm1445, %v4111, %v4113
  %v4115 = vrot.slane %v2989, 1
  %v4116 = vsel %vm1445, %v4113, %v4115
  %v4117 = vrot.slane %v3624, 1
  %v4118 = vsel %vm1445, %v4115, %v4117
  %v4121 = vunpack.c.l.b16 %v4093
  %v4122 = vunpack.c.l.b16 %v4094
  %v4123 = vpack.c.b16 %v4122, %v4121
  %v4126 = vsel %vm302, %v4100, 0
  %v4129 = vsel %vm302, %v4102, 0
  %v4132 = vsel %vm302, %v4104, 0
  %v4135 = vsel %vm302, %v4106, 0
  %v4138 = vsel %vm302, %v4108, 0
  %v4141 = vsel %vm302, %v4110, 0
  %v4144 = vsel %vm302, %v4112, 0
  %v4147 = vsel %vm302, %v4114, 0
  %v4150 = vsel %vm302, %v4116, 0
  %v4153 = vsel %vm302, %v4118, 0
  %v4156 = vsel %vm302, %v4117, 0
  %4158 = vmatpush.bf16.msra.mxu0 0
  %4159 = vmatpush.bf16.msra.mxu0 0
  %4160 = vmatpush.bf16.msra.mxu0 0
  %4161 = vmatpush.bf16.msra.mxu0 0
  %4162 = vmatpush.bf16.msra.mxu0 0
  %4163 = vmatpush.bf16.msra.mxu0 0
  %4164 = vmatpush.bf16.msra.mxu0 0
  %4165 = vmatpush.bf16.msra.mxu0 %v4123
  %4166 = vmatmul.bf16.gmra.mxu0 %v4126
  %v4167 = vpop.f32.mrf.mxu0
  %v4168 = vpop.f32.mrf.mxu0
  %v4169 = vadd.f32 0.0, %v4168
  %4170 = vmatmul.bf16.gmra.mxu0 %v4129
  %v4171 = vpop.f32.mrf.mxu0
  %v4172 = vadd.f32 0.0, %v4171
  %v4173 = vpop.f32.mrf.mxu0
  %v4174 = vadd.f32 0.0, %v4173
  %4175 = vmatmul.bf16.gmra.mxu0 %v4132
  %v4176 = vpop.f32.mrf.mxu0
  %v4177 = vadd.f32 0.0, %v4176
  %v4178 = vpop.f32.mrf.mxu0
  %v4179 = vadd.f32 0.0, %v4178
  %4180 = vmatmul.bf16.gmra.mxu0 %v4135
  %v4181 = vpop.f32.mrf.mxu0
  %v4182 = vadd.f32 0.0, %v4181
  %v4183 = vpop.f32.mrf.mxu0
  %v4184 = vadd.f32 0.0, %v4183
  %4185 = vmatmul.bf16.gmra.mxu0 %v4138
  %v4186 = vpop.f32.mrf.mxu0
  %v4187 = vadd.f32 0.0, %v4186
  %v4188 = vpop.f32.mrf.mxu0
  %v4189 = vadd.f32 0.0, %v4188
  %4190 = vmatmul.bf16.gmra.mxu0 %v4141
  %v4191 = vpop.f32.mrf.mxu0
  %v4192 = vpop.f32.mrf.mxu0
  %v4193 = vadd.f32 0.0, %v4192
  %4194 = vmatmul.bf16.gmra.mxu0 %v4144
  %v4195 = vpop.f32.mrf.mxu0
  %v4196 = vadd.f32 0.0, %v4195
  %v4197 = vpop.f32.mrf.mxu0
  %v4198 = vadd.f32 0.0, %v4197
  %4199 = vmatmul.bf16.gmra.mxu0 %v4147
  %v4200 = vpop.f32.mrf.mxu0
  %v4201 = vadd.f32 0.0, %v4200
  %v4202 = vpop.f32.mrf.mxu0
  %v4203 = vadd.f32 0.0, %v4202
  %4204 = vmatmul.bf16.gmra.mxu0 %v4150
  %v4205 = vpop.f32.mrf.mxu0
  %v4206 = vadd.f32 0.0, %v4205
  %v4207 = vpop.f32.mrf.mxu0
  %v4208 = vadd.f32 0.0, %v4207
  %4209 = vmatmul.bf16.gmra.mxu0 %v4153
  %v4210 = vpop.f32.mrf.mxu0
  %v4211 = vadd.f32 0.0, %v4210
  %v4212 = vpop.f32.mrf.mxu0
  %v4213 = vadd.f32 0.0, %v4212
  %4214 = vmatmul.bf16.gmra.mxu0 %v4156
  %v4215 = vpop.f32.mrf.mxu0
  %v4216 = vpop.f32.mrf.mxu0
  %4217 = vdwg.mxu0
  %v4218 = vadd.f32 %v4042, %v4169
  %v4219 = vadd.f32 %v4045, %v4172
  %v4220 = vadd.f32 %v4047, %v4174
  %v4221 = vadd.f32 %v4050, %v4177
  %v4222 = vadd.f32 %v4052, %v4179
  %v4223 = vadd.f32 %v4055, %v4182
  %v4224 = vadd.f32 %v4057, %v4184
  %v4225 = vadd.f32 %v4060, %v4187
  %v4226 = vadd.f32 %v4062, %v4189
  %v4227 = vadd.f32 %v4066, %v4193
  %v4228 = vadd.f32 %v4069, %v4196
  %v4229 = vadd.f32 %v4071, %v4198
  %v4230 = vadd.f32 %v4074, %v4201
  %v4231 = vadd.f32 %v4076, %v4203
  %v4232 = vadd.f32 %v4079, %v4206
  %v4233 = vadd.f32 %v4081, %v4208
  %v4234 = vadd.f32 %v4084, %v4211
  %v4235 = vadd.f32 %v4086, %v4213
  %4236 = vset.pattern.permute.xlu0 1
  %4237 = vperm.xlu0 %4236, %v3108
  %v4238 = vpop.permute.xlu0 %4237
  %4240 = vset.pattern.permute.xlu0 1
  %4241 = vperm.xlu0 %4240, %v3109
  %v4242 = vpop.permute.xlu0 %4241
  %4244 = vset.pattern.permute.xlu0 1
  %4245 = vperm.xlu0 %4244, %v3110
  %v4246 = vpop.permute.xlu0 %4245
  %4248 = vset.pattern.permute.xlu0 1
  %4249 = vperm.xlu0 %4248, %v3111
  %v4250 = vpop.permute.xlu0 %4249
  %4252 = vset.pattern.permute.xlu0 1
  %4253 = vperm.xlu0 %4252, %v3112
  %v4254 = vpop.permute.xlu0 %4253
  %4256 = vset.pattern.permute.xlu0 1
  %4257 = vperm.xlu0 %4256, %v3113
  %v4258 = vpop.permute.xlu0 %4257
  %4260 = vset.pattern.permute.xlu0 1
  %4261 = vperm.xlu0 %4260, %v3114
  %v4262 = vpop.permute.xlu0 %4261
  %4264 = vset.pattern.permute.xlu0 1
  %4265 = vperm.xlu0 %4264, %v3115
  %v4266 = vpop.permute.xlu0 %4265
  %4268 = vset.pattern.permute.xlu0 1
  %4269 = vperm.xlu0 %4268, %v3116
  %v4270 = vpop.permute.xlu0 %4269
  %4272 = vset.pattern.permute.xlu0 1
  %4273 = vperm.xlu0 %4272, %v3117
  %v4274 = vpop.permute.xlu0 %4273
  %4276 = vset.pattern.permute.xlu0 1
  %4277 = vperm.xlu0 %4276, %v3118
  %v4278 = vpop.permute.xlu0 %4277
  %4280 = vset.pattern.permute.xlu0 1
  %4281 = vperm.xlu0 %4280, %v3119
  %v4282 = vpop.permute.xlu0 %4281
  %4284 = vset.pattern.permute.xlu0 1
  %4285 = vperm.xlu0 %4284, %v3120
  %v4286 = vpop.permute.xlu0 %4285
  %4288 = vset.pattern.permute.xlu0 1
  %4289 = vperm.xlu0 %4288, %v3121
  %v4290 = vpop.permute.xlu0 %4289
  %4292 = vset.pattern.permute.xlu0 1
  %4293 = vperm.xlu0 %4292, %v3122
  %v4294 = vpop.permute.xlu0 %4293
  %4296 = vset.pattern.permute.xlu0 1
  %4297 = vperm.xlu0 %4296, %v3123
  %v4298 = vpop.permute.xlu0 %4297
  %4300 = vset.pattern.permute.xlu0 1
  %4301 = vperm.xlu0 %4300, %v3124
  %v4302 = vpop.permute.xlu0 %4301
  %4304 = vset.pattern.permute.xlu0 1
  %4305 = vperm.xlu0 %4304, %v3125
  %v4306 = vpop.permute.xlu0 %4305
  %v4308 = vmul.f32 %v4238, %v4218
  %v4309 = vmul.f32 %v4242, %v4219
  %v4310 = vmul.f32 %v4246, %v4220
  %v4311 = vmul.f32 %v4250, %v4221
  %v4312 = vmul.f32 %v4254, %v4222
  %v4313 = vmul.f32 %v4258, %v4223
  %v4314 = vmul.f32 %v4262, %v4224
  %v4315 = vmul.f32 %v4266, %v4225
  %v4316 = vmul.f32 %v4270, %v4226
  %v4317 = vmul.f32 %v4274, %v4227
  %v4318 = vmul.f32 %v4278, %v4228
  %v4319 = vmul.f32 %v4282, %v4229
  %v4320 = vmul.f32 %v4286, %v4230
  %v4321 = vmul.f32 %v4290, %v4231
  %v4322 = vmul.f32 %v4294, %v4232
  %v4323 = vmul.f32 %v4298, %v4233
  %v4324 = vmul.f32 %v4302, %v4234
  %v4325 = vmul.f32 %v4306, %v4235
  %v4326 = vadd.f32 %v3819, %v4308
  %v4327 = vadd.f32 %v3820, %v4309
  %v4328 = vadd.f32 %v3821, %v4310
  %v4329 = vadd.f32 %v3822, %v4311
  %v4330 = vadd.f32 %v3823, %v4312
  %v4331 = vadd.f32 %v3824, %v4313
  %v4332 = vadd.f32 %v3825, %v4314
  %v4333 = vadd.f32 %v3826, %v4315
  %v4334 = vadd.f32 %v3827, %v4316
  %v4335 = vadd.f32 %v3828, %v4317
  %v4336 = vadd.f32 %v3829, %v4318
  %v4337 = vadd.f32 %v3830, %v4319
  %v4338 = vadd.f32 %v3831, %v4320
  %v4339 = vadd.f32 %v3832, %v4321
  %v4340 = vadd.f32 %v3833, %v4322
  %v4341 = vadd.f32 %v3834, %v4323
  %v4342 = vadd.f32 %v3835, %v4324
  %v4343 = vadd.f32 %v3836, %v4325
  %v4344 = vld [vmem:[%s9] sm:$0x1]
  %v4345 = vld [vmem:[%s10] sm:$0x1]
  %v4355 = vrot.slane %v4326, 1
  %v4356 = vrot.slane %v4327, 1
  %v4357 = vsel %vm1953, %v4355, %v4356
  %v4358 = vrot.slane %v4328, 1
  %v4359 = vsel %vm1953, %v4356, %v4358
  %v4360 = vrot.slane %v4329, 1
  %v4361 = vsel %vm1953, %v4358, %v4360
  %v4362 = vrot.slane %v4330, 1
  %v4363 = vsel %vm1953, %v4360, %v4362
  %v4364 = vrot.slane %v4331, 1
  %v4365 = vsel %vm1953, %v4362, %v4364
  %v4366 = vrot.slane %v4332, 1
  %v4367 = vsel %vm1953, %v4364, %v4366
  %v4368 = vrot.slane %v4333, 1
  %v4369 = vsel %vm1953, %v4366, %v4368
  %v4370 = vrot.slane %v4334, 1
  %v4371 = vsel %vm1953, %v4368, %v4370
  %v4380 = vsel %vm302, %v4357, 0.0
  %v4381 = vsel %vm302, %v4359, 0.0
  %v4382 = vadd.f32 %v4380, %v4381
  %v4383 = vsel %vm302, %v4361, 0.0
  %v4384 = vadd.f32 %v4382, %v4383
  %v4385 = vsel %vm302, %v4363, 0.0
  %v4386 = vadd.f32 %v4384, %v4385
  %v4387 = vsel %vm302, %v4365, 0.0
  %v4388 = vadd.f32 %v4386, %v4387
  %v4389 = vsel %vm302, %v4367, 0.0
  %v4390 = vadd.f32 %v4388, %v4389
  %v4391 = vsel %vm302, %v4369, 0.0
  %v4392 = vadd.f32 %v4390, %v4391
  %v4393 = vsel %vm302, %v4371, 0.0
  %v4394 = vadd.f32 %v4392, %v4393
  %v4395 = vrot.slane %v4394, 4
  %v4396 = vadd.f32 %v4394, %v4395
  %v4397 = vrot.slane %v4396, 2
  %v4398 = vadd.f32 %v4396, %v4397
  %v4399 = vrot.slane %v4398, 1
  %v4400 = vadd.f32 %v4398, %v4399
  %v4401 = vmul.f32 %v4326, %v4326
  %v4402 = vmul.f32 %v4327, %v4327
  %v4403 = vmul.f32 %v4328, %v4328
  %v4404 = vmul.f32 %v4329, %v4329
  %v4405 = vmul.f32 %v4330, %v4330
  %v4406 = vmul.f32 %v4331, %v4331
  %v4407 = vmul.f32 %v4332, %v4332
  %v4408 = vmul.f32 %v4333, %v4333
  %v4409 = vmul.f32 %v4334, %v4334
  %v4419 = vrot.slane %v4401, 1
  %v4420 = vrot.slane %v4402, 1
  %v4421 = vsel %vm1953, %v4419, %v4420
  %v4422 = vrot.slane %v4403, 1
  %v4423 = vsel %vm1953, %v4420, %v4422
  %v4424 = vrot.slane %v4404, 1
  %v4425 = vsel %vm1953, %v4422, %v4424
  %v4426 = vrot.slane %v4405, 1
  %v4427 = vsel %vm1953, %v4424, %v4426
  %v4428 = vrot.slane %v4406, 1
  %v4429 = vsel %vm1953, %v4426, %v4428
  %v4430 = vrot.slane %v4407, 1
  %v4431 = vsel %vm1953, %v4428, %v4430
  %v4432 = vrot.slane %v4408, 1
  %v4433 = vsel %vm1953, %v4430, %v4432
  %v4434 = vrot.slane %v4409, 1
  %v4435 = vsel %vm1953, %v4432, %v4434
  %v4444 = vsel %vm302, %v4421, 0.0
  %v4445 = vsel %vm302, %v4423, 0.0
  %v4446 = vadd.f32 %v4444, %v4445
  %v4447 = vsel %vm302, %v4425, 0.0
  %v4448 = vadd.f32 %v4446, %v4447
  %v4449 = vsel %vm302, %v4427, 0.0
  %v4450 = vadd.f32 %v4448, %v4449
  %v4451 = vsel %vm302, %v4429, 0.0
  %v4452 = vadd.f32 %v4450, %v4451
  %v4453 = vsel %vm302, %v4431, 0.0
  %v4454 = vadd.f32 %v4452, %v4453
  %v4455 = vsel %vm302, %v4433, 0.0
  %v4456 = vadd.f32 %v4454, %v4455
  %v4457 = vsel %vm302, %v4435, 0.0
  %v4458 = vadd.f32 %v4456, %v4457
  %v4459 = vrot.slane %v4458, 4
  %v4460 = vadd.f32 %v4458, %v4459
  %v4461 = vrot.slane %v4460, 2
  %v4462 = vadd.f32 %v4460, %v4461
  %v4463 = vrot.slane %v4462, 1
  %v4464 = vadd.f32 %v4462, %v4463
  %v4465 = vsel %vm2064, %v4400, %v4464
  %v4467 = vsel %vm302, %v4465, 0
  %4469 = vmatpush.msra.mxu0 0.0
  %4470 = vmatpush.msra.mxu0 0.0
  %4471 = vmatpush.msra.mxu0 0.0
  %4472 = vmatpush.msra.mxu0 0.0
  %4473 = vmatpush.msra.mxu0 0.0
  %4474 = vmatpush.msra.mxu0 0.0
  %4475 = vmatpush.msra.mxu0 0.0
  %4476 = vmatpush.msra.mxu0 0.0
  %4477 = vmatpush.msra.mxu0 0.0
  %4478 = vmatpush.msra.mxu0 0.0
  %4479 = vmatpush.msra.mxu0 0.0
  %4480 = vmatpush.msra.mxu0 0.0
  %4481 = vmatpush.msra.mxu0 0.0
  %4482 = vmatpush.msra.mxu0 0.0
  %4483 = vmatpush.msra.mxu0 %v213
  %4484 = vmatpush.msra.mxu0 %v212
  %4485 = vmatmul.f32.gmra.mxu0 %v4467
  %v4486 = vpop.f32.mrf.mxu0
  %v4487 = vadd.f32 0.0, %v4486
  %4488 = vdwg.mxu0
  %v4489 = vmul.f32 %v4487, %v2095
  %v4490 = vmul.f32 %v4489, %v4489
  %v4492 = vrot.slane %v4490, 7
  %v4494 = vsub.f32 %v4489, %v4492
  %v4495 = vadd.f32 %v4494, 1e-05
  %v4496 = vrsqrt.pop %v4495
  %v4497 = vmul.f32 %v4496, %v4495
  %v4498 = vmul.f32 %v4497, %v4496
  %v4499 = vmul.f32 0.5, %v4498
  %v4500 = vsub.f32 1.5, %v4499
  %v4501 = vmul.f32 %v4496, %v4500
  %vm4502 = vweird.f32 %v4495
  %vm4503 = vweird.f32 %v4496
  %vm4504 = vmor %vm4502, %vm4503
  %v4505 = vsel %vm4504, %v4496, %v4501
  %v4506 = vsel %vm2064, %v4489, %v4505
  %v4508 = vsel %vm2114, %v4506, 0
  %4510 = vmatpush.msra.mxu0 0.0
  %4511 = vmatpush.msra.mxu0 0.0
  %4512 = vmatpush.msra.mxu0 0.0
  %4513 = vmatpush.msra.mxu0 0.0
  %4514 = vmatpush.msra.mxu0 0.0
  %4515 = vmatpush.msra.mxu0 0.0
  %4516 = vmatpush.msra.mxu0 0.0
  %4517 = vmatpush.msra.mxu0 0.0
  %4518 = vmatpush.msra.mxu0 0.0
  %4519 = vmatpush.msra.mxu0 0.0
  %4520 = vmatpush.msra.mxu0 0.0
  %4521 = vmatpush.msra.mxu0 0.0
  %4522 = vmatpush.msra.mxu0 0.0
  %4523 = vmatpush.msra.mxu0 0.0
  %4524 = vmatpush.msra.mxu0 0.0
  %4525 = vmatpush.msra.mxu0 %v2120
  %4526 = vmatmul.f32.gmra.mxu0 %v4508
  %v4527 = vpop.f32.mrf.mxu0
  %v4528 = vadd.f32 0.0, %v4527
  %4529 = vdwg.mxu0
  %v4531 = vperm.slane %v4344, 0
  %v4533 = vmul.f32 %v4528, %v4531
  %v4535 = vrot.slane %v4533, 1
  %v4537 = vmul.f32 %v4528, %v4535
  %v4538 = vsub.f32 %v4345, %v4537
  %v4539 = vperm.slane %v4533, 1
  %v4540 = vmul.f32 %v4326, %v4539
  %v4541 = vmul.f32 %v4327, %v4539
  %v4542 = vmul.f32 %v4328, %v4539
  %v4543 = vmul.f32 %v4329, %v4539
  %v4544 = vmul.f32 %v4330, %v4539
  %v4545 = vmul.f32 %v4331, %v4539
  %v4546 = vmul.f32 %v4332, %v4539
  %v4547 = vmul.f32 %v4333, %v4539
  %v4548 = vmul.f32 %v4334, %v4539
  %v4550 = vperm.slane %v4538, 0
  %v4552 = vadd.f32 %v4540, %v4550
  %v4553 = vadd.f32 %v4541, %v4550
  %v4554 = vadd.f32 %v4542, %v4550
  %v4555 = vadd.f32 %v4543, %v4550
  %v4556 = vadd.f32 %v4544, %v4550
  %v4557 = vadd.f32 %v4545, %v4550
  %v4558 = vadd.f32 %v4546, %v4550
  %v4559 = vadd.f32 %v4547, %v4550
  %v4560 = vadd.f32 %v4548, %v4550
  %v4561 = vld [vmem:[%s0] sm:$0xf]
  %v4562 = vld [vmem:[%s0 + $0x4] sm:$0xf]
  %v4563 = vld [vmem:[%s0 + $0x8] sm:$0xf]
  %v4564 = vld [vmem:[%s0 + $0xc] sm:$0xf]
  %v4565 = vld [vmem:[%s0 + $0x10] sm:$0xf]
  %v4566 = vld [vmem:[%s0 + $0x14] sm:$0xf]
  %v4567 = vld [vmem:[%s0 + $0x18] sm:$0xf]
  %v4568 = vld [vmem:[%s0 + $0x1c] sm:$0xf]
  %v4569 = vunpack.c.l.bf16 %v4561
  %v4570 = vunpack.c.l.bf16 %v4562
  %v4571 = vunpack.c.l.bf16 %v4563
  %v4572 = vunpack.c.l.bf16 %v4564
  %v4573 = vunpack.c.l.bf16 %v4565
  %v4574 = vunpack.c.l.bf16 %v4566
  %v4575 = vunpack.c.l.bf16 %v4567
  %v4576 = vunpack.c.l.bf16 %v4568
  %v4585 = vrot.slane %v4569, 7
  %v4586 = vrot.slane %v4570, 7
  %v4587 = vsel %vm2064, %v4585, %v4586
  %v4588 = vrot.slane %v4571, 7
  %v4589 = vsel %vm2064, %v4586, %v4588
  %v4590 = vrot.slane %v4572, 7
  %v4591 = vsel %vm2064, %v4588, %v4590
  %v4592 = vrot.slane %v4573, 7
  %v4593 = vsel %vm2064, %v4590, %v4592
  %v4594 = vrot.slane %v4574, 7
  %v4595 = vsel %vm2064, %v4592, %v4594
  %v4596 = vrot.slane %v4575, 7
  %v4597 = vsel %vm2064, %v4594, %v4596
  %v4598 = vrot.slane %v4576, 7
  %v4599 = vsel %vm2064, %v4596, %v4598
  %v4609 = vadd.f32 %v4552, %v4585
  %v4610 = vadd.f32 %v4553, %v4587
  %v4611 = vadd.f32 %v4554, %v4589
  %v4612 = vadd.f32 %v4555, %v4591
  %v4613 = vadd.f32 %v4556, %v4593
  %v4614 = vadd.f32 %v4557, %v4595
  %v4615 = vadd.f32 %v4558, %v4597
  %v4616 = vadd.f32 %v4559, %v4599
  %v4617 = vadd.f32 %v4560, %v4598
  %v4618 = vmax.f32 %v4609, 0.0
  %v4619 = vmax.f32 %v4610, 0.0
  %v4620 = vmax.f32 %v4611, 0.0
  %v4621 = vmax.f32 %v4612, 0.0
  %v4622 = vmax.f32 %v4613, 0.0
  %v4623 = vmax.f32 %v4614, 0.0
  %v4624 = vmax.f32 %v4615, 0.0
  %v4625 = vmax.f32 %v4616, 0.0
  %v4626 = vmax.f32 %v4617, 0.0
  %v4627 = vpack.c.bf16 %v4618, %v4618
  %v4628 = vpack.c.bf16 %v4619, %v4619
  %v4629 = vpack.c.bf16 %v4620, %v4620
  %v4630 = vpack.c.bf16 %v4621, %v4621
  %v4631 = vpack.c.bf16 %v4622, %v4622
  %v4632 = vpack.c.bf16 %v4623, %v4623
  %v4633 = vpack.c.bf16 %v4624, %v4624
  %v4634 = vpack.c.bf16 %v4625, %v4625
  %v4635 = vpack.c.bf16 %v4626, %v4626
  %vm4636 = vsmask.f32 3328
  %vm4637 = vsmask.f32 7440
  %vm4638 = vmor %vm4636, %vm4637
  %v4640 = vshrl.u32 %v4627, 16
  %v4642 = vrot.slane %v4640, 4
  %v4643 = vshll.u32 %v4627, 16
  %v4645 = vrot.slane %v4643, 5
  %v4646 = vor.u32 %v4642, %v4645
  %v4647 = vrot.slane %v4646, 4
  %v4649 = vshll.u32 %v4628, 16
  %v4651 = vrot.slane %v4649, 5
  %v4652 = vsel %vm4638, %v4647, %v4651
  %v4653 = vshrl.u32 %v4628, 16
  %v4655 = vrot.slane %v4653, 4
  %v4656 = vor.u32 %v4655, %v4651
  %v4657 = vrot.slane %v4656, 4
  %v4659 = vshll.u32 %v4629, 16
  %v4661 = vrot.slane %v4659, 5
  %v4662 = vsel %vm4638, %v4657, %v4661
  %v4663 = vshrl.u32 %v4629, 16
  %v4665 = vrot.slane %v4663, 4
  %v4666 = vor.u32 %v4665, %v4661
  %v4667 = vrot.slane %v4666, 4
  %v4669 = vshll.u32 %v4630, 16
  %v4671 = vrot.slane %v4669, 5
  %v4672 = vsel %vm4638, %v4667, %v4671
  %v4673 = vshrl.u32 %v4630, 16
  %v4675 = vrot.slane %v4673, 4
  %v4676 = vor.u32 %v4675, %v4671
  %v4677 = vrot.slane %v4676, 4
  %v4679 = vshll.u32 %v4631, 16
  %v4681 = vrot.slane %v4679, 5
  %v4682 = vsel %vm4638, %v4677, %v4681
  %v4683 = vshrl.u32 %v4631, 16
  %v4685 = vrot.slane %v4683, 4
  %v4686 = vor.u32 %v4685, %v4681
  %v4687 = vrot.slane %v4686, 4
  %v4689 = vshll.u32 %v4632, 16
  %v4691 = vrot.slane %v4689, 5
  %v4692 = vsel %vm4638, %v4687, %v4691
  %v4693 = vshrl.u32 %v4632, 16
  %v4695 = vrot.slane %v4693, 4
  %v4696 = vor.u32 %v4695, %v4691
  %v4697 = vrot.slane %v4696, 4
  %v4699 = vshll.u32 %v4633, 16
  %v4701 = vrot.slane %v4699, 5
  %v4702 = vsel %vm4638, %v4697, %v4701
  %v4703 = vshrl.u32 %v4633, 16
  %v4705 = vrot.slane %v4703, 4
  %v4706 = vor.u32 %v4705, %v4701
  %v4707 = vrot.slane %v4706, 4
  %v4709 = vshll.u32 %v4634, 16
  %v4711 = vrot.slane %v4709, 5
  %v4712 = vsel %vm4638, %v4707, %v4711
  %v4713 = vshrl.u32 %v4634, 16
  %v4715 = vrot.slane %v4713, 4
  %v4716 = vor.u32 %v4715, %v4711
  %v4717 = vrot.slane %v4716, 4
  %v4719 = vshll.u32 %v4635, 16
  %v4721 = vrot.slane %v4719, 5
  %v4722 = vsel %vm4638, %v4717, %v4721
  %4731 = vst.msk [vmem:[%s11] sm:$0xf] %vm39, %v4652
  %4732 = vst.msk [vmem:[%s11 + $0x4] sm:$0xf] %vm39, %v4662
  %4733 = vst.msk [vmem:[%s11 + $0x8] sm:$0xf] %vm39, %v4672
  %4734 = vst.msk [vmem:[%s11 + $0xc] sm:$0xf] %vm39, %v4682
  %4735 = vst.msk [vmem:[%s11 + $0x10] sm:$0xf] %vm39, %v4692
  %4736 = vst.msk [vmem:[%s11 + $0x14] sm:$0xf] %vm39, %v4702
  %4737 = vst.msk [vmem:[%s11 + $0x18] sm:$0xf] %vm39, %v4712
  %4738 = vst.msk [vmem:[%s11 + $0x1c] sm:$0xf] %vm39, %v4722
  %v4739 = vld [vmem:[%s9] sm:$0x1]
  %v4740 = vld [vmem:[%s10] sm:$0x1]
  %v4750 = vrot.slane %v4335, 3
  %v4751 = vrot.slane %v4336, 3
  %v4752 = vsel %vm2298, %v4750, %v4751
  %v4753 = vrot.slane %v4337, 3
  %v4754 = vsel %vm2298, %v4751, %v4753
  %v4755 = vrot.slane %v4338, 3
  %v4756 = vsel %vm2298, %v4753, %v4755
  %v4757 = vrot.slane %v4339, 3
  %v4758 = vsel %vm2298, %v4755, %v4757
  %v4759 = vrot.slane %v4340, 3
  %v4760 = vsel %vm2298, %v4757, %v4759
  %v4761 = vrot.slane %v4341, 3
  %v4762 = vsel %vm2298, %v4759, %v4761
  %v4763 = vrot.slane %v4342, 3
  %v4764 = vsel %vm2298, %v4761, %v4763
  %v4765 = vrot.slane %v4343, 3
  %v4766 = vsel %vm2298, %v4763, %v4765
  %v4775 = vsel %vm302, %v4752, 0.0
  %v4776 = vsel %vm302, %v4754, 0.0
  %v4777 = vadd.f32 %v4775, %v4776
  %v4778 = vsel %vm302, %v4756, 0.0
  %v4779 = vadd.f32 %v4777, %v4778
  %v4780 = vsel %vm302, %v4758, 0.0
  %v4781 = vadd.f32 %v4779, %v4780
  %v4782 = vsel %vm302, %v4760, 0.0
  %v4783 = vadd.f32 %v4781, %v4782
  %v4784 = vsel %vm302, %v4762, 0.0
  %v4785 = vadd.f32 %v4783, %v4784
  %v4786 = vsel %vm302, %v4764, 0.0
  %v4787 = vadd.f32 %v4785, %v4786
  %v4788 = vsel %vm302, %v4766, 0.0
  %v4789 = vadd.f32 %v4787, %v4788
  %v4790 = vrot.slane %v4789, 4
  %v4791 = vadd.f32 %v4789, %v4790
  %v4792 = vrot.slane %v4791, 2
  %v4793 = vadd.f32 %v4791, %v4792
  %v4794 = vrot.slane %v4793, 1
  %v4795 = vadd.f32 %v4793, %v4794
  %v4796 = vmul.f32 %v4335, %v4335
  %v4797 = vmul.f32 %v4336, %v4336
  %v4798 = vmul.f32 %v4337, %v4337
  %v4799 = vmul.f32 %v4338, %v4338
  %v4800 = vmul.f32 %v4339, %v4339
  %v4801 = vmul.f32 %v4340, %v4340
  %v4802 = vmul.f32 %v4341, %v4341
  %v4803 = vmul.f32 %v4342, %v4342
  %v4804 = vmul.f32 %v4343, %v4343
  %v4814 = vrot.slane %v4796, 3
  %v4815 = vrot.slane %v4797, 3
  %v4816 = vsel %vm2298, %v4814, %v4815
  %v4817 = vrot.slane %v4798, 3
  %v4818 = vsel %vm2298, %v4815, %v4817
  %v4819 = vrot.slane %v4799, 3
  %v4820 = vsel %vm2298, %v4817, %v4819
  %v4821 = vrot.slane %v4800, 3
  %v4822 = vsel %vm2298, %v4819, %v4821
  %v4823 = vrot.slane %v4801, 3
  %v4824 = vsel %vm2298, %v4821, %v4823
  %v4825 = vrot.slane %v4802, 3
  %v4826 = vsel %vm2298, %v4823, %v4825
  %v4827 = vrot.slane %v4803, 3
  %v4828 = vsel %vm2298, %v4825, %v4827
  %v4829 = vrot.slane %v4804, 3
  %v4830 = vsel %vm2298, %v4827, %v4829
  %v4839 = vsel %vm302, %v4816, 0.0
  %v4840 = vsel %vm302, %v4818, 0.0
  %v4841 = vadd.f32 %v4839, %v4840
  %v4842 = vsel %vm302, %v4820, 0.0
  %v4843 = vadd.f32 %v4841, %v4842
  %v4844 = vsel %vm302, %v4822, 0.0
  %v4845 = vadd.f32 %v4843, %v4844
  %v4846 = vsel %vm302, %v4824, 0.0
  %v4847 = vadd.f32 %v4845, %v4846
  %v4848 = vsel %vm302, %v4826, 0.0
  %v4849 = vadd.f32 %v4847, %v4848
  %v4850 = vsel %vm302, %v4828, 0.0
  %v4851 = vadd.f32 %v4849, %v4850
  %v4852 = vsel %vm302, %v4830, 0.0
  %v4853 = vadd.f32 %v4851, %v4852
  %v4854 = vrot.slane %v4853, 4
  %v4855 = vadd.f32 %v4853, %v4854
  %v4856 = vrot.slane %v4855, 2
  %v4857 = vadd.f32 %v4855, %v4856
  %v4858 = vrot.slane %v4857, 1
  %v4859 = vadd.f32 %v4857, %v4858
  %v4860 = vsel %vm2064, %v4795, %v4859
  %v4862 = vsel %vm302, %v4860, 0
  %4864 = vmatpush.msra.mxu0 0.0
  %4865 = vmatpush.msra.mxu0 0.0
  %4866 = vmatpush.msra.mxu0 0.0
  %4867 = vmatpush.msra.mxu0 0.0
  %4868 = vmatpush.msra.mxu0 0.0
  %4869 = vmatpush.msra.mxu0 0.0
  %4870 = vmatpush.msra.mxu0 0.0
  %4871 = vmatpush.msra.mxu0 0.0
  %4872 = vmatpush.msra.mxu0 0.0
  %4873 = vmatpush.msra.mxu0 0.0
  %4874 = vmatpush.msra.mxu0 0.0
  %4875 = vmatpush.msra.mxu0 0.0
  %4876 = vmatpush.msra.mxu0 0.0
  %4877 = vmatpush.msra.mxu0 0.0
  %4878 = vmatpush.msra.mxu0 %v213
  %4879 = vmatpush.msra.mxu0 %v212
  %4880 = vmatmul.f32.gmra.mxu0 %v4862
  %v4881 = vpop.f32.mrf.mxu0
  %v4882 = vadd.f32 0.0, %v4881
  %4883 = vdwg.mxu0
  %v4884 = vmul.f32 %v4882, %v2095
  %v4885 = vmul.f32 %v4884, %v4884
  %v4887 = vrot.slane %v4885, 7
  %v4889 = vsub.f32 %v4884, %v4887
  %v4890 = vadd.f32 %v4889, 1e-05
  %v4891 = vrsqrt.pop %v4890
  %v4892 = vmul.f32 %v4891, %v4890
  %v4893 = vmul.f32 %v4892, %v4891
  %v4894 = vmul.f32 0.5, %v4893
  %v4895 = vsub.f32 1.5, %v4894
  %v4896 = vmul.f32 %v4891, %v4895
  %vm4897 = vweird.f32 %v4890
  %vm4898 = vweird.f32 %v4891
  %vm4899 = vmor %vm4897, %vm4898
  %v4900 = vsel %vm4899, %v4891, %v4896
  %v4901 = vsel %vm2064, %v4884, %v4900
  %v4903 = vsel %vm2114, %v4901, 0
  %4905 = vmatpush.msra.mxu0 0.0
  %4906 = vmatpush.msra.mxu0 0.0
  %4907 = vmatpush.msra.mxu0 0.0
  %4908 = vmatpush.msra.mxu0 0.0
  %4909 = vmatpush.msra.mxu0 0.0
  %4910 = vmatpush.msra.mxu0 0.0
  %4911 = vmatpush.msra.mxu0 0.0
  %4912 = vmatpush.msra.mxu0 0.0
  %4913 = vmatpush.msra.mxu0 0.0
  %4914 = vmatpush.msra.mxu0 0.0
  %4915 = vmatpush.msra.mxu0 0.0
  %4916 = vmatpush.msra.mxu0 0.0
  %4917 = vmatpush.msra.mxu0 0.0
  %4918 = vmatpush.msra.mxu0 0.0
  %4919 = vmatpush.msra.mxu0 0.0
  %4920 = vmatpush.msra.mxu0 %v2120
  %4921 = vmatmul.f32.gmra.mxu0 %v4903
  %v4922 = vpop.f32.mrf.mxu0
  %v4923 = vadd.f32 0.0, %v4922
  %4924 = vdwg.mxu0
  %v4926 = vperm.slane %v4739, 0
  %v4928 = vmul.f32 %v4923, %v4926
  %v4930 = vrot.slane %v4928, 1
  %v4932 = vmul.f32 %v4923, %v4930
  %v4933 = vsub.f32 %v4740, %v4932
  %v4934 = vperm.slane %v4928, 1
  %v4935 = vmul.f32 %v4335, %v4934
  %v4936 = vmul.f32 %v4336, %v4934
  %v4937 = vmul.f32 %v4337, %v4934
  %v4938 = vmul.f32 %v4338, %v4934
  %v4939 = vmul.f32 %v4339, %v4934
  %v4940 = vmul.f32 %v4340, %v4934
  %v4941 = vmul.f32 %v4341, %v4934
  %v4942 = vmul.f32 %v4342, %v4934
  %v4943 = vmul.f32 %v4343, %v4934
  %v4945 = vperm.slane %v4933, 0
  %v4947 = vadd.f32 %v4935, %v4945
  %v4948 = vadd.f32 %v4936, %v4945
  %v4949 = vadd.f32 %v4937, %v4945
  %v4950 = vadd.f32 %v4938, %v4945
  %v4951 = vadd.f32 %v4939, %v4945
  %v4952 = vadd.f32 %v4940, %v4945
  %v4953 = vadd.f32 %v4941, %v4945
  %v4954 = vadd.f32 %v4942, %v4945
  %v4955 = vadd.f32 %v4943, %v4945
  %v4956 = vld [vmem:[%s149] sm:$0xf]
  %v4957 = vld [vmem:[%s149 + $0x4] sm:$0xf]
  %v4958 = vld [vmem:[%s149 + $0x8] sm:$0xf]
  %v4959 = vld [vmem:[%s149 + $0xc] sm:$0xf]
  %v4960 = vld [vmem:[%s149 + $0x10] sm:$0xf]
  %v4961 = vld [vmem:[%s149 + $0x14] sm:$0xf]
  %v4962 = vld [vmem:[%s149 + $0x18] sm:$0xf]
  %v4963 = vld [vmem:[%s149 + $0x1c] sm:$0xf]
  %v4964 = vunpack.c.l.bf16 %v4956
  %v4965 = vunpack.c.l.bf16 %v4957
  %v4966 = vunpack.c.l.bf16 %v4958
  %v4967 = vunpack.c.l.bf16 %v4959
  %v4968 = vunpack.c.l.bf16 %v4960
  %v4969 = vunpack.c.l.bf16 %v4961
  %v4970 = vunpack.c.l.bf16 %v4962
  %v4971 = vunpack.c.l.bf16 %v4963
  %vm4980 = vcmask 1042432
  %v4981 = vrot.slane %v4964, 5
  %v4982 = vrot.slane %v4965, 5
  %v4983 = vsel %vm4980, %v4981, %v4982
  %v4984 = vrot.slane %v4966, 5
  %v4985 = vsel %vm4980, %v4982, %v4984
  %v4986 = vrot.slane %v4967, 5
  %v4987 = vsel %vm4980, %v4984, %v4986
  %v4988 = vrot.slane %v4968, 5
  %v4989 = vsel %vm4980, %v4986, %v4988
  %v4990 = vrot.slane %v4969, 5
  %v4991 = vsel %vm4980, %v4988, %v4990
  %v4992 = vrot.slane %v4970, 5
  %v4993 = vsel %vm4980, %v4990, %v4992
  %v4994 = vrot.slane %v4971, 5
  %v4995 = vsel %vm4980, %v4992, %v4994
  %v5005 = vadd.f32 %v4947, %v4981
  %v5006 = vadd.f32 %v4948, %v4983
  %v5007 = vadd.f32 %v4949, %v4985
  %v5008 = vadd.f32 %v4950, %v4987
  %v5009 = vadd.f32 %v4951, %v4989
  %v5010 = vadd.f32 %v4952, %v4991
  %v5011 = vadd.f32 %v4953, %v4993
  %v5012 = vadd.f32 %v4954, %v4995
  %v5013 = vadd.f32 %v4955, %v4994
  %v5014 = vmax.f32 %v5005, 0.0
  %v5015 = vmax.f32 %v5006, 0.0
  %v5016 = vmax.f32 %v5007, 0.0
  %v5017 = vmax.f32 %v5008, 0.0
  %v5018 = vmax.f32 %v5009, 0.0
  %v5019 = vmax.f32 %v5010, 0.0
  %v5020 = vmax.f32 %v5011, 0.0
  %v5021 = vmax.f32 %v5012, 0.0
  %v5022 = vmax.f32 %v5013, 0.0
  %v5023 = vpack.c.bf16 %v5014, %v5014
  %v5024 = vpack.c.bf16 %v5015, %v5015
  %v5025 = vpack.c.bf16 %v5016, %v5016
  %v5026 = vpack.c.bf16 %v5017, %v5017
  %v5027 = vpack.c.bf16 %v5018, %v5018
  %v5028 = vpack.c.bf16 %v5019, %v5019
  %v5029 = vpack.c.bf16 %v5020, %v5020
  %v5030 = vpack.c.bf16 %v5021, %v5021
  %v5031 = vpack.c.bf16 %v5022, %v5022
  %vm5032 = vsmask.f32 2304
  %vm5033 = vsmask.f32 6416
  %vm5034 = vmor %vm5032, %vm5033
  %v5036 = vshrl.u32 %v5023, 16
  %v5038 = vrot.slane %v5036, 5
  %v5039 = vshll.u32 %v5023, 16
  %v5041 = vrot.slane %v5039, 6
  %v5042 = vor.u32 %v5038, %v5041
  %v5043 = vrot.slane %v5042, 4
  %v5045 = vshrl.u32 %v5024, 16
  %v5047 = vrot.slane %v5045, 5
  %v5048 = vshll.u32 %v5024, 16
  %v5050 = vrot.slane %v5048, 6
  %v5051 = vor.u32 %v5047, %v5050
  %v5052 = vsel %vm5034, %v5043, %v5051
  %v5053 = vrot.slane %v5051, 4
  %v5055 = vshrl.u32 %v5025, 16
  %v5057 = vrot.slane %v5055, 5
  %v5058 = vshll.u32 %v5025, 16
  %v5060 = vrot.slane %v5058, 6
  %v5061 = vor.u32 %v5057, %v5060
  %v5062 = vsel %vm5034, %v5053, %v5061
  %v5063 = vrot.slane %v5061, 4
  %v5065 = vshrl.u32 %v5026, 16
  %v5067 = vrot.slane %v5065, 5
  %v5068 = vshll.u32 %v5026, 16
  %v5070 = vrot.slane %v5068, 6
  %v5071 = vor.u32 %v5067, %v5070
  %v5072 = vsel %vm5034, %v5063, %v5071
  %v5073 = vrot.slane %v5071, 4
  %v5075 = vshrl.u32 %v5027, 16
  %v5077 = vrot.slane %v5075, 5
  %v5078 = vshll.u32 %v5027, 16
  %v5080 = vrot.slane %v5078, 6
  %v5081 = vor.u32 %v5077, %v5080
  %v5082 = vsel %vm5034, %v5073, %v5081
  %v5083 = vrot.slane %v5081, 4
  %v5085 = vshrl.u32 %v5028, 16
  %v5087 = vrot.slane %v5085, 5
  %v5088 = vshll.u32 %v5028, 16
  %v5090 = vrot.slane %v5088, 6
  %v5091 = vor.u32 %v5087, %v5090
  %v5092 = vsel %vm5034, %v5083, %v5091
  %v5093 = vrot.slane %v5091, 4
  %v5095 = vshrl.u32 %v5029, 16
  %v5097 = vrot.slane %v5095, 5
  %v5098 = vshll.u32 %v5029, 16
  %v5100 = vrot.slane %v5098, 6
  %v5101 = vor.u32 %v5097, %v5100
  %v5102 = vsel %vm5034, %v5093, %v5101
  %v5103 = vrot.slane %v5101, 4
  %v5105 = vshrl.u32 %v5030, 16
  %v5107 = vrot.slane %v5105, 5
  %v5108 = vshll.u32 %v5030, 16
  %v5110 = vrot.slane %v5108, 6
  %v5111 = vor.u32 %v5107, %v5110
  %v5112 = vsel %vm5034, %v5103, %v5111
  %v5113 = vrot.slane %v5111, 4
  %v5115 = vshrl.u32 %v5031, 16
  %v5117 = vrot.slane %v5115, 5
  %v5118 = vshll.u32 %v5031, 16
  %v5120 = vrot.slane %v5118, 6
  %v5121 = vor.u32 %v5117, %v5120
  %v5122 = vsel %vm5034, %v5113, %v5121
  %s5131 = scalar_lea.vmem %s11, 32
  %5132 = vst.msk [vmem:[%s5131] sm:$0xf] %vm39, %v5052
  %5133 = vst.msk [vmem:[%s5131 + $0x4] sm:$0xf] %vm39, %v5062
  %5134 = vst.msk [vmem:[%s5131 + $0x8] sm:$0xf] %vm39, %v5072
  %5135 = vst.msk [vmem:[%s5131 + $0xc] sm:$0xf] %vm39, %v5082
  %5136 = vst.msk [vmem:[%s5131 + $0x10] sm:$0xf] %vm39, %v5092
  %5137 = vst.msk [vmem:[%s5131 + $0x14] sm:$0xf] %vm39, %v5102
  %5138 = vst.msk [vmem:[%s5131 + $0x18] sm:$0xf] %vm39, %v5112
  %5139 = vst.msk [vmem:[%s5131 + $0x1c] sm:$0xf] %vm39, %v5122
  // Predicated region
  $region46: #{tpu_custom_call.1} parent=0 // pred_check
    _
  $region47: #{tpu_custom_call.1} parent=0 // pred_check_branch
    %5141 = sbr.rel (0) target = $region49
  $region48: #{tpu_custom_call.1} parent=0 // pred_region
    _
  $region49: #{tpu_custom_call.1} parent=0 // pred_fallthru
    _
  // Predicated region
  $region50: #{tpu_custom_call.1} parent=0 // pred_check
    _
  $region51: #{tpu_custom_call.1} parent=0 // pred_check_branch
    %5143 = sbr.rel (0) target = $region53
  $region52: #{tpu_custom_call.1} parent=0 // pred_region
    _
  $region53: #{tpu_custom_call.1} parent=0 // pred_fallthru
    _

</llo_original>
